<compile_context>
chip_gen: v6e
topology: v6e:2x2x1
jax: 0.10.0
libtpu: 0.0.40
codegen_flags: <defaults>
</compile_context>

<pallas_src>
import functools

import jax
import jax.numpy as jnp
from jax.experimental import pallas as pl
from jax.experimental.pallas import tpu as pltpu


# ---------------------------------------------------------------------------
# Fused forward kernel: Bb images per grid step, batch packed along sublanes.
# ---------------------------------------------------------------------------

def _make_kernel(bb):
    f32 = jnp.float32

    def dot(a, b):
        return jnp.dot(a, b, preferred_element_type=f32)

    def kernel(x_ref,
               w1_ref, b1_ref, pc1_ref, pr1_ref,
               w2_ref, b2_ref, pc2_ref, pr2_ref,
               w3_ref, b3_ref,
               wf1_ref, bf1_ref, wf2_ref, bf2_ref,
               out_ref, map1_ref, map2_ref, map3_ref, map4_ref):
        x = x_ref[...]                                          # (bb, 32, 32)
        map1_ref[...] = (x == 0.0).astype(jnp.int8)

        # --- conv1 + ReLU ---------------------------------------------------
        # im2row over kernel rows: static sublane slices + lane concat, then
        # batch packed along sublanes -> one MXU matmul for the whole block.
        cat1 = jnp.concatenate(
            [jnp.concatenate([x[b, kh:kh + 28, :] for kh in range(5)], axis=1)
             for b in range(bb)], axis=0)                       # (bb*28, 160)
        h1 = jnp.maximum(dot(cat1, w1_ref[...]) + b1_ref[...], 0.0)  # (bb*28, 168)

        # --- pool1 (2x2 avg): width pool (shared) + block-diag row pool ------
        p1 = dot(pr1_ref[...], dot(h1, pc1_ref[...]))           # (bb*14, 84)
        map2_ref[...] = (p1 == 0.0).astype(jnp.int8)

        # --- conv2 + ReLU ----------------------------------------------------
        cat2 = jnp.concatenate(
            [jnp.concatenate(
                [p1[b * 14 + kh: b * 14 + kh + 10, :] for kh in range(5)],
                axis=1)
             for b in range(bb)], axis=0)                       # (bb*10, 420)
        h2 = jnp.maximum(dot(cat2, w2_ref[...]) + b2_ref[...], 0.0)  # (bb*10, 160)

        # --- pool2 -----------------------------------------------------------
        p2 = dot(pr2_ref[...], dot(h2, pc2_ref[...]))           # (bb*5, 80)
        map3_ref[...] = (p2 == 0.0).astype(jnp.int8)

        # --- conv3 + ReLU (5x5 kernel covers the 5x5 input -> one row/image) -
        cat3 = jnp.concatenate(
            [jnp.concatenate(
                [p2[b * 5 + kh: b * 5 + kh + 1, :] for kh in range(5)],
                axis=1)
             for b in range(bb)], axis=0)                       # (bb, 400)
        h3 = jnp.maximum(dot(cat3, w3_ref[...]) + b3_ref[...], 0.0)  # (bb, 120)
        map4_ref[...] = (h3 == 0.0).astype(jnp.int8)

        # --- fc1 + ReLU, fc2 on the whole (bb, .) block -----------------------
        f1 = jnp.maximum(dot(h3, wf1_ref[...]) + bf1_ref[...], 0.0)  # (bb, 84)
        out_ref[...] = dot(f1, wf2_ref[...]) + bf2_ref[...]          # (bb, 10)

    return kernel


# ---------------------------------------------------------------------------
# Host-side (one-time) weight preparation: kh-stacked banded conv weights,
# pooling matrices, tiled bias rows.
# ---------------------------------------------------------------------------

def _banded_conv_weights(w, w_in):
    """w: (Cout, Cin, K, K) torch layout.  Returns (K*W_in*Cin, Wo*Cout) with
       rows ordered kh-major: row[kh*W_in*Cin + w*Cin + cin],
       col[wo*Cout + cout] = w[cout, cin, kh, w - wo] for 0 <= w - wo < K."""
    cout, cin, k, _ = w.shape
    wo = w_in - k + 1
    wt = jnp.transpose(w, (2, 3, 1, 0)).astype(jnp.float32)     # (K, Kw, Cin, Cout)
    kw = jnp.arange(w_in)[:, None] - jnp.arange(wo)[None, :]    # (W_in, Wo)
    valid = ((kw >= 0) & (kw < k)).astype(jnp.float32)
    g = jnp.take(wt, jnp.clip(kw, 0, k - 1), axis=1)            # (K, W_in, Wo, Cin, Cout)
    g = g * valid[None, :, :, None, None]
    g = jnp.transpose(g, (0, 1, 3, 2, 4))                       # (K, W_in, Cin, Wo, Cout)
    return g.reshape(k * w_in * cin, wo * cout)


def _pool_row(h_in):
    ho = h_in // 2
    r = jnp.arange(h_in)[None, :]
    o = jnp.arange(ho)[:, None]
    return 0.5 * ((r // 2) == o).astype(jnp.float32)            # (ho, h_in)


def _pool_col(w_in, c):
    wo = w_in // 2
    r = jnp.arange(w_in)[:, None]
    o = jnp.arange(wo)[None, :]
    m = 0.5 * ((r // 2) == o).astype(jnp.float32)                # (w_in, wo)
    return jnp.kron(m, jnp.eye(c, dtype=jnp.float32))            # (w_in*c, wo*c)


def _bias_row(b, wo):
    b = b.astype(jnp.float32)
    return jnp.tile(b, wo).reshape(1, wo * b.shape[0])


def prepare_params(p):
    """One-time conversion of torch-layout params into kernel-ready operands."""
    return {
        "w1": _banded_conv_weights(p["w1"], 32), "b1": _bias_row(p["b1"], 28),
        "pcol1": _pool_col(28, 6), "prow1": _pool_row(28),
        "w2": _banded_conv_weights(p["w2"], 14), "b2": _bias_row(p["b2"], 10),
        "pcol2": _pool_col(10, 16), "prow2": _pool_row(10),
        "w3": _banded_conv_weights(p["w3"], 5), "b3": _bias_row(p["b3"], 1),
        "wf1": p["wf1"].T.astype(jnp.float32),
        "bf1": p["bf1"].reshape(1, -1).astype(jnp.float32),
        "wf2": p["wf2"].T.astype(jnp.float32),
        "bf2": p["bf2"].reshape(1, -1).astype(jnp.float32),
    }


# ---------------------------------------------------------------------------
# Forward wrapper (matches the PyTorch module's forward semantics)
# ---------------------------------------------------------------------------

def _replicated_spec(arr):
    zeros = (0,) * arr.ndim
    return pl.BlockSpec(arr.shape, lambda g, _z=zeros: _z)


@functools.partial(jax.jit, static_argnums=(2,))
def _forward_impl(x, kp, bb):
    B = x.shape[0]
    x2 = x.reshape(B, 32, 32).astype(jnp.float32)
    bpad = ((B + bb - 1) // bb) * bb
    if bpad != B:  # pad batch to a multiple of the block (padded images dropped below)
        x2 = jnp.concatenate(
            [x2, jnp.zeros((bpad - B, 32, 32), jnp.float32)], axis=0)

    # Block-diagonal row-pool matrices for the packed (bb images) layout.
    eye = jnp.eye(bb, dtype=jnp.float32)
    pr1 = jnp.kron(eye, kp["prow1"])                # (bb*14, bb*28)
    pr2 = jnp.kron(eye, kp["prow2"])                # (bb*5,  bb*10)

    operands = (kp["w1"], kp["b1"], kp["pcol1"], pr1,
                kp["w2"], kp["b2"], kp["pcol2"], pr2,
                kp["w3"], kp["b3"],
                kp["wf1"], kp["bf1"], kp["wf2"], kp["bf2"])

    in_specs = [pl.BlockSpec((bb, 32, 32), lambda g: (g, 0, 0))]
    in_specs += [_replicated_spec(op) for op in operands]

    out_shape = (
        jax.ShapeDtypeStruct((bpad, 10), jnp.float32),       # logits
        jax.ShapeDtypeStruct((bpad, 32, 32), jnp.int8),      # L1 map  (h, w)
        jax.ShapeDtypeStruct((bpad * 14, 84), jnp.int8),     # L2 map  (h, w*c)
        jax.ShapeDtypeStruct((bpad * 5, 80), jnp.int8),      # L3 map  (h, w*c)
        jax.ShapeDtypeStruct((bpad, 120), jnp.int8),         # L4 map  (c,)
    )
    out_specs = (
        pl.BlockSpec((bb, 10), lambda g: (g, 0)),
        pl.BlockSpec((bb, 32, 32), lambda g: (g, 0, 0)),
        pl.BlockSpec((bb * 14, 84), lambda g: (g, 0)),
        pl.BlockSpec((bb * 5, 80), lambda g: (g, 0)),
        pl.BlockSpec((bb, 120), lambda g: (g, 0)),
    )

    logits, m1, m2, m3, m4 = pl.pallas_call(
        _make_kernel(bb),
        out_shape=out_shape,
        grid=(bpad // bb,),
        in_specs=in_specs,
        out_specs=out_specs,
        compiler_params=pltpu.CompilerParams(
            dimension_semantics=("parallel",)),
    )(x2, *operands)

    # Single jitted epilogue: drop padded images, reorder the in-kernel
    # (h, w*c) maps to NCHW flattening, concatenate, cast uint8, and reduce
    # the per-layer zero counts directly from the maps.
    logits = logits[:B]
    m1 = m1[:B]                                               # (B, 32, 32)
    m2 = m2[:B * 14]                                          # (B*14, 84)
    m3 = m3[:B * 5]                                           # (B*5, 80)
    m4 = m4[:B]                                               # (B, 120)

    l1 = m1.reshape(B, -1)
    l2 = m2.reshape(B, 14, 14, 6).transpose(0, 3, 1, 2).reshape(B, -1)
    l3 = m3.reshape(B, 5, 5, 16).transpose(0, 3, 1, 2).reshape(B, -1)
    l4 = m4.reshape(B, -1)
    smap_total = jnp.concatenate(
        [l1.reshape(-1), l2.reshape(-1), l3.reshape(-1), l4.reshape(-1)],
        axis=0).astype(jnp.uint8)

    zeros = jnp.stack([jnp.sum(l.astype(jnp.int32)) for l in (l1, l2, l3, l4)])
    return logits, zeros, smap_total


def lenet5_forward(x, kp, block_batch=8):
    """x: NCHW float32 (B, 1, 32, 32); kp: prepare_params(...) output."""
    B = x.shape[0]
    assert x.shape[1:] == (1, 32, 32)
    assert block_batch % 8 == 0          # keeps every output block 8-row aligned
    logits, zeros, smap_total = _forward_impl(x, kp, block_batch)
    zeros_list = [zeros[0], zeros[1], zeros[2], zeros[3]]
    sizes_list = [B * 1024, B * 1176, B * 400, B * 120]
    return logits, zeros_list, sizes_list, smap_total


# ---------------------------------------------------------------------------
# Deterministic parameter init (shapes from LeNet5.__init__).
# The unused my_fc1..my_fc5 layers do not participate in forward() -> omitted.
# ---------------------------------------------------------------------------

def init_params(key):
    ks = jax.random.split(key, 10)

    def u(k, shape, fan_in):
        bound = 1.0 / float(fan_in) ** 0.5
        return jax.random.uniform(k, shape, jnp.float32, -bound, bound)

    return {
        "w1": u(ks[0], (6, 1, 5, 5), 25),     "b1": u(ks[1], (6,), 25),
        "w2": u(ks[2], (16, 6, 5, 5), 150),   "b2": u(ks[3], (16,), 150),
        "w3": u(ks[4], (120, 16, 5, 5), 400), "b3": u(ks[5], (120,), 400),
        "wf1": u(ks[6], (84, 120), 120),      "bf1": u(ks[7], (84,), 120),
        "wf2": u(ks[8], (10, 84), 84),        "bf2": u(ks[9], (10,), 84),
    }


# Plain-JAX reference (numerical cross-check of the fused kernel).
def _reference_logits(x, p):
    hi = jax.lax.Precision.HIGHEST

    def conv(h, w, b):
        y = jax.lax.conv_general_dilated(
            h, w, window_strides=(1, 1), padding="VALID",
            dimension_numbers=("NCHW", "OIHW", "NCHW"), precision=hi)
        return jax.nn.relu(y + b[None, :, None, None])

    def pool(h):
        bb_, cc, hh, ww = h.shape
        return h.reshape(bb_, cc, hh // 2, 2, ww // 2, 2).mean(axis=(3, 5))

    h = pool(conv(x, p["w1"], p["b1"]))
    h = pool(conv(h, p["w2"], p["b2"]))
    h = conv(h, p["w3"], p["b3"]).reshape(x.shape[0], 120)
    h = jax.nn.relu(jnp.dot(h, p["wf1"].T, precision=hi) + p["bf1"])
    return jnp.dot(h, p["wf2"].T, precision=hi) + p["bf2"]


if __name__ == "__main__":
    key = jax.random.PRNGKey(0)
    kx, kparam = jax.random.split(key)

    # LeNet-5 needs 32x32 spatial input (32->28->14->10->5->1).
    # B=16 with block_batch=8 -> an even, 2-step grid (keeps both v7x TCs busy).
    B = 16
    x = jax.random.normal(kx, (B, 1, 32, 32), jnp.float32)
    x = jnp.where(x > 0.5, 0.0, x)      # exact zeros exercise the sparsity paths

    params = init_params(kparam)
    kp = prepare_params(params)

    out, zeros_list, sizes_list, smap_total = lenet5_forward(x, kp, block_batch=8)
    jax.block_until_ready((out, smap_total))

    # interface checks (same structure as the PyTorch module's outputs)
    assert out.shape == (B, 10) and out.dtype == jnp.float32
    assert smap_total.dtype == jnp.uint8
    assert smap_total.shape == (B * (1 * 32 * 32 + 6 * 14 * 14 + 16 * 5 * 5 + 120),)
    assert sizes_list == [B * 1024, B * 1176, B * 400, B * 120]

    # numerical check of the fused kernel against a plain-JAX reference
    ref = _reference_logits(x, params)
    assert jnp.allclose(out, ref, atol=2e-2, rtol=2e-2), \
        float(jnp.max(jnp.abs(out - ref)))

    # layer-1 sparsity stats are exactly determined by the input
    assert int(zeros_list[0]) == int(jnp.sum(x == 0.0))
    assert jnp.array_equal(smap_total[:B * 1024],
                           (x.reshape(-1) == 0.0).astype(jnp.uint8))

    print("KERNEL_OK")
</pallas_src>

<mosaic_0001>
module attributes {stable_mosaic.version = 11 : i64} {
  func.func @kernel(%arg0: i32, %arg1: memref<8x32x32xf32, #tpu.memory_space<vmem>>, %arg2: memref<160x168xf32, #tpu.memory_space<vmem>>, %arg3: memref<1x168xf32, #tpu.memory_space<vmem>>, %arg4: memref<168x84xf32, #tpu.memory_space<vmem>>, %arg5: memref<112x224xf32, #tpu.memory_space<vmem>>, %arg6: memref<420x160xf32, #tpu.memory_space<vmem>>, %arg7: memref<1x160xf32, #tpu.memory_space<vmem>>, %arg8: memref<160x80xf32, #tpu.memory_space<vmem>>, %arg9: memref<40x80xf32, #tpu.memory_space<vmem>>, %arg10: memref<400x120xf32, #tpu.memory_space<vmem>>, %arg11: memref<1x120xf32, #tpu.memory_space<vmem>>, %arg12: memref<120x84xf32, #tpu.memory_space<vmem>>, %arg13: memref<1x84xf32, #tpu.memory_space<vmem>>, %arg14: memref<84x10xf32, #tpu.memory_space<vmem>>, %arg15: memref<1x10xf32, #tpu.memory_space<vmem>>, %arg16: memref<8x10xf32, #tpu.memory_space<vmem>>, %arg17: memref<8x32x32xi8, #tpu.memory_space<vmem>>, %arg18: memref<112x84xi8, #tpu.memory_space<vmem>>, %arg19: memref<40x80xi8, #tpu.memory_space<vmem>>, %arg20: memref<8x120xi8, #tpu.memory_space<vmem>>) attributes {dimension_semantics = [#tpu.dimension_semantics<parallel>], iteration_bounds = array<i64: 2>, scalar_prefetch = 0 : i64, scratch_operands = 0 : i64, tpu.core_type = #tpu.core_type<tc>, window_params = [{transform_indices = @transform_0, window_bounds = array<i64: 8, 32, 32>}, {pipeline_mode = #tpu.pipeline_mode<synchronous>, transform_indices = @transform_1, window_bounds = array<i64: 160, 168>}, {pipeline_mode = #tpu.pipeline_mode<synchronous>, transform_indices = @transform_2, window_bounds = array<i64: 1, 168>}, {pipeline_mode = #tpu.pipeline_mode<synchronous>, transform_indices = @transform_3, window_bounds = array<i64: 168, 84>}, {pipeline_mode = #tpu.pipeline_mode<synchronous>, transform_indices = @transform_4, window_bounds = array<i64: 112, 224>}, {pipeline_mode = #tpu.pipeline_mode<synchronous>, transform_indices = @transform_5, window_bounds = array<i64: 420, 160>}, {pipeline_mode = #tpu.pipeline_mode<synchronous>, transform_indices = @transform_6, window_bounds = array<i64: 1, 160>}, {pipeline_mode = #tpu.pipeline_mode<synchronous>, transform_indices = @transform_7, window_bounds = array<i64: 160, 80>}, {pipeline_mode = #tpu.pipeline_mode<synchronous>, transform_indices = @transform_8, window_bounds = array<i64: 40, 80>}, {pipeline_mode = #tpu.pipeline_mode<synchronous>, transform_indices = @transform_9, window_bounds = array<i64: 400, 120>}, {pipeline_mode = #tpu.pipeline_mode<synchronous>, transform_indices = @transform_10, window_bounds = array<i64: 1, 120>}, {pipeline_mode = #tpu.pipeline_mode<synchronous>, transform_indices = @transform_11, window_bounds = array<i64: 120, 84>}, {pipeline_mode = #tpu.pipeline_mode<synchronous>, transform_indices = @transform_12, window_bounds = array<i64: 1, 84>}, {pipeline_mode = #tpu.pipeline_mode<synchronous>, transform_indices = @transform_13, window_bounds = array<i64: 84, 10>}, {pipeline_mode = #tpu.pipeline_mode<synchronous>, transform_indices = @transform_14, window_bounds = array<i64: 1, 10>}, {transform_indices = @transform_15, window_bounds = array<i64: 8, 10>}, {transform_indices = @transform_16, window_bounds = array<i64: 8, 32, 32>}, {transform_indices = @transform_17, window_bounds = array<i64: 112, 84>}, {transform_indices = @transform_18, window_bounds = array<i64: 40, 80>}, {transform_indices = @transform_19, window_bounds = array<i64: 8, 120>}]} {
    %c0 = arith.constant 0 : index
    %c0_0 = arith.constant 0 : index
    %c0_1 = arith.constant 0 : index
    %0 = vector.load %arg1[%c0, %c0_0, %c0_1] : memref<8x32x32xf32, #tpu.memory_space<vmem>>, vector<8x32x32xf32>
    %cst = arith.constant 0.000000e+00 : f32
    %1 = vector.broadcast %cst : f32 to vector<8x32x32xf32>
    %2 = arith.cmpf oeq, %0, %1 : vector<8x32x32xf32>
    %3 = arith.extui %2 : vector<8x32x32xi1> to vector<8x32x32xi8>
    %c0_2 = arith.constant 0 : index
    %c0_3 = arith.constant 0 : index
    %c0_4 = arith.constant 0 : index
    %4 = vector.load %arg17[%c0_2, %c0_3, %c0_4] : memref<8x32x32xi8, #tpu.memory_space<vmem>>, vector<8x32x32xi8>
    tpu.vector_store %arg17[%c0_2, %c0_3, %c0_4], %3 {strides = array<i32>} : memref<8x32x32xi8, #tpu.memory_space<vmem>>, vector<8x32x32xi8>,
    %5 = vector.extract_strided_slice %0 {offsets = [0, 0, 0], sizes = [1, 28, 32], strides = [1, 1, 1]} : vector<8x32x32xf32> to vector<1x28x32xf32>
    %6 = vector.shape_cast %5 : vector<1x28x32xf32> to vector<28x32xf32>
    %7 = vector.extract_strided_slice %0 {offsets = [0, 1, 0], sizes = [1, 28, 32], strides = [1, 1, 1]} : vector<8x32x32xf32> to vector<1x28x32xf32>
    %8 = vector.shape_cast %7 : vector<1x28x32xf32> to vector<28x32xf32>
    %9 = vector.extract_strided_slice %0 {offsets = [0, 2, 0], sizes = [1, 28, 32], strides = [1, 1, 1]} : vector<8x32x32xf32> to vector<1x28x32xf32>
    %10 = vector.shape_cast %9 : vector<1x28x32xf32> to vector<28x32xf32>
    %11 = vector.extract_strided_slice %0 {offsets = [0, 3, 0], sizes = [1, 28, 32], strides = [1, 1, 1]} : vector<8x32x32xf32> to vector<1x28x32xf32>
    %12 = vector.shape_cast %11 : vector<1x28x32xf32> to vector<28x32xf32>
    %13 = vector.extract_strided_slice %0 {offsets = [0, 4, 0], sizes = [1, 28, 32], strides = [1, 1, 1]} : vector<8x32x32xf32> to vector<1x28x32xf32>
    %14 = vector.shape_cast %13 : vector<1x28x32xf32> to vector<28x32xf32>
    %15 = tpu.concatenate %6, %8, %10, %12, %14 in 1 : vector<28x32xf32>, vector<28x32xf32>, vector<28x32xf32>, vector<28x32xf32>, vector<28x32xf32> -> vector<28x160xf32>
    %16 = vector.extract_strided_slice %0 {offsets = [1, 0, 0], sizes = [1, 28, 32], strides = [1, 1, 1]} : vector<8x32x32xf32> to vector<1x28x32xf32>
    %17 = vector.shape_cast %16 : vector<1x28x32xf32> to vector<28x32xf32>
    %18 = vector.extract_strided_slice %0 {offsets = [1, 1, 0], sizes = [1, 28, 32], strides = [1, 1, 1]} : vector<8x32x32xf32> to vector<1x28x32xf32>
    %19 = vector.shape_cast %18 : vector<1x28x32xf32> to vector<28x32xf32>
    %20 = vector.extract_strided_slice %0 {offsets = [1, 2, 0], sizes = [1, 28, 32], strides = [1, 1, 1]} : vector<8x32x32xf32> to vector<1x28x32xf32>
    %21 = vector.shape_cast %20 : vector<1x28x32xf32> to vector<28x32xf32>
    %22 = vector.extract_strided_slice %0 {offsets = [1, 3, 0], sizes = [1, 28, 32], strides = [1, 1, 1]} : vector<8x32x32xf32> to vector<1x28x32xf32>
    %23 = vector.shape_cast %22 : vector<1x28x32xf32> to vector<28x32xf32>
    %24 = vector.extract_strided_slice %0 {offsets = [1, 4, 0], sizes = [1, 28, 32], strides = [1, 1, 1]} : vector<8x32x32xf32> to vector<1x28x32xf32>
    %25 = vector.shape_cast %24 : vector<1x28x32xf32> to vector<28x32xf32>
    %26 = tpu.concatenate %17, %19, %21, %23, %25 in 1 : vector<28x32xf32>, vector<28x32xf32>, vector<28x32xf32>, vector<28x32xf32>, vector<28x32xf32> -> vector<28x160xf32>
    %27 = vector.extract_strided_slice %0 {offsets = [2, 0, 0], sizes = [1, 28, 32], strides = [1, 1, 1]} : vector<8x32x32xf32> to vector<1x28x32xf32>
    %28 = vector.shape_cast %27 : vector<1x28x32xf32> to vector<28x32xf32>
    %29 = vector.extract_strided_slice %0 {offsets = [2, 1, 0], sizes = [1, 28, 32], strides = [1, 1, 1]} : vector<8x32x32xf32> to vector<1x28x32xf32>
    %30 = vector.shape_cast %29 : vector<1x28x32xf32> to vector<28x32xf32>
    %31 = vector.extract_strided_slice %0 {offsets = [2, 2, 0], sizes = [1, 28, 32], strides = [1, 1, 1]} : vector<8x32x32xf32> to vector<1x28x32xf32>
    %32 = vector.shape_cast %31 : vector<1x28x32xf32> to vector<28x32xf32>
    %33 = vector.extract_strided_slice %0 {offsets = [2, 3, 0], sizes = [1, 28, 32], strides = [1, 1, 1]} : vector<8x32x32xf32> to vector<1x28x32xf32>
    %34 = vector.shape_cast %33 : vector<1x28x32xf32> to vector<28x32xf32>
    %35 = vector.extract_strided_slice %0 {offsets = [2, 4, 0], sizes = [1, 28, 32], strides = [1, 1, 1]} : vector<8x32x32xf32> to vector<1x28x32xf32>
    %36 = vector.shape_cast %35 : vector<1x28x32xf32> to vector<28x32xf32>
    %37 = tpu.concatenate %28, %30, %32, %34, %36 in 1 : vector<28x32xf32>, vector<28x32xf32>, vector<28x32xf32>, vector<28x32xf32>, vector<28x32xf32> -> vector<28x160xf32>
    %38 = vector.extract_strided_slice %0 {offsets = [3, 0, 0], sizes = [1, 28, 32], strides = [1, 1, 1]} : vector<8x32x32xf32> to vector<1x28x32xf32>
    %39 = vector.shape_cast %38 : vector<1x28x32xf32> to vector<28x32xf32>
    %40 = vector.extract_strided_slice %0 {offsets = [3, 1, 0], sizes = [1, 28, 32], strides = [1, 1, 1]} : vector<8x32x32xf32> to vector<1x28x32xf32>
    %41 = vector.shape_cast %40 : vector<1x28x32xf32> to vector<28x32xf32>
    %42 = vector.extract_strided_slice %0 {offsets = [3, 2, 0], sizes = [1, 28, 32], strides = [1, 1, 1]} : vector<8x32x32xf32> to vector<1x28x32xf32>
    %43 = vector.shape_cast %42 : vector<1x28x32xf32> to vector<28x32xf32>
    %44 = vector.extract_strided_slice %0 {offsets = [3, 3, 0], sizes = [1, 28, 32], strides = [1, 1, 1]} : vector<8x32x32xf32> to vector<1x28x32xf32>
    %45 = vector.shape_cast %44 : vector<1x28x32xf32> to vector<28x32xf32>
    %46 = vector.extract_strided_slice %0 {offsets = [3, 4, 0], sizes = [1, 28, 32], strides = [1, 1, 1]} : vector<8x32x32xf32> to vector<1x28x32xf32>
    %47 = vector.shape_cast %46 : vector<1x28x32xf32> to vector<28x32xf32>
    %48 = tpu.concatenate %39, %41, %43, %45, %47 in 1 : vector<28x32xf32>, vector<28x32xf32>, vector<28x32xf32>, vector<28x32xf32>, vector<28x32xf32> -> vector<28x160xf32>
    %49 = vector.extract_strided_slice %0 {offsets = [4, 0, 0], sizes = [1, 28, 32], strides = [1, 1, 1]} : vector<8x32x32xf32> to vector<1x28x32xf32>
    %50 = vector.shape_cast %49 : vector<1x28x32xf32> to vector<28x32xf32>
    %51 = vector.extract_strided_slice %0 {offsets = [4, 1, 0], sizes = [1, 28, 32], strides = [1, 1, 1]} : vector<8x32x32xf32> to vector<1x28x32xf32>
    %52 = vector.shape_cast %51 : vector<1x28x32xf32> to vector<28x32xf32>
    %53 = vector.extract_strided_slice %0 {offsets = [4, 2, 0], sizes = [1, 28, 32], strides = [1, 1, 1]} : vector<8x32x32xf32> to vector<1x28x32xf32>
    %54 = vector.shape_cast %53 : vector<1x28x32xf32> to vector<28x32xf32>
    %55 = vector.extract_strided_slice %0 {offsets = [4, 3, 0], sizes = [1, 28, 32], strides = [1, 1, 1]} : vector<8x32x32xf32> to vector<1x28x32xf32>
    %56 = vector.shape_cast %55 : vector<1x28x32xf32> to vector<28x32xf32>
    %57 = vector.extract_strided_slice %0 {offsets = [4, 4, 0], sizes = [1, 28, 32], strides = [1, 1, 1]} : vector<8x32x32xf32> to vector<1x28x32xf32>
    %58 = vector.shape_cast %57 : vector<1x28x32xf32> to vector<28x32xf32>
    %59 = tpu.concatenate %50, %52, %54, %56, %58 in 1 : vector<28x32xf32>, vector<28x32xf32>, vector<28x32xf32>, vector<28x32xf32>, vector<28x32xf32> -> vector<28x160xf32>
    %60 = vector.extract_strided_slice %0 {offsets = [5, 0, 0], sizes = [1, 28, 32], strides = [1, 1, 1]} : vector<8x32x32xf32> to vector<1x28x32xf32>
    %61 = vector.shape_cast %60 : vector<1x28x32xf32> to vector<28x32xf32>
    %62 = vector.extract_strided_slice %0 {offsets = [5, 1, 0], sizes = [1, 28, 32], strides = [1, 1, 1]} : vector<8x32x32xf32> to vector<1x28x32xf32>
    %63 = vector.shape_cast %62 : vector<1x28x32xf32> to vector<28x32xf32>
    %64 = vector.extract_strided_slice %0 {offsets = [5, 2, 0], sizes = [1, 28, 32], strides = [1, 1, 1]} : vector<8x32x32xf32> to vector<1x28x32xf32>
    %65 = vector.shape_cast %64 : vector<1x28x32xf32> to vector<28x32xf32>
    %66 = vector.extract_strided_slice %0 {offsets = [5, 3, 0], sizes = [1, 28, 32], strides = [1, 1, 1]} : vector<8x32x32xf32> to vector<1x28x32xf32>
    %67 = vector.shape_cast %66 : vector<1x28x32xf32> to vector<28x32xf32>
    %68 = vector.extract_strided_slice %0 {offsets = [5, 4, 0], sizes = [1, 28, 32], strides = [1, 1, 1]} : vector<8x32x32xf32> to vector<1x28x32xf32>
    %69 = vector.shape_cast %68 : vector<1x28x32xf32> to vector<28x32xf32>
    %70 = tpu.concatenate %61, %63, %65, %67, %69 in 1 : vector<28x32xf32>, vector<28x32xf32>, vector<28x32xf32>, vector<28x32xf32>, vector<28x32xf32> -> vector<28x160xf32>
    %71 = vector.extract_strided_slice %0 {offsets = [6, 0, 0], sizes = [1, 28, 32], strides = [1, 1, 1]} : vector<8x32x32xf32> to vector<1x28x32xf32>
    %72 = vector.shape_cast %71 : vector<1x28x32xf32> to vector<28x32xf32>
    %73 = vector.extract_strided_slice %0 {offsets = [6, 1, 0], sizes = [1, 28, 32], strides = [1, 1, 1]} : vector<8x32x32xf32> to vector<1x28x32xf32>
    %74 = vector.shape_cast %73 : vector<1x28x32xf32> to vector<28x32xf32>
    %75 = vector.extract_strided_slice %0 {offsets = [6, 2, 0], sizes = [1, 28, 32], strides = [1, 1, 1]} : vector<8x32x32xf32> to vector<1x28x32xf32>
    %76 = vector.shape_cast %75 : vector<1x28x32xf32> to vector<28x32xf32>
    %77 = vector.extract_strided_slice %0 {offsets = [6, 3, 0], sizes = [1, 28, 32], strides = [1, 1, 1]} : vector<8x32x32xf32> to vector<1x28x32xf32>
    %78 = vector.shape_cast %77 : vector<1x28x32xf32> to vector<28x32xf32>
    %79 = vector.extract_strided_slice %0 {offsets = [6, 4, 0], sizes = [1, 28, 32], strides = [1, 1, 1]} : vector<8x32x32xf32> to vector<1x28x32xf32>
    %80 = vector.shape_cast %79 : vector<1x28x32xf32> to vector<28x32xf32>
    %81 = tpu.concatenate %72, %74, %76, %78, %80 in 1 : vector<28x32xf32>, vector<28x32xf32>, vector<28x32xf32>, vector<28x32xf32>, vector<28x32xf32> -> vector<28x160xf32>
    %82 = vector.extract_strided_slice %0 {offsets = [7, 0, 0], sizes = [1, 28, 32], strides = [1, 1, 1]} : vector<8x32x32xf32> to vector<1x28x32xf32>
    %83 = vector.shape_cast %82 : vector<1x28x32xf32> to vector<28x32xf32>
    %84 = vector.extract_strided_slice %0 {offsets = [7, 1, 0], sizes = [1, 28, 32], strides = [1, 1, 1]} : vector<8x32x32xf32> to vector<1x28x32xf32>
    %85 = vector.shape_cast %84 : vector<1x28x32xf32> to vector<28x32xf32>
    %86 = vector.extract_strided_slice %0 {offsets = [7, 2, 0], sizes = [1, 28, 32], strides = [1, 1, 1]} : vector<8x32x32xf32> to vector<1x28x32xf32>
    %87 = vector.shape_cast %86 : vector<1x28x32xf32> to vector<28x32xf32>
    %88 = vector.extract_strided_slice %0 {offsets = [7, 3, 0], sizes = [1, 28, 32], strides = [1, 1, 1]} : vector<8x32x32xf32> to vector<1x28x32xf32>
    %89 = vector.shape_cast %88 : vector<1x28x32xf32> to vector<28x32xf32>
    %90 = vector.extract_strided_slice %0 {offsets = [7, 4, 0], sizes = [1, 28, 32], strides = [1, 1, 1]} : vector<8x32x32xf32> to vector<1x28x32xf32>
    %91 = vector.shape_cast %90 : vector<1x28x32xf32> to vector<28x32xf32>
    %92 = tpu.concatenate %83, %85, %87, %89, %91 in 1 : vector<28x32xf32>, vector<28x32xf32>, vector<28x32xf32>, vector<28x32xf32>, vector<28x32xf32> -> vector<28x160xf32>
    %93 = tpu.concatenate %15, %26, %37, %48, %59, %70, %81, %92 in 0 : vector<28x160xf32>, vector<28x160xf32>, vector<28x160xf32>, vector<28x160xf32>, vector<28x160xf32>, vector<28x160xf32>, vector<28x160xf32>, vector<28x160xf32> -> vector<224x160xf32>
    %c0_5 = arith.constant 0 : index
    %c0_6 = arith.constant 0 : index
    %94 = vector.load %arg2[%c0_5, %c0_6] : memref<160x168xf32, #tpu.memory_space<vmem>>, vector<160x168xf32>
    %cst_7 = arith.constant dense<0.000000e+00> : vector<224x168xf32>
    %95 = tpu.matmul %93, %94, %cst_7 {dimension_numbers = #tpu.dot_dimension_numbers<[1], [0], [0], [1], [0, 0, 1, 1], [], []>} : vector<224x160xf32>, vector<160x168xf32>, vector<224x168xf32> -> vector<224x168xf32>
    %c0_8 = arith.constant 0 : index
    %c0_9 = arith.constant 0 : index
    %96 = vector.load %arg3[%c0_8, %c0_9] : memref<1x168xf32, #tpu.memory_space<vmem>>, vector<1x168xf32>
    %97 = vector.broadcast %96 : vector<1x168xf32> to vector<224x168xf32>
    %98 = arith.addf %95, %97 : vector<224x168xf32>
    %cst_10 = arith.constant 0.000000e+00 : f32
    %99 = vector.broadcast %cst_10 : f32 to vector<224x168xf32>
    %100 = arith.maximumf %98, %99 : vector<224x168xf32>
    %c0_11 = arith.constant 0 : index
    %c0_12 = arith.constant 0 : index
    %101 = vector.load %arg5[%c0_11, %c0_12] : memref<112x224xf32, #tpu.memory_space<vmem>>, vector<112x224xf32>
    %c0_13 = arith.constant 0 : index
    %c0_14 = arith.constant 0 : index
    %102 = vector.load %arg4[%c0_13, %c0_14] : memref<168x84xf32, #tpu.memory_space<vmem>>, vector<168x84xf32>
    %cst_15 = arith.constant dense<0.000000e+00> : vector<224x84xf32>
    %103 = tpu.matmul %100, %102, %cst_15 {dimension_numbers = #tpu.dot_dimension_numbers<[1], [0], [0], [1], [0, 0, 1, 1], [], []>} : vector<224x168xf32>, vector<168x84xf32>, vector<224x84xf32> -> vector<224x84xf32>
    %cst_16 = arith.constant dense<0.000000e+00> : vector<112x84xf32>
    %104 = tpu.matmul %101, %103, %cst_16 {dimension_numbers = #tpu.dot_dimension_numbers<[1], [0], [0], [1], [0, 0, 1, 1], [], []>} : vector<112x224xf32>, vector<224x84xf32>, vector<112x84xf32> -> vector<112x84xf32>
    %cst_17 = arith.constant 0.000000e+00 : f32
    %105 = vector.broadcast %cst_17 : f32 to vector<112x84xf32>
    %106 = arith.cmpf oeq, %104, %105 : vector<112x84xf32>
    %107 = arith.extui %106 : vector<112x84xi1> to vector<112x84xi8>
    %c0_18 = arith.constant 0 : index
    %c0_19 = arith.constant 0 : index
    %108 = vector.load %arg18[%c0_18, %c0_19] : memref<112x84xi8, #tpu.memory_space<vmem>>, vector<112x84xi8>
    tpu.vector_store %arg18[%c0_18, %c0_19], %107 {strides = array<i32>} : memref<112x84xi8, #tpu.memory_space<vmem>>, vector<112x84xi8>,
    %109 = vector.extract_strided_slice %104 {offsets = [0, 0], sizes = [10, 84], strides = [1, 1]} : vector<112x84xf32> to vector<10x84xf32>
    %110 = vector.extract_strided_slice %104 {offsets = [1, 0], sizes = [10, 84], strides = [1, 1]} : vector<112x84xf32> to vector<10x84xf32>
    %111 = vector.extract_strided_slice %104 {offsets = [2, 0], sizes = [10, 84], strides = [1, 1]} : vector<112x84xf32> to vector<10x84xf32>
    %112 = vector.extract_strided_slice %104 {offsets = [3, 0], sizes = [10, 84], strides = [1, 1]} : vector<112x84xf32> to vector<10x84xf32>
    %113 = vector.extract_strided_slice %104 {offsets = [4, 0], sizes = [10, 84], strides = [1, 1]} : vector<112x84xf32> to vector<10x84xf32>
    %114 = tpu.concatenate %109, %110, %111, %112, %113 in 1 : vector<10x84xf32>, vector<10x84xf32>, vector<10x84xf32>, vector<10x84xf32>, vector<10x84xf32> -> vector<10x420xf32>
    %115 = vector.extract_strided_slice %104 {offsets = [14, 0], sizes = [10, 84], strides = [1, 1]} : vector<112x84xf32> to vector<10x84xf32>
    %116 = vector.extract_strided_slice %104 {offsets = [15, 0], sizes = [10, 84], strides = [1, 1]} : vector<112x84xf32> to vector<10x84xf32>
    %117 = vector.extract_strided_slice %104 {offsets = [16, 0], sizes = [10, 84], strides = [1, 1]} : vector<112x84xf32> to vector<10x84xf32>
    %118 = vector.extract_strided_slice %104 {offsets = [17, 0], sizes = [10, 84], strides = [1, 1]} : vector<112x84xf32> to vector<10x84xf32>
    %119 = vector.extract_strided_slice %104 {offsets = [18, 0], sizes = [10, 84], strides = [1, 1]} : vector<112x84xf32> to vector<10x84xf32>
    %120 = tpu.concatenate %115, %116, %117, %118, %119 in 1 : vector<10x84xf32>, vector<10x84xf32>, vector<10x84xf32>, vector<10x84xf32>, vector<10x84xf32> -> vector<10x420xf32>
    %121 = vector.extract_strided_slice %104 {offsets = [28, 0], sizes = [10, 84], strides = [1, 1]} : vector<112x84xf32> to vector<10x84xf32>
    %122 = vector.extract_strided_slice %104 {offsets = [29, 0], sizes = [10, 84], strides = [1, 1]} : vector<112x84xf32> to vector<10x84xf32>
    %123 = vector.extract_strided_slice %104 {offsets = [30, 0], sizes = [10, 84], strides = [1, 1]} : vector<112x84xf32> to vector<10x84xf32>
    %124 = vector.extract_strided_slice %104 {offsets = [31, 0], sizes = [10, 84], strides = [1, 1]} : vector<112x84xf32> to vector<10x84xf32>
    %125 = vector.extract_strided_slice %104 {offsets = [32, 0], sizes = [10, 84], strides = [1, 1]} : vector<112x84xf32> to vector<10x84xf32>
    %126 = tpu.concatenate %121, %122, %123, %124, %125 in 1 : vector<10x84xf32>, vector<10x84xf32>, vector<10x84xf32>, vector<10x84xf32>, vector<10x84xf32> -> vector<10x420xf32>
    %127 = vector.extract_strided_slice %104 {offsets = [42, 0], sizes = [10, 84], strides = [1, 1]} : vector<112x84xf32> to vector<10x84xf32>
    %128 = vector.extract_strided_slice %104 {offsets = [43, 0], sizes = [10, 84], strides = [1, 1]} : vector<112x84xf32> to vector<10x84xf32>
    %129 = vector.extract_strided_slice %104 {offsets = [44, 0], sizes = [10, 84], strides = [1, 1]} : vector<112x84xf32> to vector<10x84xf32>
    %130 = vector.extract_strided_slice %104 {offsets = [45, 0], sizes = [10, 84], strides = [1, 1]} : vector<112x84xf32> to vector<10x84xf32>
    %131 = vector.extract_strided_slice %104 {offsets = [46, 0], sizes = [10, 84], strides = [1, 1]} : vector<112x84xf32> to vector<10x84xf32>
    %132 = tpu.concatenate %127, %128, %129, %130, %131 in 1 : vector<10x84xf32>, vector<10x84xf32>, vector<10x84xf32>, vector<10x84xf32>, vector<10x84xf32> -> vector<10x420xf32>
    %133 = vector.extract_strided_slice %104 {offsets = [56, 0], sizes = [10, 84], strides = [1, 1]} : vector<112x84xf32> to vector<10x84xf32>
    %134 = vector.extract_strided_slice %104 {offsets = [57, 0], sizes = [10, 84], strides = [1, 1]} : vector<112x84xf32> to vector<10x84xf32>
    %135 = vector.extract_strided_slice %104 {offsets = [58, 0], sizes = [10, 84], strides = [1, 1]} : vector<112x84xf32> to vector<10x84xf32>
    %136 = vector.extract_strided_slice %104 {offsets = [59, 0], sizes = [10, 84], strides = [1, 1]} : vector<112x84xf32> to vector<10x84xf32>
    %137 = vector.extract_strided_slice %104 {offsets = [60, 0], sizes = [10, 84], strides = [1, 1]} : vector<112x84xf32> to vector<10x84xf32>
    %138 = tpu.concatenate %133, %134, %135, %136, %137 in 1 : vector<10x84xf32>, vector<10x84xf32>, vector<10x84xf32>, vector<10x84xf32>, vector<10x84xf32> -> vector<10x420xf32>
    %139 = vector.extract_strided_slice %104 {offsets = [70, 0], sizes = [10, 84], strides = [1, 1]} : vector<112x84xf32> to vector<10x84xf32>
    %140 = vector.extract_strided_slice %104 {offsets = [71, 0], sizes = [10, 84], strides = [1, 1]} : vector<112x84xf32> to vector<10x84xf32>
    %141 = vector.extract_strided_slice %104 {offsets = [72, 0], sizes = [10, 84], strides = [1, 1]} : vector<112x84xf32> to vector<10x84xf32>
    %142 = vector.extract_strided_slice %104 {offsets = [73, 0], sizes = [10, 84], strides = [1, 1]} : vector<112x84xf32> to vector<10x84xf32>
    %143 = vector.extract_strided_slice %104 {offsets = [74, 0], sizes = [10, 84], strides = [1, 1]} : vector<112x84xf32> to vector<10x84xf32>
    %144 = tpu.concatenate %139, %140, %141, %142, %143 in 1 : vector<10x84xf32>, vector<10x84xf32>, vector<10x84xf32>, vector<10x84xf32>, vector<10x84xf32> -> vector<10x420xf32>
    %145 = vector.extract_strided_slice %104 {offsets = [84, 0], sizes = [10, 84], strides = [1, 1]} : vector<112x84xf32> to vector<10x84xf32>
    %146 = vector.extract_strided_slice %104 {offsets = [85, 0], sizes = [10, 84], strides = [1, 1]} : vector<112x84xf32> to vector<10x84xf32>
    %147 = vector.extract_strided_slice %104 {offsets = [86, 0], sizes = [10, 84], strides = [1, 1]} : vector<112x84xf32> to vector<10x84xf32>
    %148 = vector.extract_strided_slice %104 {offsets = [87, 0], sizes = [10, 84], strides = [1, 1]} : vector<112x84xf32> to vector<10x84xf32>
    %149 = vector.extract_strided_slice %104 {offsets = [88, 0], sizes = [10, 84], strides = [1, 1]} : vector<112x84xf32> to vector<10x84xf32>
    %150 = tpu.concatenate %145, %146, %147, %148, %149 in 1 : vector<10x84xf32>, vector<10x84xf32>, vector<10x84xf32>, vector<10x84xf32>, vector<10x84xf32> -> vector<10x420xf32>
    %151 = vector.extract_strided_slice %104 {offsets = [98, 0], sizes = [10, 84], strides = [1, 1]} : vector<112x84xf32> to vector<10x84xf32>
    %152 = vector.extract_strided_slice %104 {offsets = [99, 0], sizes = [10, 84], strides = [1, 1]} : vector<112x84xf32> to vector<10x84xf32>
    %153 = vector.extract_strided_slice %104 {offsets = [100, 0], sizes = [10, 84], strides = [1, 1]} : vector<112x84xf32> to vector<10x84xf32>
    %154 = vector.extract_strided_slice %104 {offsets = [101, 0], sizes = [10, 84], strides = [1, 1]} : vector<112x84xf32> to vector<10x84xf32>
    %155 = vector.extract_strided_slice %104 {offsets = [102, 0], sizes = [10, 84], strides = [1, 1]} : vector<112x84xf32> to vector<10x84xf32>
    %156 = tpu.concatenate %151, %152, %153, %154, %155 in 1 : vector<10x84xf32>, vector<10x84xf32>, vector<10x84xf32>, vector<10x84xf32>, vector<10x84xf32> -> vector<10x420xf32>
    %157 = tpu.concatenate %114, %120, %126, %132, %138, %144, %150, %156 in 0 : vector<10x420xf32>, vector<10x420xf32>, vector<10x420xf32>, vector<10x420xf32>, vector<10x420xf32>, vector<10x420xf32>, vector<10x420xf32>, vector<10x420xf32> -> vector<80x420xf32>
    %c0_20 = arith.constant 0 : index
    %c0_21 = arith.constant 0 : index
    %158 = vector.load %arg6[%c0_20, %c0_21] : memref<420x160xf32, #tpu.memory_space<vmem>>, vector<420x160xf32>
    %cst_22 = arith.constant dense<0.000000e+00> : vector<80x160xf32>
    %159 = tpu.matmul %157, %158, %cst_22 {dimension_numbers = #tpu.dot_dimension_numbers<[1], [0], [0], [1], [0, 0, 1, 1], [], []>} : vector<80x420xf32>, vector<420x160xf32>, vector<80x160xf32> -> vector<80x160xf32>
    %c0_23 = arith.constant 0 : index
    %c0_24 = arith.constant 0 : index
    %160 = vector.load %arg7[%c0_23, %c0_24] : memref<1x160xf32, #tpu.memory_space<vmem>>, vector<1x160xf32>
    %161 = vector.broadcast %160 : vector<1x160xf32> to vector<80x160xf32>
    %162 = arith.addf %159, %161 : vector<80x160xf32>
    %cst_25 = arith.constant 0.000000e+00 : f32
    %163 = vector.broadcast %cst_25 : f32 to vector<80x160xf32>
    %164 = arith.maximumf %162, %163 : vector<80x160xf32>
    %c0_26 = arith.constant 0 : index
    %c0_27 = arith.constant 0 : index
    %165 = vector.load %arg9[%c0_26, %c0_27] : memref<40x80xf32, #tpu.memory_space<vmem>>, vector<40x80xf32>
    %c0_28 = arith.constant 0 : index
    %c0_29 = arith.constant 0 : index
    %166 = vector.load %arg8[%c0_28, %c0_29] : memref<160x80xf32, #tpu.memory_space<vmem>>, vector<160x80xf32>
    %cst_30 = arith.constant dense<0.000000e+00> : vector<80x80xf32>
    %167 = tpu.matmul %164, %166, %cst_30 {dimension_numbers = #tpu.dot_dimension_numbers<[1], [0], [0], [1], [0, 0, 1, 1], [], []>} : vector<80x160xf32>, vector<160x80xf32>, vector<80x80xf32> -> vector<80x80xf32>
    %cst_31 = arith.constant dense<0.000000e+00> : vector<40x80xf32>
    %168 = tpu.matmul %165, %167, %cst_31 {dimension_numbers = #tpu.dot_dimension_numbers<[1], [0], [0], [1], [0, 0, 1, 1], [], []>} : vector<40x80xf32>, vector<80x80xf32>, vector<40x80xf32> -> vector<40x80xf32>
    %cst_32 = arith.constant 0.000000e+00 : f32
    %169 = vector.broadcast %cst_32 : f32 to vector<40x80xf32>
    %170 = arith.cmpf oeq, %168, %169 : vector<40x80xf32>
    %171 = arith.extui %170 : vector<40x80xi1> to vector<40x80xi8>
    %c0_33 = arith.constant 0 : index
    %c0_34 = arith.constant 0 : index
    %172 = vector.load %arg19[%c0_33, %c0_34] : memref<40x80xi8, #tpu.memory_space<vmem>>, vector<40x80xi8>
    tpu.vector_store %arg19[%c0_33, %c0_34], %171 {strides = array<i32>} : memref<40x80xi8, #tpu.memory_space<vmem>>, vector<40x80xi8>,
    %173 = vector.extract_strided_slice %168 {offsets = [0, 0], sizes = [1, 80], strides = [1, 1]} : vector<40x80xf32> to vector<1x80xf32>
    %174 = vector.extract_strided_slice %168 {offsets = [1, 0], sizes = [1, 80], strides = [1, 1]} : vector<40x80xf32> to vector<1x80xf32>
    %175 = vector.extract_strided_slice %168 {offsets = [2, 0], sizes = [1, 80], strides = [1, 1]} : vector<40x80xf32> to vector<1x80xf32>
    %176 = vector.extract_strided_slice %168 {offsets = [3, 0], sizes = [1, 80], strides = [1, 1]} : vector<40x80xf32> to vector<1x80xf32>
    %177 = vector.extract_strided_slice %168 {offsets = [4, 0], sizes = [1, 80], strides = [1, 1]} : vector<40x80xf32> to vector<1x80xf32>
    %178 = tpu.concatenate %173, %174, %175, %176, %177 in 1 : vector<1x80xf32>, vector<1x80xf32>, vector<1x80xf32>, vector<1x80xf32>, vector<1x80xf32> -> vector<1x400xf32>
    %179 = vector.extract_strided_slice %168 {offsets = [5, 0], sizes = [1, 80], strides = [1, 1]} : vector<40x80xf32> to vector<1x80xf32>
    %180 = vector.extract_strided_slice %168 {offsets = [6, 0], sizes = [1, 80], strides = [1, 1]} : vector<40x80xf32> to vector<1x80xf32>
    %181 = vector.extract_strided_slice %168 {offsets = [7, 0], sizes = [1, 80], strides = [1, 1]} : vector<40x80xf32> to vector<1x80xf32>
    %182 = vector.extract_strided_slice %168 {offsets = [8, 0], sizes = [1, 80], strides = [1, 1]} : vector<40x80xf32> to vector<1x80xf32>
    %183 = vector.extract_strided_slice %168 {offsets = [9, 0], sizes = [1, 80], strides = [1, 1]} : vector<40x80xf32> to vector<1x80xf32>
    %184 = tpu.concatenate %179, %180, %181, %182, %183 in 1 : vector<1x80xf32>, vector<1x80xf32>, vector<1x80xf32>, vector<1x80xf32>, vector<1x80xf32> -> vector<1x400xf32>
    %185 = vector.extract_strided_slice %168 {offsets = [10, 0], sizes = [1, 80], strides = [1, 1]} : vector<40x80xf32> to vector<1x80xf32>
    %186 = vector.extract_strided_slice %168 {offsets = [11, 0], sizes = [1, 80], strides = [1, 1]} : vector<40x80xf32> to vector<1x80xf32>
    %187 = vector.extract_strided_slice %168 {offsets = [12, 0], sizes = [1, 80], strides = [1, 1]} : vector<40x80xf32> to vector<1x80xf32>
    %188 = vector.extract_strided_slice %168 {offsets = [13, 0], sizes = [1, 80], strides = [1, 1]} : vector<40x80xf32> to vector<1x80xf32>
    %189 = vector.extract_strided_slice %168 {offsets = [14, 0], sizes = [1, 80], strides = [1, 1]} : vector<40x80xf32> to vector<1x80xf32>
    %190 = tpu.concatenate %185, %186, %187, %188, %189 in 1 : vector<1x80xf32>, vector<1x80xf32>, vector<1x80xf32>, vector<1x80xf32>, vector<1x80xf32> -> vector<1x400xf32>
    %191 = vector.extract_strided_slice %168 {offsets = [15, 0], sizes = [1, 80], strides = [1, 1]} : vector<40x80xf32> to vector<1x80xf32>
    %192 = vector.extract_strided_slice %168 {offsets = [16, 0], sizes = [1, 80], strides = [1, 1]} : vector<40x80xf32> to vector<1x80xf32>
    %193 = vector.extract_strided_slice %168 {offsets = [17, 0], sizes = [1, 80], strides = [1, 1]} : vector<40x80xf32> to vector<1x80xf32>
    %194 = vector.extract_strided_slice %168 {offsets = [18, 0], sizes = [1, 80], strides = [1, 1]} : vector<40x80xf32> to vector<1x80xf32>
    %195 = vector.extract_strided_slice %168 {offsets = [19, 0], sizes = [1, 80], strides = [1, 1]} : vector<40x80xf32> to vector<1x80xf32>
    %196 = tpu.concatenate %191, %192, %193, %194, %195 in 1 : vector<1x80xf32>, vector<1x80xf32>, vector<1x80xf32>, vector<1x80xf32>, vector<1x80xf32> -> vector<1x400xf32>
    %197 = vector.extract_strided_slice %168 {offsets = [20, 0], sizes = [1, 80], strides = [1, 1]} : vector<40x80xf32> to vector<1x80xf32>
    %198 = vector.extract_strided_slice %168 {offsets = [21, 0], sizes = [1, 80], strides = [1, 1]} : vector<40x80xf32> to vector<1x80xf32>
    %199 = vector.extract_strided_slice %168 {offsets = [22, 0], sizes = [1, 80], strides = [1, 1]} : vector<40x80xf32> to vector<1x80xf32>
    %200 = vector.extract_strided_slice %168 {offsets = [23, 0], sizes = [1, 80], strides = [1, 1]} : vector<40x80xf32> to vector<1x80xf32>
    %201 = vector.extract_strided_slice %168 {offsets = [24, 0], sizes = [1, 80], strides = [1, 1]} : vector<40x80xf32> to vector<1x80xf32>
    %202 = tpu.concatenate %197, %198, %199, %200, %201 in 1 : vector<1x80xf32>, vector<1x80xf32>, vector<1x80xf32>, vector<1x80xf32>, vector<1x80xf32> -> vector<1x400xf32>
    %203 = vector.extract_strided_slice %168 {offsets = [25, 0], sizes = [1, 80], strides = [1, 1]} : vector<40x80xf32> to vector<1x80xf32>
    %204 = vector.extract_strided_slice %168 {offsets = [26, 0], sizes = [1, 80], strides = [1, 1]} : vector<40x80xf32> to vector<1x80xf32>
    %205 = vector.extract_strided_slice %168 {offsets = [27, 0], sizes = [1, 80], strides = [1, 1]} : vector<40x80xf32> to vector<1x80xf32>
    %206 = vector.extract_strided_slice %168 {offsets = [28, 0], sizes = [1, 80], strides = [1, 1]} : vector<40x80xf32> to vector<1x80xf32>
    %207 = vector.extract_strided_slice %168 {offsets = [29, 0], sizes = [1, 80], strides = [1, 1]} : vector<40x80xf32> to vector<1x80xf32>
    %208 = tpu.concatenate %203, %204, %205, %206, %207 in 1 : vector<1x80xf32>, vector<1x80xf32>, vector<1x80xf32>, vector<1x80xf32>, vector<1x80xf32> -> vector<1x400xf32>
    %209 = vector.extract_strided_slice %168 {offsets = [30, 0], sizes = [1, 80], strides = [1, 1]} : vector<40x80xf32> to vector<1x80xf32>
    %210 = vector.extract_strided_slice %168 {offsets = [31, 0], sizes = [1, 80], strides = [1, 1]} : vector<40x80xf32> to vector<1x80xf32>
    %211 = vector.extract_strided_slice %168 {offsets = [32, 0], sizes = [1, 80], strides = [1, 1]} : vector<40x80xf32> to vector<1x80xf32>
    %212 = vector.extract_strided_slice %168 {offsets = [33, 0], sizes = [1, 80], strides = [1, 1]} : vector<40x80xf32> to vector<1x80xf32>
    %213 = vector.extract_strided_slice %168 {offsets = [34, 0], sizes = [1, 80], strides = [1, 1]} : vector<40x80xf32> to vector<1x80xf32>
    %214 = tpu.concatenate %209, %210, %211, %212, %213 in 1 : vector<1x80xf32>, vector<1x80xf32>, vector<1x80xf32>, vector<1x80xf32>, vector<1x80xf32> -> vector<1x400xf32>
    %215 = vector.extract_strided_slice %168 {offsets = [35, 0], sizes = [1, 80], strides = [1, 1]} : vector<40x80xf32> to vector<1x80xf32>
    %216 = vector.extract_strided_slice %168 {offsets = [36, 0], sizes = [1, 80], strides = [1, 1]} : vector<40x80xf32> to vector<1x80xf32>
    %217 = vector.extract_strided_slice %168 {offsets = [37, 0], sizes = [1, 80], strides = [1, 1]} : vector<40x80xf32> to vector<1x80xf32>
    %218 = vector.extract_strided_slice %168 {offsets = [38, 0], sizes = [1, 80], strides = [1, 1]} : vector<40x80xf32> to vector<1x80xf32>
    %219 = vector.extract_strided_slice %168 {offsets = [39, 0], sizes = [1, 80], strides = [1, 1]} : vector<40x80xf32> to vector<1x80xf32>
    %220 = tpu.concatenate %215, %216, %217, %218, %219 in 1 : vector<1x80xf32>, vector<1x80xf32>, vector<1x80xf32>, vector<1x80xf32>, vector<1x80xf32> -> vector<1x400xf32>
    %221 = tpu.concatenate %178, %184, %190, %196, %202, %208, %214, %220 in 0 : vector<1x400xf32>, vector<1x400xf32>, vector<1x400xf32>, vector<1x400xf32>, vector<1x400xf32>, vector<1x400xf32>, vector<1x400xf32>, vector<1x400xf32> -> vector<8x400xf32>
    %c0_35 = arith.constant 0 : index
    %c0_36 = arith.constant 0 : index
    %222 = vector.load %arg10[%c0_35, %c0_36] : memref<400x120xf32, #tpu.memory_space<vmem>>, vector<400x120xf32>
    %cst_37 = arith.constant dense<0.000000e+00> : vector<8x120xf32>
    %223 = tpu.matmul %221, %222, %cst_37 {dimension_numbers = #tpu.dot_dimension_numbers<[1], [0], [0], [1], [0, 0, 1, 1], [], []>} : vector<8x400xf32>, vector<400x120xf32>, vector<8x120xf32> -> vector<8x120xf32>
    %c0_38 = arith.constant 0 : index
    %c0_39 = arith.constant 0 : index
    %224 = vector.load %arg11[%c0_38, %c0_39] : memref<1x120xf32, #tpu.memory_space<vmem>>, vector<1x120xf32>
    %225 = vector.broadcast %224 : vector<1x120xf32> to vector<8x120xf32>
    %226 = arith.addf %223, %225 : vector<8x120xf32>
    %cst_40 = arith.constant 0.000000e+00 : f32
    %227 = vector.broadcast %cst_40 : f32 to vector<8x120xf32>
    %228 = arith.maximumf %226, %227 : vector<8x120xf32>
    %cst_41 = arith.constant 0.000000e+00 : f32
    %229 = vector.broadcast %cst_41 : f32 to vector<8x120xf32>
    %230 = arith.cmpf oeq, %228, %229 : vector<8x120xf32>
    %231 = arith.extui %230 : vector<8x120xi1> to vector<8x120xi8>
    %c0_42 = arith.constant 0 : index
    %c0_43 = arith.constant 0 : index
    %232 = vector.load %arg20[%c0_42, %c0_43] : memref<8x120xi8, #tpu.memory_space<vmem>>, vector<8x120xi8>
    tpu.vector_store %arg20[%c0_42, %c0_43], %231 {strides = array<i32>} : memref<8x120xi8, #tpu.memory_space<vmem>>, vector<8x120xi8>,
    %c0_44 = arith.constant 0 : index
    %c0_45 = arith.constant 0 : index
    %233 = vector.load %arg12[%c0_44, %c0_45] : memref<120x84xf32, #tpu.memory_space<vmem>>, vector<120x84xf32>
    %cst_46 = arith.constant dense<0.000000e+00> : vector<8x84xf32>
    %234 = tpu.matmul %228, %233, %cst_46 {dimension_numbers = #tpu.dot_dimension_numbers<[1], [0], [0], [1], [0, 0, 1, 1], [], []>} : vector<8x120xf32>, vector<120x84xf32>, vector<8x84xf32> -> vector<8x84xf32>
    %c0_47 = arith.constant 0 : index
    %c0_48 = arith.constant 0 : index
    %235 = vector.load %arg13[%c0_47, %c0_48] : memref<1x84xf32, #tpu.memory_space<vmem>>, vector<1x84xf32>
    %236 = vector.broadcast %235 : vector<1x84xf32> to vector<8x84xf32>
    %237 = arith.addf %234, %236 : vector<8x84xf32>
    %cst_49 = arith.constant 0.000000e+00 : f32
    %238 = vector.broadcast %cst_49 : f32 to vector<8x84xf32>
    %239 = arith.maximumf %237, %238 : vector<8x84xf32>
    %c0_50 = arith.constant 0 : index
    %c0_51 = arith.constant 0 : index
    %240 = vector.load %arg14[%c0_50, %c0_51] : memref<84x10xf32, #tpu.memory_space<vmem>>, vector<84x10xf32>
    %cst_52 = arith.constant dense<0.000000e+00> : vector<8x10xf32>
    %241 = tpu.matmul %239, %240, %cst_52 {dimension_numbers = #tpu.dot_dimension_numbers<[1], [0], [0], [1], [0, 0, 1, 1], [], []>} : vector<8x84xf32>, vector<84x10xf32>, vector<8x10xf32> -> vector<8x10xf32>
    %c0_53 = arith.constant 0 : index
    %c0_54 = arith.constant 0 : index
    %242 = vector.load %arg15[%c0_53, %c0_54] : memref<1x10xf32, #tpu.memory_space<vmem>>, vector<1x10xf32>
    %243 = vector.broadcast %242 : vector<1x10xf32> to vector<8x10xf32>
    %244 = arith.addf %241, %243 : vector<8x10xf32>
    %c0_55 = arith.constant 0 : index
    %c0_56 = arith.constant 0 : index
    %245 = vector.load %arg16[%c0_55, %c0_56] : memref<8x10xf32, #tpu.memory_space<vmem>>, vector<8x10xf32>
    tpu.vector_store %arg16[%c0_55, %c0_56], %244 {strides = array<i32>} : memref<8x10xf32, #tpu.memory_space<vmem>>, vector<8x10xf32>,
    return
  }
  func.func @transform_0(%arg0: i32) -> (i32, i32, i32) {
    %c0_i32 = arith.constant 0 : i32
    %c0_i32_0 = arith.constant 0 : i32
    %c0_i32_1 = arith.constant 0 : i32
    return %arg0, %c0_i32, %c0_i32_0 : i32, i32, i32
  }
  func.func @transform_1(%arg0: i32) -> (i32, i32) {
    %c0_i32 = arith.constant 0 : i32
    %c0_i32_0 = arith.constant 0 : i32
    %c0_i32_1 = arith.constant 0 : i32
    return %c0_i32, %c0_i32_0 : i32, i32
  }
  func.func @transform_2(%arg0: i32) -> (i32, i32) {
    %c0_i32 = arith.constant 0 : i32
    %c0_i32_0 = arith.constant 0 : i32
    %c0_i32_1 = arith.constant 0 : i32
    return %c0_i32, %c0_i32_0 : i32, i32
  }
  func.func @transform_3(%arg0: i32) -> (i32, i32) {
    %c0_i32 = arith.constant 0 : i32
    %c0_i32_0 = arith.constant 0 : i32
    %c0_i32_1 = arith.constant 0 : i32
    return %c0_i32, %c0_i32_0 : i32, i32
  }
  func.func @transform_4(%arg0: i32) -> (i32, i32) {
    %c0_i32 = arith.constant 0 : i32
    %c0_i32_0 = arith.constant 0 : i32
    %c0_i32_1 = arith.constant 0 : i32
    return %c0_i32, %c0_i32_0 : i32, i32
  }
  func.func @transform_5(%arg0: i32) -> (i32, i32) {
    %c0_i32 = arith.constant 0 : i32
    %c0_i32_0 = arith.constant 0 : i32
    %c0_i32_1 = arith.constant 0 : i32
    return %c0_i32, %c0_i32_0 : i32, i32
  }
  func.func @transform_6(%arg0: i32) -> (i32, i32) {
    %c0_i32 = arith.constant 0 : i32
    %c0_i32_0 = arith.constant 0 : i32
    %c0_i32_1 = arith.constant 0 : i32
    return %c0_i32, %c0_i32_0 : i32, i32
  }
  func.func @transform_7(%arg0: i32) -> (i32, i32) {
    %c0_i32 = arith.constant 0 : i32
    %c0_i32_0 = arith.constant 0 : i32
    %c0_i32_1 = arith.constant 0 : i32
    return %c0_i32, %c0_i32_0 : i32, i32
  }
  func.func @transform_8(%arg0: i32) -> (i32, i32) {
    %c0_i32 = arith.constant 0 : i32
    %c0_i32_0 = arith.constant 0 : i32
    %c0_i32_1 = arith.constant 0 : i32
    return %c0_i32, %c0_i32_0 : i32, i32
  }
  func.func @transform_9(%arg0: i32) -> (i32, i32) {
    %c0_i32 = arith.constant 0 : i32
    %c0_i32_0 = arith.constant 0 : i32
    %c0_i32_1 = arith.constant 0 : i32
    return %c0_i32, %c0_i32_0 : i32, i32
  }
  func.func @transform_10(%arg0: i32) -> (i32, i32) {
    %c0_i32 = arith.constant 0 : i32
    %c0_i32_0 = arith.constant 0 : i32
    %c0_i32_1 = arith.constant 0 : i32
    return %c0_i32, %c0_i32_0 : i32, i32
  }
  func.func @transform_11(%arg0: i32) -> (i32, i32) {
    %c0_i32 = arith.constant 0 : i32
    %c0_i32_0 = arith.constant 0 : i32
    %c0_i32_1 = arith.constant 0 : i32
    return %c0_i32, %c0_i32_0 : i32, i32
  }
  func.func @transform_12(%arg0: i32) -> (i32, i32) {
    %c0_i32 = arith.constant 0 : i32
    %c0_i32_0 = arith.constant 0 : i32
    %c0_i32_1 = arith.constant 0 : i32
    return %c0_i32, %c0_i32_0 : i32, i32
  }
  func.func @transform_13(%arg0: i32) -> (i32, i32) {
    %c0_i32 = arith.constant 0 : i32
    %c0_i32_0 = arith.constant 0 : i32
    %c0_i32_1 = arith.constant 0 : i32
    return %c0_i32, %c0_i32_0 : i32, i32
  }
  func.func @transform_14(%arg0: i32) -> (i32, i32) {
    %c0_i32 = arith.constant 0 : i32
    %c0_i32_0 = arith.constant 0 : i32
    %c0_i32_1 = arith.constant 0 : i32
    return %c0_i32, %c0_i32_0 : i32, i32
  }
  func.func @transform_15(%arg0: i32) -> (i32, i32) {
    %c0_i32 = arith.constant 0 : i32
    %c0_i32_0 = arith.constant 0 : i32
    return %arg0, %c0_i32 : i32, i32
  }
  func.func @transform_16(%arg0: i32) -> (i32, i32, i32) {
    %c0_i32 = arith.constant 0 : i32
    %c0_i32_0 = arith.constant 0 : i32
    %c0_i32_1 = arith.constant 0 : i32
    return %arg0, %c0_i32, %c0_i32_0 : i32, i32, i32
  }
  func.func @transform_17(%arg0: i32) -> (i32, i32) {
    %c0_i32 = arith.constant 0 : i32
    %c0_i32_0 = arith.constant 0 : i32
    return %arg0, %c0_i32 : i32, i32
  }
  func.func @transform_18(%arg0: i32) -> (i32, i32) {
    %c0_i32 = arith.constant 0 : i32
    %c0_i32_0 = arith.constant 0 : i32
    return %arg0, %c0_i32 : i32, i32
  }
  func.func @transform_19(%arg0: i32) -> (i32, i32) {
    %c0_i32 = arith.constant 0 : i32
    %c0_i32_0 = arith.constant 0 : i32
    return %arg0, %c0_i32 : i32, i32
  }
}

</mosaic_0001>

<llo_original>
// kernel: _forward_impl.1
$region0: #{_forward_impl.1}
  #allocation0 [shape = 'u32[]', space=smem, size = 0x4, offset = 0x4, fixed_abs, tag = 'smem constant byte address 0x4 - core index']
  #allocation1 [shape = 'u32[144,128]{1,0:T(1,128)}', space=vmem, size = 0x12000, scoped, tag = 'internal scratch']
  %s0 = inlined_call_operand.vmem [shape: f32[16,32,32], index: 0, kind: input, shape index: {}]
  %s1 = inlined_call_operand.vmem [shape: f32[160,168], index: 1, kind: input, shape index: {}]
  %s2 = inlined_call_operand.vmem [shape: f32[1,168], index: 2, kind: input, shape index: {}]
  %s3 = inlined_call_operand.vmem [shape: f32[168,84], index: 3, kind: input, shape index: {}]
  %s4 = inlined_call_operand.vmem [shape: f32[112,224], index: 4, kind: input, shape index: {}]
  %s5 = inlined_call_operand.vmem [shape: f32[420,160], index: 5, kind: input, shape index: {}]
  %s6 = inlined_call_operand.vmem [shape: f32[1,160], index: 6, kind: input, shape index: {}]
  %s7 = inlined_call_operand.vmem [shape: f32[160,80], index: 7, kind: input, shape index: {}]
  %s8 = inlined_call_operand.vmem [shape: f32[40,80], index: 8, kind: input, shape index: {}]
  %s9 = inlined_call_operand.vmem [shape: f32[400,120], index: 9, kind: input, shape index: {}]
  %s10 = inlined_call_operand.vmem [shape: f32[1,120], index: 10, kind: input, shape index: {}]
  %s11 = inlined_call_operand.vmem [shape: f32[120,84], index: 11, kind: input, shape index: {}]
  %s12 = inlined_call_operand.vmem [shape: f32[1,84], index: 12, kind: input, shape index: {}]
  %s13 = inlined_call_operand.vmem [shape: f32[84,10], index: 13, kind: input, shape index: {}]
  %s14 = inlined_call_operand.vmem [shape: f32[1,10], index: 14, kind: input, shape index: {}]
  %s15 = inlined_call_operand.hbm [shape: f32[16,10], index: 15, kind: output, shape index: {0}]
  %s16 = inlined_call_operand.vmem [shape: s8[16,32,32], index: 16, kind: output, shape index: {1}]
  %s17 = inlined_call_operand.vmem [shape: s8[224,84], index: 17, kind: output, shape index: {2}]
  %s18 = inlined_call_operand.vmem [shape: s8[80,80], index: 18, kind: output, shape index: {3}]
  %s19 = inlined_call_operand.vmem [shape: s8[16,120], index: 19, kind: output, shape index: {4}]
  %20 = xla_tuple %s15, %s16, %s17, %s18, %s19
  %s21 = sld [smem:[#allocation0]]
  $region125: #{_forward_impl.1} parent=0
    _
  %s23 = ssub.s32 1, %s21
  %s24 = scalar_select 0, %s23, %s21
  $region1: #{_forward_impl.1} parent=0
    #allocation2 [shape = 'u8[8192]{0}', space=vmem, size = 0x2000, scoped, tag = 'output window, operand 0']
    #allocation3 [shape = 's32[2]{0}', space=sflag, size = 0x8, scoped, tag = 'scoped memory for _forward_impl.1']
    %25 = vsyncpa [#allocation3], 0
    %s26 = scalar_lea.sflag [#allocation3], 1
    %27 = vsyncpa %s26, 0
    loop: start=0, step=1, limit=4
    $region2: #{_forward_impl.1} parent=1 // loop_pre_header
      _
    $region3: #{_forward_impl.1} parent=1 // loop_header
      %s29 = sphi 0, %s33
      %p30 = scmp.ge.s32.totalorder %s29, 4
      %s39 = sphi 0, %s41
      %s42 = sphi 0, %s39
      %s43 = sphi 0, %s42
      %s59 = sphi 0, %s43
      %s63 = sphi 0, %s63
      %s65 = sphi 0, %s63
      %s66 = sphi 0, %s65
      %s80 = sphi 0, %s66
      %s84 = sphi 0, %s84
      %s86 = sphi 0, %s84
      %s87 = sphi 0, %s86
      %s101 = sphi 0, %s87
      %s105 = sphi 0, %s105
      %s107 = sphi 0, %s105
      %s108 = sphi 0, %s107
      %s122 = sphi 0, %s108
      %s126 = sphi 0, %s126
      %s128 = sphi 0, %s126
      %s129 = sphi 0, %s128
      %s143 = sphi 0, %s129
      %s147 = sphi 0, %s147
      %s149 = sphi 0, %s147
      %s150 = sphi 0, %s149
      %s164 = sphi 0, %s150
      %s168 = sphi 0, %s168
      %s170 = sphi 0, %s168
      %s171 = sphi 0, %s170
      %s185 = sphi 0, %s171
      %s189 = sphi 0, %s189
      %s191 = sphi 0, %s189
      %s192 = sphi 0, %s191
      %s206 = sphi 0, %s192
      %s210 = sphi 0, %s210
      %s212 = sphi 0, %s210
      %s213 = sphi 0, %s212
      %s227 = sphi 0, %s213
      %s231 = sphi 0, %s231
      %s233 = sphi 0, %s231
      %s234 = sphi 0, %s233
      %s248 = sphi 0, %s234
      %s252 = sphi 0, %s252
      %s254 = sphi 0, %s252
      %s255 = sphi 0, %s254
      %s269 = sphi 0, %s255
      %s273 = sphi 0, %s273
      %s275 = sphi 0, %s273
      %s276 = sphi 0, %s275
      %s290 = sphi 0, %s276
      %s294 = sphi 0, %s294
      %s296 = sphi 0, %s294
      %s297 = sphi 0, %s296
      %s311 = sphi 0, %s297
      %s315 = sphi 0, %s315
      %s317 = sphi 0, %s315
      %s318 = sphi 0, %s317
      %s332 = sphi 0, %s318
      %s336 = sphi 0, %s336
      %s338 = sphi 0, %s336
      %s339 = sphi 0, %s338
      %s353 = sphi 0, %s339
      %s359 = sphi 0, %s361
      %s362 = sphi 0, %s359
      %s363 = sphi 0, %s362
      %s379 = sphi 0, %s363
      %s385 = sphi 0, %s387
      %s388 = sphi 0, %s385
      %s389 = sphi 0, %s388
      %s405 = sphi 0, %s389
      %s411 = sphi 0, %s413
      %s414 = sphi 0, %s411
      %s415 = sphi 0, %s414
      %s431 = sphi 0, %s415
      %s437 = sphi 0, %s439
      %s440 = sphi 0, %s437
      %s441 = sphi 0, %s440
      %s457 = sphi 0, %s441
      %s463 = sphi 0, %s465
      %s466 = sphi 0, %s463
      %s467 = sphi 0, %s466
      %s483 = sphi 0, %s467
    $region4: #{_forward_impl.1} parent=1 // loop_header_branch
      %32 = sbr.rel (%p30) target = $region8
    $region5: #{_forward_impl.1} parent=1 // loop_body
      %s34 = ssub.s32 %s29, 1
      %s35 = ssub.s32 %s29, 2
      %s36 = sadd.s32 %s29, 1
      %s37 = ssub.s32 %s29, %s36
      %p38 = scmp.eq.s32.totalorder %s37, 0
      %s40 = sadd.s32 %s39, 1
      %s41 = scalar_select %p38, %s39, %s40
      %p44 = pneg %p38
      %p45 = scmp.eq.s32.totalorder %s29, 1
      %p46 = por %p44, %p45
      %p47 = scmp.ne.s32.totalorder %s39, %s42
      %p48 = scmp.eq.s32.totalorder %s29, 0
      %p49 = por %p47, %p48
      %p50 = scmp.ne.s32.totalorder %s39, %s42
      %p51 = scmp.eq.s32.totalorder %s34, 1
      %p52 = por %p50, %p51
      %p53 = scmp.ne.s32.totalorder %s42, %s43
      %p54 = scmp.eq.s32.totalorder %s34, 0
      %p55 = por %p53, %p54
      %p56 = scmp.ne.s32.totalorder %s42, %s43
      %p57 = scmp.eq.s32.totalorder %s35, 1
      %p58 = por %p56, %p57
      %p60 = scmp.ne.s32.totalorder %s43, %s59
      %p61 = scmp.eq.s32.totalorder %s35, 0
      %p62 = por %p60, %p61
      %s64 = sadd.s32 %s63, 1
      %p67 = scmp.eq.s32.totalorder %s29, 1
      %p68 = scmp.ne.s32.totalorder %s63, %s65
      %p69 = scmp.eq.s32.totalorder %s29, 0
      %p70 = por %p68, %p69
      %p71 = scmp.ne.s32.totalorder %s63, %s65
      %p72 = scmp.eq.s32.totalorder %s34, 1
      %p73 = por %p71, %p72
      %p74 = scmp.ne.s32.totalorder %s65, %s66
      %p75 = scmp.eq.s32.totalorder %s34, 0
      %p76 = por %p74, %p75
      %p77 = scmp.ne.s32.totalorder %s65, %s66
      %p78 = scmp.eq.s32.totalorder %s35, 1
      %p79 = por %p77, %p78
      %p81 = scmp.ne.s32.totalorder %s66, %s80
      %p82 = scmp.eq.s32.totalorder %s35, 0
      %p83 = por %p81, %p82
      %s85 = sadd.s32 %s84, 1
      %p88 = scmp.eq.s32.totalorder %s29, 1
      %p89 = scmp.ne.s32.totalorder %s84, %s86
      %p90 = scmp.eq.s32.totalorder %s29, 0
      %p91 = por %p89, %p90
      %p92 = scmp.ne.s32.totalorder %s84, %s86
      %p93 = scmp.eq.s32.totalorder %s34, 1
      %p94 = por %p92, %p93
      %p95 = scmp.ne.s32.totalorder %s86, %s87
      %p96 = scmp.eq.s32.totalorder %s34, 0
      %p97 = por %p95, %p96
      %p98 = scmp.ne.s32.totalorder %s86, %s87
      %p99 = scmp.eq.s32.totalorder %s35, 1
      %p100 = por %p98, %p99
      %p102 = scmp.ne.s32.totalorder %s87, %s101
      %p103 = scmp.eq.s32.totalorder %s35, 0
      %p104 = por %p102, %p103
      %s106 = sadd.s32 %s105, 1
      %p109 = scmp.eq.s32.totalorder %s29, 1
      %p110 = scmp.ne.s32.totalorder %s105, %s107
      %p111 = scmp.eq.s32.totalorder %s29, 0
      %p112 = por %p110, %p111
      %p113 = scmp.ne.s32.totalorder %s105, %s107
      %p114 = scmp.eq.s32.totalorder %s34, 1
      %p115 = por %p113, %p114
      %p116 = scmp.ne.s32.totalorder %s107, %s108
      %p117 = scmp.eq.s32.totalorder %s34, 0
      %p118 = por %p116, %p117
      %p119 = scmp.ne.s32.totalorder %s107, %s108
      %p120 = scmp.eq.s32.totalorder %s35, 1
      %p121 = por %p119, %p120
      %p123 = scmp.ne.s32.totalorder %s108, %s122
      %p124 = scmp.eq.s32.totalorder %s35, 0
      %p125 = por %p123, %p124
      %s127 = sadd.s32 %s126, 1
      %p130 = scmp.eq.s32.totalorder %s29, 1
      %p131 = scmp.ne.s32.totalorder %s126, %s128
      %p132 = scmp.eq.s32.totalorder %s29, 0
      %p133 = por %p131, %p132
      %p134 = scmp.ne.s32.totalorder %s126, %s128
      %p135 = scmp.eq.s32.totalorder %s34, 1
      %p136 = por %p134, %p135
      %p137 = scmp.ne.s32.totalorder %s128, %s129
      %p138 = scmp.eq.s32.totalorder %s34, 0
      %p139 = por %p137, %p138
      %p140 = scmp.ne.s32.totalorder %s128, %s129
      %p141 = scmp.eq.s32.totalorder %s35, 1
      %p142 = por %p140, %p141
      %p144 = scmp.ne.s32.totalorder %s129, %s143
      %p145 = scmp.eq.s32.totalorder %s35, 0
      %p146 = por %p144, %p145
      %s148 = sadd.s32 %s147, 1
      %p151 = scmp.eq.s32.totalorder %s29, 1
      %p152 = scmp.ne.s32.totalorder %s147, %s149
      %p153 = scmp.eq.s32.totalorder %s29, 0
      %p154 = por %p152, %p153
      %p155 = scmp.ne.s32.totalorder %s147, %s149
      %p156 = scmp.eq.s32.totalorder %s34, 1
      %p157 = por %p155, %p156
      %p158 = scmp.ne.s32.totalorder %s149, %s150
      %p159 = scmp.eq.s32.totalorder %s34, 0
      %p160 = por %p158, %p159
      %p161 = scmp.ne.s32.totalorder %s149, %s150
      %p162 = scmp.eq.s32.totalorder %s35, 1
      %p163 = por %p161, %p162
      %p165 = scmp.ne.s32.totalorder %s150, %s164
      %p166 = scmp.eq.s32.totalorder %s35, 0
      %p167 = por %p165, %p166
      %s169 = sadd.s32 %s168, 1
      %p172 = scmp.eq.s32.totalorder %s29, 1
      %p173 = scmp.ne.s32.totalorder %s168, %s170
      %p174 = scmp.eq.s32.totalorder %s29, 0
      %p175 = por %p173, %p174
      %p176 = scmp.ne.s32.totalorder %s168, %s170
      %p177 = scmp.eq.s32.totalorder %s34, 1
      %p178 = por %p176, %p177
      %p179 = scmp.ne.s32.totalorder %s170, %s171
      %p180 = scmp.eq.s32.totalorder %s34, 0
      %p181 = por %p179, %p180
      %p182 = scmp.ne.s32.totalorder %s170, %s171
      %p183 = scmp.eq.s32.totalorder %s35, 1
      %p184 = por %p182, %p183
      %p186 = scmp.ne.s32.totalorder %s171, %s185
      %p187 = scmp.eq.s32.totalorder %s35, 0
      %p188 = por %p186, %p187
      %s190 = sadd.s32 %s189, 1
      %p193 = scmp.eq.s32.totalorder %s29, 1
      %p194 = scmp.ne.s32.totalorder %s189, %s191
      %p195 = scmp.eq.s32.totalorder %s29, 0
      %p196 = por %p194, %p195
      %p197 = scmp.ne.s32.totalorder %s189, %s191
      %p198 = scmp.eq.s32.totalorder %s34, 1
      %p199 = por %p197, %p198
      %p200 = scmp.ne.s32.totalorder %s191, %s192
      %p201 = scmp.eq.s32.totalorder %s34, 0
      %p202 = por %p200, %p201
      %p203 = scmp.ne.s32.totalorder %s191, %s192
      %p204 = scmp.eq.s32.totalorder %s35, 1
      %p205 = por %p203, %p204
      %p207 = scmp.ne.s32.totalorder %s192, %s206
      %p208 = scmp.eq.s32.totalorder %s35, 0
      %p209 = por %p207, %p208
      %s211 = sadd.s32 %s210, 1
      %p214 = scmp.eq.s32.totalorder %s29, 1
      %p215 = scmp.ne.s32.totalorder %s210, %s212
      %p216 = scmp.eq.s32.totalorder %s29, 0
      %p217 = por %p215, %p216
      %p218 = scmp.ne.s32.totalorder %s210, %s212
      %p219 = scmp.eq.s32.totalorder %s34, 1
      %p220 = por %p218, %p219
      %p221 = scmp.ne.s32.totalorder %s212, %s213
      %p222 = scmp.eq.s32.totalorder %s34, 0
      %p223 = por %p221, %p222
      %p224 = scmp.ne.s32.totalorder %s212, %s213
      %p225 = scmp.eq.s32.totalorder %s35, 1
      %p226 = por %p224, %p225
      %p228 = scmp.ne.s32.totalorder %s213, %s227
      %p229 = scmp.eq.s32.totalorder %s35, 0
      %p230 = por %p228, %p229
      %s232 = sadd.s32 %s231, 1
      %p235 = scmp.eq.s32.totalorder %s29, 1
      %p236 = scmp.ne.s32.totalorder %s231, %s233
      %p237 = scmp.eq.s32.totalorder %s29, 0
      %p238 = por %p236, %p237
      %p239 = scmp.ne.s32.totalorder %s231, %s233
      %p240 = scmp.eq.s32.totalorder %s34, 1
      %p241 = por %p239, %p240
      %p242 = scmp.ne.s32.totalorder %s233, %s234
      %p243 = scmp.eq.s32.totalorder %s34, 0
      %p244 = por %p242, %p243
      %p245 = scmp.ne.s32.totalorder %s233, %s234
      %p246 = scmp.eq.s32.totalorder %s35, 1
      %p247 = por %p245, %p246
      %p249 = scmp.ne.s32.totalorder %s234, %s248
      %p250 = scmp.eq.s32.totalorder %s35, 0
      %p251 = por %p249, %p250
      %s253 = sadd.s32 %s252, 1
      %p256 = scmp.eq.s32.totalorder %s29, 1
      %p257 = scmp.ne.s32.totalorder %s252, %s254
      %p258 = scmp.eq.s32.totalorder %s29, 0
      %p259 = por %p257, %p258
      %p260 = scmp.ne.s32.totalorder %s252, %s254
      %p261 = scmp.eq.s32.totalorder %s34, 1
      %p262 = por %p260, %p261
      %p263 = scmp.ne.s32.totalorder %s254, %s255
      %p264 = scmp.eq.s32.totalorder %s34, 0
      %p265 = por %p263, %p264
      %p266 = scmp.ne.s32.totalorder %s254, %s255
      %p267 = scmp.eq.s32.totalorder %s35, 1
      %p268 = por %p266, %p267
      %p270 = scmp.ne.s32.totalorder %s255, %s269
      %p271 = scmp.eq.s32.totalorder %s35, 0
      %p272 = por %p270, %p271
      %s274 = sadd.s32 %s273, 1
      %p277 = scmp.eq.s32.totalorder %s29, 1
      %p278 = scmp.ne.s32.totalorder %s273, %s275
      %p279 = scmp.eq.s32.totalorder %s29, 0
      %p280 = por %p278, %p279
      %p281 = scmp.ne.s32.totalorder %s273, %s275
      %p282 = scmp.eq.s32.totalorder %s34, 1
      %p283 = por %p281, %p282
      %p284 = scmp.ne.s32.totalorder %s275, %s276
      %p285 = scmp.eq.s32.totalorder %s34, 0
      %p286 = por %p284, %p285
      %p287 = scmp.ne.s32.totalorder %s275, %s276
      %p288 = scmp.eq.s32.totalorder %s35, 1
      %p289 = por %p287, %p288
      %p291 = scmp.ne.s32.totalorder %s276, %s290
      %p292 = scmp.eq.s32.totalorder %s35, 0
      %p293 = por %p291, %p292
      %s295 = sadd.s32 %s294, 1
      %p298 = scmp.eq.s32.totalorder %s29, 1
      %p299 = scmp.ne.s32.totalorder %s294, %s296
      %p300 = scmp.eq.s32.totalorder %s29, 0
      %p301 = por %p299, %p300
      %p302 = scmp.ne.s32.totalorder %s294, %s296
      %p303 = scmp.eq.s32.totalorder %s34, 1
      %p304 = por %p302, %p303
      %p305 = scmp.ne.s32.totalorder %s296, %s297
      %p306 = scmp.eq.s32.totalorder %s34, 0
      %p307 = por %p305, %p306
      %p308 = scmp.ne.s32.totalorder %s296, %s297
      %p309 = scmp.eq.s32.totalorder %s35, 1
      %p310 = por %p308, %p309
      %p312 = scmp.ne.s32.totalorder %s297, %s311
      %p313 = scmp.eq.s32.totalorder %s35, 0
      %p314 = por %p312, %p313
      %s316 = sadd.s32 %s315, 1
      %p319 = scmp.eq.s32.totalorder %s29, 1
      %p320 = scmp.ne.s32.totalorder %s315, %s317
      %p321 = scmp.eq.s32.totalorder %s29, 0
      %p322 = por %p320, %p321
      %p323 = scmp.ne.s32.totalorder %s315, %s317
      %p324 = scmp.eq.s32.totalorder %s34, 1
      %p325 = por %p323, %p324
      %p326 = scmp.ne.s32.totalorder %s317, %s318
      %p327 = scmp.eq.s32.totalorder %s34, 0
      %p328 = por %p326, %p327
      %p329 = scmp.ne.s32.totalorder %s317, %s318
      %p330 = scmp.eq.s32.totalorder %s35, 1
      %p331 = por %p329, %p330
      %p333 = scmp.ne.s32.totalorder %s318, %s332
      %p334 = scmp.eq.s32.totalorder %s35, 0
      %p335 = por %p333, %p334
      %s337 = sadd.s32 %s336, 1
      %p340 = scmp.eq.s32.totalorder %s29, 1
      %p341 = scmp.ne.s32.totalorder %s336, %s338
      %p342 = scmp.eq.s32.totalorder %s29, 0
      %p343 = por %p341, %p342
      %p344 = scmp.ne.s32.totalorder %s336, %s338
      %p345 = scmp.eq.s32.totalorder %s34, 1
      %p346 = por %p344, %p345
      %p347 = scmp.ne.s32.totalorder %s338, %s339
      %p348 = scmp.eq.s32.totalorder %s34, 0
      %p349 = por %p347, %p348
      %p350 = scmp.ne.s32.totalorder %s338, %s339
      %p351 = scmp.eq.s32.totalorder %s35, 1
      %p352 = por %p350, %p351
      %p354 = scmp.ne.s32.totalorder %s339, %s353
      %p355 = scmp.eq.s32.totalorder %s35, 0
      %p356 = por %p354, %p355
      %s357 = ssub.s32 %s29, %s36
      %p358 = scmp.eq.s32.totalorder %s357, 0
      %s360 = sadd.s32 %s359, 1
      %s361 = scalar_select %p358, %s359, %s360
      %p364 = pneg %p358
      %p365 = scmp.eq.s32.totalorder %s29, 1
      %p366 = por %p364, %p365
      %p367 = scmp.ne.s32.totalorder %s359, %s362
      %p368 = scmp.eq.s32.totalorder %s29, 0
      %p369 = por %p367, %p368
      %p370 = scmp.ne.s32.totalorder %s359, %s362
      %p371 = scmp.eq.s32.totalorder %s34, 1
      %p372 = por %p370, %p371
      %p373 = scmp.ne.s32.totalorder %s362, %s363
      %p374 = scmp.eq.s32.totalorder %s34, 0
      %p375 = por %p373, %p374
      %p376 = scmp.ne.s32.totalorder %s362, %s363
      %p377 = scmp.eq.s32.totalorder %s35, 1
      %p378 = por %p376, %p377
      %p380 = scmp.ne.s32.totalorder %s363, %s379
      %p381 = scmp.eq.s32.totalorder %s35, 0
      %p382 = por %p380, %p381
      %s383 = ssub.s32 %s29, %s36
      %p384 = scmp.eq.s32.totalorder %s383, 0
      %s386 = sadd.s32 %s385, 1
      %s387 = scalar_select %p384, %s385, %s386
      %p390 = pneg %p384
      %p391 = scmp.eq.s32.totalorder %s29, 1
      %p392 = por %p390, %p391
      %p393 = scmp.ne.s32.totalorder %s385, %s388
      %p394 = scmp.eq.s32.totalorder %s29, 0
      %p395 = por %p393, %p394
      %p396 = scmp.ne.s32.totalorder %s385, %s388
      %p397 = scmp.eq.s32.totalorder %s34, 1
      %p398 = por %p396, %p397
      %p399 = scmp.ne.s32.totalorder %s388, %s389
      %p400 = scmp.eq.s32.totalorder %s34, 0
      %p401 = por %p399, %p400
      %p402 = scmp.ne.s32.totalorder %s388, %s389
      %p403 = scmp.eq.s32.totalorder %s35, 1
      %p404 = por %p402, %p403
      %p406 = scmp.ne.s32.totalorder %s389, %s405
      %p407 = scmp.eq.s32.totalorder %s35, 0
      %p408 = por %p406, %p407
      %s409 = ssub.s32 %s29, %s36
      %p410 = scmp.eq.s32.totalorder %s409, 0
      %s412 = sadd.s32 %s411, 1
      %s413 = scalar_select %p410, %s411, %s412
      %p416 = pneg %p410
      %p417 = scmp.eq.s32.totalorder %s29, 1
      %p418 = por %p416, %p417
      %p419 = scmp.ne.s32.totalorder %s411, %s414
      %p420 = scmp.eq.s32.totalorder %s29, 0
      %p421 = por %p419, %p420
      %p422 = scmp.ne.s32.totalorder %s411, %s414
      %p423 = scmp.eq.s32.totalorder %s34, 1
      %p424 = por %p422, %p423
      %p425 = scmp.ne.s32.totalorder %s414, %s415
      %p426 = scmp.eq.s32.totalorder %s34, 0
      %p427 = por %p425, %p426
      %p428 = scmp.ne.s32.totalorder %s414, %s415
      %p429 = scmp.eq.s32.totalorder %s35, 1
      %p430 = por %p428, %p429
      %p432 = scmp.ne.s32.totalorder %s415, %s431
      %p433 = scmp.eq.s32.totalorder %s35, 0
      %p434 = por %p432, %p433
      %s435 = ssub.s32 %s29, %s36
      %p436 = scmp.eq.s32.totalorder %s435, 0
      %s438 = sadd.s32 %s437, 1
      %s439 = scalar_select %p436, %s437, %s438
      %p442 = pneg %p436
      %p443 = scmp.eq.s32.totalorder %s29, 1
      %p444 = por %p442, %p443
      %p445 = scmp.ne.s32.totalorder %s437, %s440
      %p446 = scmp.eq.s32.totalorder %s29, 0
      %p447 = por %p445, %p446
      %p448 = scmp.ne.s32.totalorder %s437, %s440
      %p449 = scmp.eq.s32.totalorder %s34, 1
      %p450 = por %p448, %p449
      %p451 = scmp.ne.s32.totalorder %s440, %s441
      %p452 = scmp.eq.s32.totalorder %s34, 0
      %p453 = por %p451, %p452
      %p454 = scmp.ne.s32.totalorder %s440, %s441
      %p455 = scmp.eq.s32.totalorder %s35, 1
      %p456 = por %p454, %p455
      %p458 = scmp.ne.s32.totalorder %s441, %s457
      %p459 = scmp.eq.s32.totalorder %s35, 0
      %p460 = por %p458, %p459
      %s461 = ssub.s32 %s29, %s36
      %p462 = scmp.eq.s32.totalorder %s461, 0
      %s464 = sadd.s32 %s463, 1
      %s465 = scalar_select %p462, %s463, %s464
      %p468 = pneg %p462
      %p469 = scmp.eq.s32.totalorder %s29, 1
      %p470 = por %p468, %p469
      %p471 = scmp.ne.s32.totalorder %s463, %s466
      %p472 = scmp.eq.s32.totalorder %s29, 0
      %p473 = por %p471, %p472
      %p474 = scmp.ne.s32.totalorder %s463, %s466
      %p475 = scmp.eq.s32.totalorder %s34, 1
      %p476 = por %p474, %p475
      %p477 = scmp.ne.s32.totalorder %s466, %s467
      %p478 = scmp.eq.s32.totalorder %s34, 0
      %p479 = por %p477, %p478
      %p480 = scmp.ne.s32.totalorder %s466, %s467
      %p481 = scmp.eq.s32.totalorder %s35, 1
      %p482 = por %p480, %p481
      %p484 = scmp.ne.s32.totalorder %s467, %s483
      %p485 = scmp.eq.s32.totalorder %s35, 0
      %p486 = por %p484, %p485
      %p487 = scmp.le.s32.totalorder 1, %s29
      %p488 = scmp.lt.s32.totalorder %s29, 3
      %p489 = pnand %p487, %p488
      %p490 = pneg %p489
      // Predicated region
      $region9: #{_forward_impl.1} parent=5 // pred_check
        _
      $region10: #{_forward_impl.1} parent=5 // pred_check_branch
        %492 = sbr.rel (%p489) target = $region12
      $region11: #{_forward_impl.1} parent=5 // pred_region
        %s493 = ssub.s32 %s29, 1
        // Predicated region
        $region13: #{_forward_impl.1} parent=11 // pred_check
          %p494 = pneg %p76
        $region14: #{_forward_impl.1} parent=11 // pred_check_branch
          %496 = sbr.rel (%p494) target = $region16
        $region15: #{_forward_impl.1} parent=11 // pred_region
          _
        $region16: #{_forward_impl.1} parent=11 // pred_fallthru
          _
        // Predicated region
        $region17: #{_forward_impl.1} parent=11 // pred_check
          %p497 = pneg %p97
        $region18: #{_forward_impl.1} parent=11 // pred_check_branch
          %499 = sbr.rel (%p497) target = $region20
        $region19: #{_forward_impl.1} parent=11 // pred_region
          _
        $region20: #{_forward_impl.1} parent=11 // pred_fallthru
          _
        // Predicated region
        $region21: #{_forward_impl.1} parent=11 // pred_check
          %p500 = pneg %p118
        $region22: #{_forward_impl.1} parent=11 // pred_check_branch
          %502 = sbr.rel (%p500) target = $region24
        $region23: #{_forward_impl.1} parent=11 // pred_region
          _
        $region24: #{_forward_impl.1} parent=11 // pred_fallthru
          _
        // Predicated region
        $region25: #{_forward_impl.1} parent=11 // pred_check
          %p503 = pneg %p139
        $region26: #{_forward_impl.1} parent=11 // pred_check_branch
          %505 = sbr.rel (%p503) target = $region28
        $region27: #{_forward_impl.1} parent=11 // pred_region
          _
        $region28: #{_forward_impl.1} parent=11 // pred_fallthru
          _
        // Predicated region
        $region29: #{_forward_impl.1} parent=11 // pred_check
          %p506 = pneg %p160
        $region30: #{_forward_impl.1} parent=11 // pred_check_branch
          %508 = sbr.rel (%p506) target = $region32
        $region31: #{_forward_impl.1} parent=11 // pred_region
          _
        $region32: #{_forward_impl.1} parent=11 // pred_fallthru
          _
        // Predicated region
        $region33: #{_forward_impl.1} parent=11 // pred_check
          %p509 = pneg %p181
        $region34: #{_forward_impl.1} parent=11 // pred_check_branch
          %511 = sbr.rel (%p509) target = $region36
        $region35: #{_forward_impl.1} parent=11 // pred_region
          _
        $region36: #{_forward_impl.1} parent=11 // pred_fallthru
          _
        // Predicated region
        $region37: #{_forward_impl.1} parent=11 // pred_check
          %p512 = pneg %p202
        $region38: #{_forward_impl.1} parent=11 // pred_check_branch
          %514 = sbr.rel (%p512) target = $region40
        $region39: #{_forward_impl.1} parent=11 // pred_region
          _
        $region40: #{_forward_impl.1} parent=11 // pred_fallthru
          _
        // Predicated region
        $region41: #{_forward_impl.1} parent=11 // pred_check
          %p515 = pneg %p223
        $region42: #{_forward_impl.1} parent=11 // pred_check_branch
          %517 = sbr.rel (%p515) target = $region44
        $region43: #{_forward_impl.1} parent=11 // pred_region
          _
        $region44: #{_forward_impl.1} parent=11 // pred_fallthru
          _
        // Predicated region
        $region45: #{_forward_impl.1} parent=11 // pred_check
          %p518 = pneg %p244
        $region46: #{_forward_impl.1} parent=11 // pred_check_branch
          %520 = sbr.rel (%p518) target = $region48
        $region47: #{_forward_impl.1} parent=11 // pred_region
          _
        $region48: #{_forward_impl.1} parent=11 // pred_fallthru
          _
        // Predicated region
        $region49: #{_forward_impl.1} parent=11 // pred_check
          %p521 = pneg %p265
        $region50: #{_forward_impl.1} parent=11 // pred_check_branch
          %523 = sbr.rel (%p521) target = $region52
        $region51: #{_forward_impl.1} parent=11 // pred_region
          _
        $region52: #{_forward_impl.1} parent=11 // pred_fallthru
          _
        // Predicated region
        $region53: #{_forward_impl.1} parent=11 // pred_check
          %p524 = pneg %p286
        $region54: #{_forward_impl.1} parent=11 // pred_check_branch
          %526 = sbr.rel (%p524) target = $region56
        $region55: #{_forward_impl.1} parent=11 // pred_region
          _
        $region56: #{_forward_impl.1} parent=11 // pred_fallthru
          _
        // Predicated region
        $region57: #{_forward_impl.1} parent=11 // pred_check
          %p527 = pneg %p307
        $region58: #{_forward_impl.1} parent=11 // pred_check_branch
          %529 = sbr.rel (%p527) target = $region60
        $region59: #{_forward_impl.1} parent=11 // pred_region
          _
        $region60: #{_forward_impl.1} parent=11 // pred_fallthru
          _
        // Predicated region
        $region61: #{_forward_impl.1} parent=11 // pred_check
          %p530 = pneg %p328
        $region62: #{_forward_impl.1} parent=11 // pred_check_branch
          %532 = sbr.rel (%p530) target = $region64
        $region63: #{_forward_impl.1} parent=11 // pred_region
          _
        $region64: #{_forward_impl.1} parent=11 // pred_fallthru
          _
        // Predicated region
        $region65: #{_forward_impl.1} parent=11 // pred_check
          %p533 = pneg %p349
        $region66: #{_forward_impl.1} parent=11 // pred_check_branch
          %535 = sbr.rel (%p533) target = $region68
        $region67: #{_forward_impl.1} parent=11 // pred_region
          _
        $region68: #{_forward_impl.1} parent=11 // pred_fallthru
          _
      $region12: #{_forward_impl.1} parent=5 // pred_fallthru
        _
      %p536 = scmp.lt.s32.totalorder %s29, 2
      // Predicated region
      $region69: #{_forward_impl.1} parent=5 // pred_check
        %p537 = pneg %p536
      $region70: #{_forward_impl.1} parent=5 // pred_check_branch
        %539 = sbr.rel (%p537) target = $region72
      $region71: #{_forward_impl.1} parent=5 // pred_region
        // Predicated region
        $region73: #{_forward_impl.1} parent=71 // pred_check
          %p540 = pneg %p49
        $region74: #{_forward_impl.1} parent=71 // pred_check_branch
          %542 = sbr.rel (%p540) target = $region76
        $region75: #{_forward_impl.1} parent=71 // pred_region
          %s543 = smul.u32 8, %s29
          %p544 = scmp.lt.s32.totalorder %s543, 15
          %s545 = scalar_select %p544, %s543, 15
          %s546 = smul.addr %s545, 4
          %s547 = smul.addr %s546, 8
          %s548 = scalar_lea.vmem %s0, %s547
          %s549 = smul.u32 8, %s29
        $region76: #{_forward_impl.1} parent=71 // pred_fallthru
          _
      $region72: #{_forward_impl.1} parent=5 // pred_fallthru
        _
      %p550 = scmp.le.s32.totalorder 1, %s29
      %p551 = scmp.lt.s32.totalorder %s29, 3
      %p552 = pnand %p550, %p551
      %p553 = pneg %p552
      // Predicated region
      $region77: #{_forward_impl.1} parent=5 // pred_check
        _
      $region78: #{_forward_impl.1} parent=5 // pred_check_branch
        %555 = sbr.rel (%p552) target = $region80
      $region79: #{_forward_impl.1} parent=5 // pred_region
        %s556 = ssub.s32 %s29, 1
        %s557 = smul.u32 8, %s34
        %p558 = scmp.lt.s32.totalorder %s557, 15
        %s559 = scalar_select %p558, %s557, 15
        %s560 = smul.addr %s559, 4
        %s561 = smul.addr %s560, 8
        %s562 = scalar_lea.vmem %s0, %s561
        %p563 = pneg %p55
        %p564 = pneg %p52
        %p565 = pneg %p76
        %p566 = pneg %p73
        %p567 = pneg %p97
        %p568 = pneg %p94
        %p569 = pneg %p118
        %p570 = pneg %p115
        %p571 = pneg %p139
        %p572 = pneg %p136
        %p573 = pneg %p160
        %p574 = pneg %p157
        %p575 = pneg %p181
        %p576 = pneg %p178
        %p577 = pneg %p202
        %p578 = pneg %p199
        %p579 = pneg %p223
        %p580 = pneg %p220
        %p581 = pneg %p244
        %p582 = pneg %p241
        %p583 = pneg %p265
        %p584 = pneg %p262
        %p585 = pneg %p286
        %p586 = pneg %p283
        %p587 = pneg %p307
        %p588 = pneg %p304
        %p589 = pneg %p328
        %p590 = pneg %p325
        %p591 = pneg %p349
        %p592 = pneg %p346
        %p593 = pneg %p375
        %p594 = pneg %p372
        %s595 = sand.u32 %s362, 1
        %s596 = scalar_lea.sflag [#allocation3], %s595
        %s597 = sand.u32 %s362, 1
        %s598 = smul.addr %s597, 8
        %s599 = scalar_lea.vmem [#allocation2], %s598
        %p600 = pneg %p401
        %p601 = pneg %p398
        %s602 = smul.u32 8, %s34
        %p603 = scmp.lt.s32.totalorder %s602, 15
        %s604 = scalar_select %p603, %s602, 15
        %s605 = smul.addr %s604, 4
        %s606 = smul.addr %s605, 2
        %s607 = scalar_lea.vmem %s16, %s606
        %p608 = pneg %p427
        %p609 = pneg %p424
        %s610 = smul.u32 14, %s34
        %p611 = scmp.lt.s32.totalorder %s610, 27
        %s612 = scalar_select %p611, %s610, 27
        %s613 = smul.addr %s612, 2
        %s614 = scalar_lea.vmem %s17, %s613
        %p615 = pneg %p453
        %p616 = pneg %p450
        %s617 = smul.u32 5, %s34
        %p618 = scmp.lt.s32.totalorder %s617, 9
        %s619 = scalar_select %p618, %s617, 9
        %s620 = smul.addr %s619, 2
        %s621 = scalar_lea.vmem %s18, %s620
        %p622 = pneg %p479
        %p623 = pneg %p476
        %p624 = scmp.lt.s32.totalorder %s34, 1
        %s625 = scalar_select %p624, %s34, 1
        %s626 = smul.addr %s625, 2
        %s627 = scalar_lea.vmem %s19, %s626
        %s628 = smul.u32 8, %s34
        %p629 = scmp.lt.s32.totalorder %s628, 15
        %s630 = scalar_select %p629, %s628, 15
        %s631 = smul.addr %s630, 4
        %s632 = smul.addr %s631, 8
        %s633 = scalar_lea.vmem %s0, %s632
        %s634 = smul.u32 8, %s34
        %s635 = smul.u32 8, %s34
        %p636 = scmp.lt.s32.totalorder %s635, 15
        %s637 = scalar_select %p636, %s635, 15
        %s638 = smul.addr %s637, 4
        %s639 = smul.addr %s638, 2
        %s640 = scalar_lea.vmem %s16, %s639
        %s641 = smul.u32 8, %s34
        %s642 = smul.u32 14, %s34
        %p643 = scmp.lt.s32.totalorder %s642, 27
        %s644 = scalar_select %p643, %s642, 27
        %s645 = smul.addr %s644, 2
        %s646 = scalar_lea.vmem %s17, %s645
        %s647 = smul.u32 14, %s34
        %s648 = smul.u32 5, %s34
        %p649 = scmp.lt.s32.totalorder %s648, 9
        %s650 = scalar_select %p649, %s648, 9
        %s651 = smul.addr %s650, 2
        %s652 = scalar_lea.vmem %s18, %s651
        %s653 = smul.u32 5, %s34
        %p654 = scmp.lt.s32.totalorder %s34, 1
        %s655 = scalar_select %p654, %s34, 1
        %s656 = smul.addr %s655, 2
        %s657 = scalar_lea.vmem %s19, %s656
        %v660 = vld [vmem:[%s633] sm:$0xff]
        %v661 = vld [vmem:[%s633 + $0x8] sm:$0xff]
        %v662 = vld [vmem:[%s633 + $0x10] sm:$0xff]
        %v663 = vld [vmem:[%s633 + $0x18] sm:$0xff]
        %v664 = vld [vmem:[%s633 + $0x20] sm:$0xff]
        %v665 = vld [vmem:[%s633 + $0x28] sm:$0xff]
        %v666 = vld [vmem:[%s633 + $0x30] sm:$0xff]
        %v667 = vld [vmem:[%s633 + $0x38] sm:$0xff]
        %v668 = vld [vmem:[%s633 + $0x40] sm:$0xff]
        %v669 = vld [vmem:[%s633 + $0x48] sm:$0xff]
        %v670 = vld [vmem:[%s633 + $0x50] sm:$0xff]
        %v671 = vld [vmem:[%s633 + $0x58] sm:$0xff]
        %v672 = vld [vmem:[%s633 + $0x60] sm:$0xff]
        %v673 = vld [vmem:[%s633 + $0x68] sm:$0xff]
        %v674 = vld [vmem:[%s633 + $0x70] sm:$0xff]
        %v675 = vld [vmem:[%s633 + $0x78] sm:$0xff]
        %v676 = vld [vmem:[%s633 + $0x80] sm:$0xff]
        %v677 = vld [vmem:[%s633 + $0x88] sm:$0xff]
        %v678 = vld [vmem:[%s633 + $0x90] sm:$0xff]
        %v679 = vld [vmem:[%s633 + $0x98] sm:$0xff]
        %v680 = vld [vmem:[%s633 + $0xa0] sm:$0xff]
        %v681 = vld [vmem:[%s633 + $0xa8] sm:$0xff]
        %v682 = vld [vmem:[%s633 + $0xb0] sm:$0xff]
        %v683 = vld [vmem:[%s633 + $0xb8] sm:$0xff]
        %v684 = vld [vmem:[%s633 + $0xc0] sm:$0xff]
        %v685 = vld [vmem:[%s633 + $0xc8] sm:$0xff]
        %v686 = vld [vmem:[%s633 + $0xd0] sm:$0xff]
        %v687 = vld [vmem:[%s633 + $0xd8] sm:$0xff]
        %v688 = vld [vmem:[%s633 + $0xe0] sm:$0xff]
        %v689 = vld [vmem:[%s633 + $0xe8] sm:$0xff]
        %v690 = vld [vmem:[%s633 + $0xf0] sm:$0xff]
        %v691 = vld [vmem:[%s633 + $0xf8] sm:$0xff]
        %vm692 = vcmp.eq.f32.partialorder %v660, 0.0
        %vm693 = vcmp.eq.f32.partialorder %v661, 0.0
        %vm694 = vcmp.eq.f32.partialorder %v662, 0.0
        %vm695 = vcmp.eq.f32.partialorder %v663, 0.0
        %vm696 = vcmp.eq.f32.partialorder %v664, 0.0
        %vm697 = vcmp.eq.f32.partialorder %v665, 0.0
        %vm698 = vcmp.eq.f32.partialorder %v666, 0.0
        %vm699 = vcmp.eq.f32.partialorder %v667, 0.0
        %vm700 = vcmp.eq.f32.partialorder %v668, 0.0
        %vm701 = vcmp.eq.f32.partialorder %v669, 0.0
        %vm702 = vcmp.eq.f32.partialorder %v670, 0.0
        %vm703 = vcmp.eq.f32.partialorder %v671, 0.0
        %vm704 = vcmp.eq.f32.partialorder %v672, 0.0
        %vm705 = vcmp.eq.f32.partialorder %v673, 0.0
        %vm706 = vcmp.eq.f32.partialorder %v674, 0.0
        %vm707 = vcmp.eq.f32.partialorder %v675, 0.0
        %vm708 = vcmp.eq.f32.partialorder %v676, 0.0
        %vm709 = vcmp.eq.f32.partialorder %v677, 0.0
        %vm710 = vcmp.eq.f32.partialorder %v678, 0.0
        %vm711 = vcmp.eq.f32.partialorder %v679, 0.0
        %vm712 = vcmp.eq.f32.partialorder %v680, 0.0
        %vm713 = vcmp.eq.f32.partialorder %v681, 0.0
        %vm714 = vcmp.eq.f32.partialorder %v682, 0.0
        %vm715 = vcmp.eq.f32.partialorder %v683, 0.0
        %vm716 = vcmp.eq.f32.partialorder %v684, 0.0
        %vm717 = vcmp.eq.f32.partialorder %v685, 0.0
        %vm718 = vcmp.eq.f32.partialorder %v686, 0.0
        %vm719 = vcmp.eq.f32.partialorder %v687, 0.0
        %vm720 = vcmp.eq.f32.partialorder %v688, 0.0
        %vm721 = vcmp.eq.f32.partialorder %v689, 0.0
        %vm722 = vcmp.eq.f32.partialorder %v690, 0.0
        %vm723 = vcmp.eq.f32.partialorder %v691, 0.0
        %vm724 = vmpackc.low %vm693, %vm692
        %vm725 = vmpackc.low %vm695, %vm694
        %vm726 = vmpackc.even %vm725, %vm724
        %vm727 = vmpackc.low %vm697, %vm696
        %vm728 = vmpackc.low %vm699, %vm698
        %vm729 = vmpackc.even %vm728, %vm727
        %vm730 = vmpackc.low %vm701, %vm700
        %vm731 = vmpackc.low %vm703, %vm702
        %vm732 = vmpackc.even %vm731, %vm730
        %vm733 = vmpackc.low %vm705, %vm704
        %vm734 = vmpackc.low %vm707, %vm706
        %vm735 = vmpackc.even %vm734, %vm733
        %vm736 = vmpackc.low %vm709, %vm708
        %vm737 = vmpackc.low %vm711, %vm710
        %vm738 = vmpackc.even %vm737, %vm736
        %vm739 = vmpackc.low %vm713, %vm712
        %vm740 = vmpackc.low %vm715, %vm714
        %vm741 = vmpackc.even %vm740, %vm739
        %vm742 = vmpackc.low %vm717, %vm716
        %vm743 = vmpackc.low %vm719, %vm718
        %vm744 = vmpackc.even %vm743, %vm742
        %vm745 = vmpackc.low %vm721, %vm720
        %vm746 = vmpackc.low %vm723, %vm722
        %vm747 = vmpackc.even %vm746, %vm745
        %v748 = vsel %vm726, 16843009, 0
        %v749 = vsel %vm729, 16843009, 0
        %v750 = vsel %vm732, 16843009, 0
        %v751 = vsel %vm735, 16843009, 0
        %v752 = vsel %vm738, 16843009, 0
        %v753 = vsel %vm741, 16843009, 0
        %v754 = vsel %vm744, 16843009, 0
        %v755 = vsel %vm747, 16843009, 0
        %v756 = vunpack.c.0.s8 %v748
        %v757 = vunpack.c.1.s8 %v748
        %v758 = vunpack.c.2.s8 %v748
        %v759 = vunpack.c.3.s8 %v748
        %v760 = vunpack.c.0.s8 %v749
        %v761 = vunpack.c.1.s8 %v749
        %v762 = vunpack.c.2.s8 %v749
        %v763 = vunpack.c.3.s8 %v749
        %v764 = vunpack.c.0.s8 %v750
        %v765 = vunpack.c.1.s8 %v750
        %v766 = vunpack.c.2.s8 %v750
        %v767 = vunpack.c.3.s8 %v750
        %v768 = vunpack.c.0.s8 %v751
        %v769 = vunpack.c.1.s8 %v751
        %v770 = vunpack.c.2.s8 %v751
        %v771 = vunpack.c.3.s8 %v751
        %v772 = vunpack.c.0.s8 %v752
        %v773 = vunpack.c.1.s8 %v752
        %v774 = vunpack.c.2.s8 %v752
        %v775 = vunpack.c.3.s8 %v752
        %v776 = vunpack.c.0.s8 %v753
        %v777 = vunpack.c.1.s8 %v753
        %v778 = vunpack.c.2.s8 %v753
        %v779 = vunpack.c.3.s8 %v753
        %v780 = vunpack.c.0.s8 %v754
        %v781 = vunpack.c.1.s8 %v754
        %v782 = vunpack.c.2.s8 %v754
        %v783 = vunpack.c.3.s8 %v754
        %v784 = vunpack.c.0.s8 %v755
        %v785 = vunpack.c.1.s8 %v755
        %v786 = vunpack.c.2.s8 %v755
        %v787 = vunpack.c.3.s8 %v755
        %v788 = vpack.c.b16 %v756, %v756
        %v789 = vpack.c.b8 %v788, %v788
        %v790 = vpack.c.b16 %v757, %v757
        %v791 = vpack.c.b8 %v790, %v790
        %v792 = vpack.c.b16 %v758, %v758
        %v793 = vpack.c.b8 %v792, %v792
        %v794 = vpack.c.b16 %v759, %v759
        %v795 = vpack.c.b8 %v794, %v794
        %v796 = vpack.c.b16 %v760, %v760
        %v797 = vpack.c.b8 %v796, %v796
        %v798 = vpack.c.b16 %v761, %v761
        %v799 = vpack.c.b8 %v798, %v798
        %v800 = vpack.c.b16 %v762, %v762
        %v801 = vpack.c.b8 %v800, %v800
        %v802 = vpack.c.b16 %v763, %v763
        %v803 = vpack.c.b8 %v802, %v802
        %v804 = vpack.c.b16 %v764, %v764
        %v805 = vpack.c.b8 %v804, %v804
        %v806 = vpack.c.b16 %v765, %v765
        %v807 = vpack.c.b8 %v806, %v806
        %v808 = vpack.c.b16 %v766, %v766
        %v809 = vpack.c.b8 %v808, %v808
        %v810 = vpack.c.b16 %v767, %v767
        %v811 = vpack.c.b8 %v810, %v810
        %v812 = vpack.c.b16 %v768, %v768
        %v813 = vpack.c.b8 %v812, %v812
        %v814 = vpack.c.b16 %v769, %v769
        %v815 = vpack.c.b8 %v814, %v814
        %v816 = vpack.c.b16 %v770, %v770
        %v817 = vpack.c.b8 %v816, %v816
        %v818 = vpack.c.b16 %v771, %v771
        %v819 = vpack.c.b8 %v818, %v818
        %v820 = vpack.c.b16 %v772, %v772
        %v821 = vpack.c.b8 %v820, %v820
        %v822 = vpack.c.b16 %v773, %v773
        %v823 = vpack.c.b8 %v822, %v822
        %v824 = vpack.c.b16 %v774, %v774
        %v825 = vpack.c.b8 %v824, %v824
        %v826 = vpack.c.b16 %v775, %v775
        %v827 = vpack.c.b8 %v826, %v826
        %v828 = vpack.c.b16 %v776, %v776
        %v829 = vpack.c.b8 %v828, %v828
        %v830 = vpack.c.b16 %v777, %v777
        %v831 = vpack.c.b8 %v830, %v830
        %v832 = vpack.c.b16 %v778, %v778
        %v833 = vpack.c.b8 %v832, %v832
        %v834 = vpack.c.b16 %v779, %v779
        %v835 = vpack.c.b8 %v834, %v834
        %v836 = vpack.c.b16 %v780, %v780
        %v837 = vpack.c.b8 %v836, %v836
        %v838 = vpack.c.b16 %v781, %v781
        %v839 = vpack.c.b8 %v838, %v838
        %v840 = vpack.c.b16 %v782, %v782
        %v841 = vpack.c.b8 %v840, %v840
        %v842 = vpack.c.b16 %v783, %v783
        %v843 = vpack.c.b8 %v842, %v842
        %v844 = vpack.c.b16 %v784, %v784
        %v845 = vpack.c.b8 %v844, %v844
        %v846 = vpack.c.b16 %v785, %v785
        %v847 = vpack.c.b8 %v846, %v846
        %v848 = vpack.c.b16 %v786, %v786
        %v849 = vpack.c.b8 %v848, %v848
        %v850 = vpack.c.b16 %v787, %v787
        %v851 = vpack.c.b8 %v850, %v850
        %vm852 = vcmask 254976
        %853 = vst.msk [vmem:[%s640] sm:$0x3] %vm852, %v789
        %854 = vst.msk [vmem:[%s640 + $0x2] sm:$0x3] %vm852, %v791
        %855 = vst.msk [vmem:[%s640 + $0x4] sm:$0x3] %vm852, %v793
        %856 = vst.msk [vmem:[%s640 + $0x6] sm:$0x3] %vm852, %v795
        %857 = vst.msk [vmem:[%s640 + $0x8] sm:$0x3] %vm852, %v797
        %858 = vst.msk [vmem:[%s640 + $0xa] sm:$0x3] %vm852, %v799
        %859 = vst.msk [vmem:[%s640 + $0xc] sm:$0x3] %vm852, %v801
        %860 = vst.msk [vmem:[%s640 + $0xe] sm:$0x3] %vm852, %v803
        %861 = vst.msk [vmem:[%s640 + $0x10] sm:$0x3] %vm852, %v805
        %862 = vst.msk [vmem:[%s640 + $0x12] sm:$0x3] %vm852, %v807
        %863 = vst.msk [vmem:[%s640 + $0x14] sm:$0x3] %vm852, %v809
        %864 = vst.msk [vmem:[%s640 + $0x16] sm:$0x3] %vm852, %v811
        %865 = vst.msk [vmem:[%s640 + $0x18] sm:$0x3] %vm852, %v813
        %866 = vst.msk [vmem:[%s640 + $0x1a] sm:$0x3] %vm852, %v815
        %867 = vst.msk [vmem:[%s640 + $0x1c] sm:$0x3] %vm852, %v817
        %868 = vst.msk [vmem:[%s640 + $0x1e] sm:$0x3] %vm852, %v819
        %869 = vst.msk [vmem:[%s640 + $0x20] sm:$0x3] %vm852, %v821
        %870 = vst.msk [vmem:[%s640 + $0x22] sm:$0x3] %vm852, %v823
        %871 = vst.msk [vmem:[%s640 + $0x24] sm:$0x3] %vm852, %v825
        %872 = vst.msk [vmem:[%s640 + $0x26] sm:$0x3] %vm852, %v827
        %873 = vst.msk [vmem:[%s640 + $0x28] sm:$0x3] %vm852, %v829
        %874 = vst.msk [vmem:[%s640 + $0x2a] sm:$0x3] %vm852, %v831
        %875 = vst.msk [vmem:[%s640 + $0x2c] sm:$0x3] %vm852, %v833
        %876 = vst.msk [vmem:[%s640 + $0x2e] sm:$0x3] %vm852, %v835
        %877 = vst.msk [vmem:[%s640 + $0x30] sm:$0x3] %vm852, %v837
        %878 = vst.msk [vmem:[%s640 + $0x32] sm:$0x3] %vm852, %v839
        %879 = vst.msk [vmem:[%s640 + $0x34] sm:$0x3] %vm852, %v841
        %880 = vst.msk [vmem:[%s640 + $0x36] sm:$0x3] %vm852, %v843
        %881 = vst.msk [vmem:[%s640 + $0x38] sm:$0x3] %vm852, %v845
        %882 = vst.msk [vmem:[%s640 + $0x3a] sm:$0x3] %vm852, %v847
        %883 = vst.msk [vmem:[%s640 + $0x3c] sm:$0x3] %vm852, %v849
        %884 = vst.msk [vmem:[%s640 + $0x3e] sm:$0x3] %vm852, %v851
        %vm889 = vcmask 1046528
        %v890 = vrot.slane %v660, 1
        %v891 = vrot.slane %v661, 1
        %v892 = vsel %vm889, %v890, %v891
        %v893 = vrot.slane %v662, 1
        %v894 = vsel %vm889, %v891, %v893
        %v895 = vrot.slane %v663, 1
        %v896 = vsel %vm889, %v893, %v895
        %897 = vrot.lane.b32.xlu0 %v892, 32
        %v898 = vpop.permute.xlu0 %897
        %899 = vrot.lane.b32.xlu0 %v894, 32
        %v900 = vpop.permute.xlu0 %899
        %901 = vrot.lane.b32.xlu0 %v896, 32
        %v902 = vpop.permute.xlu0 %901
        %903 = vrot.lane.b32.xlu0 %v895, 32
        %v904 = vpop.permute.xlu0 %903
        %vm909 = vcmask 1045504
        %v910 = vrot.slane %v660, 2
        %v911 = vrot.slane %v661, 2
        %v912 = vsel %vm909, %v910, %v911
        %v913 = vrot.slane %v662, 2
        %v914 = vsel %vm909, %v911, %v913
        %v915 = vrot.slane %v663, 2
        %v916 = vsel %vm909, %v913, %v915
        %917 = vrot.lane.b32.xlu0 %v912, 64
        %v918 = vpop.permute.xlu0 %917
        %919 = vrot.lane.b32.xlu0 %v914, 64
        %v920 = vpop.permute.xlu0 %919
        %921 = vrot.lane.b32.xlu0 %v916, 64
        %v922 = vpop.permute.xlu0 %921
        %923 = vrot.lane.b32.xlu0 %v915, 64
        %v924 = vpop.permute.xlu0 %923
        %vm929 = vcmask 1044480
        %v930 = vrot.slane %v660, 3
        %v931 = vrot.slane %v661, 3
        %v932 = vsel %vm929, %v930, %v931
        %v933 = vrot.slane %v662, 3
        %v934 = vsel %vm929, %v931, %v933
        %v935 = vrot.slane %v663, 3
        %v936 = vsel %vm929, %v933, %v935
        %937 = vrot.lane.b32.xlu0 %v932, 96
        %v938 = vpop.permute.xlu0 %937
        %939 = vrot.lane.b32.xlu0 %v934, 96
        %v940 = vpop.permute.xlu0 %939
        %941 = vrot.lane.b32.xlu0 %v936, 96
        %v942 = vpop.permute.xlu0 %941
        %943 = vrot.lane.b32.xlu0 %v935, 96
        %v944 = vpop.permute.xlu0 %943
        %vm949 = vcmask 1043456
        %v950 = vrot.slane %v660, 4
        %v951 = vrot.slane %v661, 4
        %v952 = vsel %vm949, %v950, %v951
        %v953 = vrot.slane %v662, 4
        %v954 = vsel %vm949, %v951, %v953
        %v955 = vrot.slane %v663, 4
        %v956 = vsel %vm949, %v953, %v955
        %vm958 = vcmask 261120
        %v959 = vsel %vm958, %v660, %v898
        %v960 = vsel %vm958, %v661, %v900
        %v961 = vsel %vm958, %v662, %v902
        %v962 = vsel %vm958, %v663, %v904
        %vm963 = vcmask 523264
        %v964 = vsel %vm963, %v959, %v918
        %v965 = vsel %vm963, %v960, %v920
        %v966 = vsel %vm963, %v961, %v922
        %v967 = vsel %vm963, %v962, %v924
        %vm968 = vcmask 785408
        %v969 = vsel %vm968, %v964, %v938
        %v970 = vsel %vm968, %v965, %v940
        %v971 = vsel %vm968, %v966, %v942
        %v972 = vsel %vm968, %v967, %v944
        %v977 = vrot.slane %v664, 1
        %v978 = vrot.slane %v665, 1
        %v979 = vsel %vm889, %v977, %v978
        %v980 = vrot.slane %v666, 1
        %v981 = vsel %vm889, %v978, %v980
        %v982 = vrot.slane %v667, 1
        %v983 = vsel %vm889, %v980, %v982
        %984 = vrot.lane.b32.xlu0 %v979, 32
        %v985 = vpop.permute.xlu0 %984
        %986 = vrot.lane.b32.xlu0 %v981, 32
        %v987 = vpop.permute.xlu0 %986
        %988 = vrot.lane.b32.xlu0 %v983, 32
        %v989 = vpop.permute.xlu0 %988
        %990 = vrot.lane.b32.xlu0 %v982, 32
        %v991 = vpop.permute.xlu0 %990
        %v996 = vrot.slane %v664, 2
        %v997 = vrot.slane %v665, 2
        %v998 = vsel %vm909, %v996, %v997
        %v999 = vrot.slane %v666, 2
        %v1000 = vsel %vm909, %v997, %v999
        %v1001 = vrot.slane %v667, 2
        %v1002 = vsel %vm909, %v999, %v1001
        %1003 = vrot.lane.b32.xlu0 %v998, 64
        %v1004 = vpop.permute.xlu0 %1003
        %1005 = vrot.lane.b32.xlu0 %v1000, 64
        %v1006 = vpop.permute.xlu0 %1005
        %1007 = vrot.lane.b32.xlu0 %v1002, 64
        %v1008 = vpop.permute.xlu0 %1007
        %1009 = vrot.lane.b32.xlu0 %v1001, 64
        %v1010 = vpop.permute.xlu0 %1009
        %v1015 = vrot.slane %v664, 3
        %v1016 = vrot.slane %v665, 3
        %v1017 = vsel %vm929, %v1015, %v1016
        %v1018 = vrot.slane %v666, 3
        %v1019 = vsel %vm929, %v1016, %v1018
        %v1020 = vrot.slane %v667, 3
        %v1021 = vsel %vm929, %v1018, %v1020
        %1022 = vrot.lane.b32.xlu0 %v1017, 96
        %v1023 = vpop.permute.xlu0 %1022
        %1024 = vrot.lane.b32.xlu0 %v1019, 96
        %v1025 = vpop.permute.xlu0 %1024
        %1026 = vrot.lane.b32.xlu0 %v1021, 96
        %v1027 = vpop.permute.xlu0 %1026
        %1028 = vrot.lane.b32.xlu0 %v1020, 96
        %v1029 = vpop.permute.xlu0 %1028
        %v1034 = vrot.slane %v664, 4
        %v1035 = vrot.slane %v665, 4
        %v1036 = vsel %vm949, %v1034, %v1035
        %v1037 = vrot.slane %v666, 4
        %v1038 = vsel %vm949, %v1035, %v1037
        %v1039 = vrot.slane %v667, 4
        %v1040 = vsel %vm949, %v1037, %v1039
        %v1041 = vsel %vm958, %v664, %v985
        %v1042 = vsel %vm958, %v665, %v987
        %v1043 = vsel %vm958, %v666, %v989
        %v1044 = vsel %vm958, %v667, %v991
        %v1045 = vsel %vm963, %v1041, %v1004
        %v1046 = vsel %vm963, %v1042, %v1006
        %v1047 = vsel %vm963, %v1043, %v1008
        %v1048 = vsel %vm963, %v1044, %v1010
        %v1049 = vsel %vm968, %v1045, %v1023
        %v1050 = vsel %vm968, %v1046, %v1025
        %v1051 = vsel %vm968, %v1047, %v1027
        %v1052 = vsel %vm968, %v1048, %v1029
        %v1057 = vrot.slane %v668, 1
        %v1058 = vrot.slane %v669, 1
        %v1059 = vsel %vm889, %v1057, %v1058
        %v1060 = vrot.slane %v670, 1
        %v1061 = vsel %vm889, %v1058, %v1060
        %v1062 = vrot.slane %v671, 1
        %v1063 = vsel %vm889, %v1060, %v1062
        %1064 = vrot.lane.b32.xlu0 %v1059, 32
        %v1065 = vpop.permute.xlu0 %1064
        %1066 = vrot.lane.b32.xlu0 %v1061, 32
        %v1067 = vpop.permute.xlu0 %1066
        %1068 = vrot.lane.b32.xlu0 %v1063, 32
        %v1069 = vpop.permute.xlu0 %1068
        %1070 = vrot.lane.b32.xlu0 %v1062, 32
        %v1071 = vpop.permute.xlu0 %1070
        %v1076 = vrot.slane %v668, 2
        %v1077 = vrot.slane %v669, 2
        %v1078 = vsel %vm909, %v1076, %v1077
        %v1079 = vrot.slane %v670, 2
        %v1080 = vsel %vm909, %v1077, %v1079
        %v1081 = vrot.slane %v671, 2
        %v1082 = vsel %vm909, %v1079, %v1081
        %1083 = vrot.lane.b32.xlu0 %v1078, 64
        %v1084 = vpop.permute.xlu0 %1083
        %1085 = vrot.lane.b32.xlu0 %v1080, 64
        %v1086 = vpop.permute.xlu0 %1085
        %1087 = vrot.lane.b32.xlu0 %v1082, 64
        %v1088 = vpop.permute.xlu0 %1087
        %1089 = vrot.lane.b32.xlu0 %v1081, 64
        %v1090 = vpop.permute.xlu0 %1089
        %v1095 = vrot.slane %v668, 3
        %v1096 = vrot.slane %v669, 3
        %v1097 = vsel %vm929, %v1095, %v1096
        %v1098 = vrot.slane %v670, 3
        %v1099 = vsel %vm929, %v1096, %v1098
        %v1100 = vrot.slane %v671, 3
        %v1101 = vsel %vm929, %v1098, %v1100
        %1102 = vrot.lane.b32.xlu0 %v1097, 96
        %v1103 = vpop.permute.xlu0 %1102
        %1104 = vrot.lane.b32.xlu0 %v1099, 96
        %v1105 = vpop.permute.xlu0 %1104
        %1106 = vrot.lane.b32.xlu0 %v1101, 96
        %v1107 = vpop.permute.xlu0 %1106
        %1108 = vrot.lane.b32.xlu0 %v1100, 96
        %v1109 = vpop.permute.xlu0 %1108
        %v1114 = vrot.slane %v668, 4
        %v1115 = vrot.slane %v669, 4
        %v1116 = vsel %vm949, %v1114, %v1115
        %v1117 = vrot.slane %v670, 4
        %v1118 = vsel %vm949, %v1115, %v1117
        %v1119 = vrot.slane %v671, 4
        %v1120 = vsel %vm949, %v1117, %v1119
        %v1122 = vsel %vm958, %v668, %v1065
        %v1123 = vsel %vm958, %v669, %v1067
        %v1124 = vsel %vm958, %v670, %v1069
        %v1125 = vsel %vm958, %v671, %v1071
        %v1126 = vsel %vm963, %v1122, %v1084
        %v1127 = vsel %vm963, %v1123, %v1086
        %v1128 = vsel %vm963, %v1124, %v1088
        %v1129 = vsel %vm963, %v1125, %v1090
        %v1130 = vsel %vm968, %v1126, %v1103
        %v1131 = vsel %vm968, %v1127, %v1105
        %v1132 = vsel %vm968, %v1128, %v1107
        %v1133 = vsel %vm968, %v1129, %v1109
        %v1138 = vrot.slane %v672, 1
        %v1139 = vrot.slane %v673, 1
        %v1140 = vsel %vm889, %v1138, %v1139
        %v1141 = vrot.slane %v674, 1
        %v1142 = vsel %vm889, %v1139, %v1141
        %v1143 = vrot.slane %v675, 1
        %v1144 = vsel %vm889, %v1141, %v1143
        %1145 = vrot.lane.b32.xlu0 %v1140, 32
        %v1146 = vpop.permute.xlu0 %1145
        %1147 = vrot.lane.b32.xlu0 %v1142, 32
        %v1148 = vpop.permute.xlu0 %1147
        %1149 = vrot.lane.b32.xlu0 %v1144, 32
        %v1150 = vpop.permute.xlu0 %1149
        %1151 = vrot.lane.b32.xlu0 %v1143, 32
        %v1152 = vpop.permute.xlu0 %1151
        %v1157 = vrot.slane %v672, 2
        %v1158 = vrot.slane %v673, 2
        %v1159 = vsel %vm909, %v1157, %v1158
        %v1160 = vrot.slane %v674, 2
        %v1161 = vsel %vm909, %v1158, %v1160
        %v1162 = vrot.slane %v675, 2
        %v1163 = vsel %vm909, %v1160, %v1162
        %1164 = vrot.lane.b32.xlu0 %v1159, 64
        %v1165 = vpop.permute.xlu0 %1164
        %1166 = vrot.lane.b32.xlu0 %v1161, 64
        %v1167 = vpop.permute.xlu0 %1166
        %1168 = vrot.lane.b32.xlu0 %v1163, 64
        %v1169 = vpop.permute.xlu0 %1168
        %1170 = vrot.lane.b32.xlu0 %v1162, 64
        %v1171 = vpop.permute.xlu0 %1170
        %v1176 = vrot.slane %v672, 3
        %v1177 = vrot.slane %v673, 3
        %v1178 = vsel %vm929, %v1176, %v1177
        %v1179 = vrot.slane %v674, 3
        %v1180 = vsel %vm929, %v1177, %v1179
        %v1181 = vrot.slane %v675, 3
        %v1182 = vsel %vm929, %v1179, %v1181
        %1183 = vrot.lane.b32.xlu0 %v1178, 96
        %v1184 = vpop.permute.xlu0 %1183
        %1185 = vrot.lane.b32.xlu0 %v1180, 96
        %v1186 = vpop.permute.xlu0 %1185
        %1187 = vrot.lane.b32.xlu0 %v1182, 96
        %v1188 = vpop.permute.xlu0 %1187
        %1189 = vrot.lane.b32.xlu0 %v1181, 96
        %v1190 = vpop.permute.xlu0 %1189
        %v1195 = vrot.slane %v672, 4
        %v1196 = vrot.slane %v673, 4
        %v1197 = vsel %vm949, %v1195, %v1196
        %v1198 = vrot.slane %v674, 4
        %v1199 = vsel %vm949, %v1196, %v1198
        %v1200 = vrot.slane %v675, 4
        %v1201 = vsel %vm949, %v1198, %v1200
        %v1202 = vsel %vm958, %v672, %v1146
        %v1203 = vsel %vm958, %v673, %v1148
        %v1204 = vsel %vm958, %v674, %v1150
        %v1205 = vsel %vm958, %v675, %v1152
        %v1206 = vsel %vm963, %v1202, %v1165
        %v1207 = vsel %vm963, %v1203, %v1167
        %v1208 = vsel %vm963, %v1204, %v1169
        %v1209 = vsel %vm963, %v1205, %v1171
        %v1210 = vsel %vm968, %v1206, %v1184
        %v1211 = vsel %vm968, %v1207, %v1186
        %v1212 = vsel %vm968, %v1208, %v1188
        %v1213 = vsel %vm968, %v1209, %v1190
        %v1218 = vrot.slane %v676, 1
        %v1219 = vrot.slane %v677, 1
        %v1220 = vsel %vm889, %v1218, %v1219
        %v1221 = vrot.slane %v678, 1
        %v1222 = vsel %vm889, %v1219, %v1221
        %v1223 = vrot.slane %v679, 1
        %v1224 = vsel %vm889, %v1221, %v1223
        %1225 = vrot.lane.b32.xlu0 %v1220, 32
        %v1226 = vpop.permute.xlu0 %1225
        %1227 = vrot.lane.b32.xlu0 %v1222, 32
        %v1228 = vpop.permute.xlu0 %1227
        %1229 = vrot.lane.b32.xlu0 %v1224, 32
        %v1230 = vpop.permute.xlu0 %1229
        %1231 = vrot.lane.b32.xlu0 %v1223, 32
        %v1232 = vpop.permute.xlu0 %1231
        %v1237 = vrot.slane %v676, 2
        %v1238 = vrot.slane %v677, 2
        %v1239 = vsel %vm909, %v1237, %v1238
        %v1240 = vrot.slane %v678, 2
        %v1241 = vsel %vm909, %v1238, %v1240
        %v1242 = vrot.slane %v679, 2
        %v1243 = vsel %vm909, %v1240, %v1242
        %1244 = vrot.lane.b32.xlu0 %v1239, 64
        %v1245 = vpop.permute.xlu0 %1244
        %1246 = vrot.lane.b32.xlu0 %v1241, 64
        %v1247 = vpop.permute.xlu0 %1246
        %1248 = vrot.lane.b32.xlu0 %v1243, 64
        %v1249 = vpop.permute.xlu0 %1248
        %1250 = vrot.lane.b32.xlu0 %v1242, 64
        %v1251 = vpop.permute.xlu0 %1250
        %v1256 = vrot.slane %v676, 3
        %v1257 = vrot.slane %v677, 3
        %v1258 = vsel %vm929, %v1256, %v1257
        %v1259 = vrot.slane %v678, 3
        %v1260 = vsel %vm929, %v1257, %v1259
        %v1261 = vrot.slane %v679, 3
        %v1262 = vsel %vm929, %v1259, %v1261
        %1263 = vrot.lane.b32.xlu0 %v1258, 96
        %v1264 = vpop.permute.xlu0 %1263
        %1265 = vrot.lane.b32.xlu0 %v1260, 96
        %v1266 = vpop.permute.xlu0 %1265
        %1267 = vrot.lane.b32.xlu0 %v1262, 96
        %v1268 = vpop.permute.xlu0 %1267
        %1269 = vrot.lane.b32.xlu0 %v1261, 96
        %v1270 = vpop.permute.xlu0 %1269
        %v1275 = vrot.slane %v676, 4
        %v1276 = vrot.slane %v677, 4
        %v1277 = vsel %vm949, %v1275, %v1276
        %v1278 = vrot.slane %v678, 4
        %v1279 = vsel %vm949, %v1276, %v1278
        %v1280 = vrot.slane %v679, 4
        %v1281 = vsel %vm949, %v1278, %v1280
        %v1283 = vsel %vm958, %v676, %v1226
        %v1284 = vsel %vm958, %v677, %v1228
        %v1285 = vsel %vm958, %v678, %v1230
        %v1286 = vsel %vm958, %v679, %v1232
        %v1287 = vsel %vm963, %v1283, %v1245
        %v1288 = vsel %vm963, %v1284, %v1247
        %v1289 = vsel %vm963, %v1285, %v1249
        %v1290 = vsel %vm963, %v1286, %v1251
        %v1291 = vsel %vm968, %v1287, %v1264
        %v1292 = vsel %vm968, %v1288, %v1266
        %v1293 = vsel %vm968, %v1289, %v1268
        %v1294 = vsel %vm968, %v1290, %v1270
        %v1299 = vrot.slane %v680, 1
        %v1300 = vrot.slane %v681, 1
        %v1301 = vsel %vm889, %v1299, %v1300
        %v1302 = vrot.slane %v682, 1
        %v1303 = vsel %vm889, %v1300, %v1302
        %v1304 = vrot.slane %v683, 1
        %v1305 = vsel %vm889, %v1302, %v1304
        %1306 = vrot.lane.b32.xlu0 %v1301, 32
        %v1307 = vpop.permute.xlu0 %1306
        %1308 = vrot.lane.b32.xlu0 %v1303, 32
        %v1309 = vpop.permute.xlu0 %1308
        %1310 = vrot.lane.b32.xlu0 %v1305, 32
        %v1311 = vpop.permute.xlu0 %1310
        %1312 = vrot.lane.b32.xlu0 %v1304, 32
        %v1313 = vpop.permute.xlu0 %1312
        %v1318 = vrot.slane %v680, 2
        %v1319 = vrot.slane %v681, 2
        %v1320 = vsel %vm909, %v1318, %v1319
        %v1321 = vrot.slane %v682, 2
        %v1322 = vsel %vm909, %v1319, %v1321
        %v1323 = vrot.slane %v683, 2
        %v1324 = vsel %vm909, %v1321, %v1323
        %1325 = vrot.lane.b32.xlu0 %v1320, 64
        %v1326 = vpop.permute.xlu0 %1325
        %1327 = vrot.lane.b32.xlu0 %v1322, 64
        %v1328 = vpop.permute.xlu0 %1327
        %1329 = vrot.lane.b32.xlu0 %v1324, 64
        %v1330 = vpop.permute.xlu0 %1329
        %1331 = vrot.lane.b32.xlu0 %v1323, 64
        %v1332 = vpop.permute.xlu0 %1331
        %v1337 = vrot.slane %v680, 3
        %v1338 = vrot.slane %v681, 3
        %v1339 = vsel %vm929, %v1337, %v1338
        %v1340 = vrot.slane %v682, 3
        %v1341 = vsel %vm929, %v1338, %v1340
        %v1342 = vrot.slane %v683, 3
        %v1343 = vsel %vm929, %v1340, %v1342
        %1344 = vrot.lane.b32.xlu0 %v1339, 96
        %v1345 = vpop.permute.xlu0 %1344
        %1346 = vrot.lane.b32.xlu0 %v1341, 96
        %v1347 = vpop.permute.xlu0 %1346
        %1348 = vrot.lane.b32.xlu0 %v1343, 96
        %v1349 = vpop.permute.xlu0 %1348
        %1350 = vrot.lane.b32.xlu0 %v1342, 96
        %v1351 = vpop.permute.xlu0 %1350
        %v1356 = vrot.slane %v680, 4
        %v1357 = vrot.slane %v681, 4
        %v1358 = vsel %vm949, %v1356, %v1357
        %v1359 = vrot.slane %v682, 4
        %v1360 = vsel %vm949, %v1357, %v1359
        %v1361 = vrot.slane %v683, 4
        %v1362 = vsel %vm949, %v1359, %v1361
        %v1363 = vsel %vm958, %v680, %v1307
        %v1364 = vsel %vm958, %v681, %v1309
        %v1365 = vsel %vm958, %v682, %v1311
        %v1366 = vsel %vm958, %v683, %v1313
        %v1367 = vsel %vm963, %v1363, %v1326
        %v1368 = vsel %vm963, %v1364, %v1328
        %v1369 = vsel %vm963, %v1365, %v1330
        %v1370 = vsel %vm963, %v1366, %v1332
        %v1371 = vsel %vm968, %v1367, %v1345
        %v1372 = vsel %vm968, %v1368, %v1347
        %v1373 = vsel %vm968, %v1369, %v1349
        %v1374 = vsel %vm968, %v1370, %v1351
        %v1379 = vrot.slane %v684, 1
        %v1380 = vrot.slane %v685, 1
        %v1381 = vsel %vm889, %v1379, %v1380
        %v1382 = vrot.slane %v686, 1
        %v1383 = vsel %vm889, %v1380, %v1382
        %v1384 = vrot.slane %v687, 1
        %v1385 = vsel %vm889, %v1382, %v1384
        %1386 = vrot.lane.b32.xlu0 %v1381, 32
        %v1387 = vpop.permute.xlu0 %1386
        %1388 = vrot.lane.b32.xlu0 %v1383, 32
        %v1389 = vpop.permute.xlu0 %1388
        %1390 = vrot.lane.b32.xlu0 %v1385, 32
        %v1391 = vpop.permute.xlu0 %1390
        %1392 = vrot.lane.b32.xlu0 %v1384, 32
        %v1393 = vpop.permute.xlu0 %1392
        %v1398 = vrot.slane %v684, 2
        %v1399 = vrot.slane %v685, 2
        %v1400 = vsel %vm909, %v1398, %v1399
        %v1401 = vrot.slane %v686, 2
        %v1402 = vsel %vm909, %v1399, %v1401
        %v1403 = vrot.slane %v687, 2
        %v1404 = vsel %vm909, %v1401, %v1403
        %1405 = vrot.lane.b32.xlu0 %v1400, 64
        %v1406 = vpop.permute.xlu0 %1405
        %1407 = vrot.lane.b32.xlu0 %v1402, 64
        %v1408 = vpop.permute.xlu0 %1407
        %1409 = vrot.lane.b32.xlu0 %v1404, 64
        %v1410 = vpop.permute.xlu0 %1409
        %1411 = vrot.lane.b32.xlu0 %v1403, 64
        %v1412 = vpop.permute.xlu0 %1411
        %v1417 = vrot.slane %v684, 3
        %v1418 = vrot.slane %v685, 3
        %v1419 = vsel %vm929, %v1417, %v1418
        %v1420 = vrot.slane %v686, 3
        %v1421 = vsel %vm929, %v1418, %v1420
        %v1422 = vrot.slane %v687, 3
        %v1423 = vsel %vm929, %v1420, %v1422
        %1424 = vrot.lane.b32.xlu0 %v1419, 96
        %v1425 = vpop.permute.xlu0 %1424
        %1426 = vrot.lane.b32.xlu0 %v1421, 96
        %v1427 = vpop.permute.xlu0 %1426
        %1428 = vrot.lane.b32.xlu0 %v1423, 96
        %v1429 = vpop.permute.xlu0 %1428
        %1430 = vrot.lane.b32.xlu0 %v1422, 96
        %v1431 = vpop.permute.xlu0 %1430
        %v1436 = vrot.slane %v684, 4
        %v1437 = vrot.slane %v685, 4
        %v1438 = vsel %vm949, %v1436, %v1437
        %v1439 = vrot.slane %v686, 4
        %v1440 = vsel %vm949, %v1437, %v1439
        %v1441 = vrot.slane %v687, 4
        %v1442 = vsel %vm949, %v1439, %v1441
        %v1444 = vsel %vm958, %v684, %v1387
        %v1445 = vsel %vm958, %v685, %v1389
        %v1446 = vsel %vm958, %v686, %v1391
        %v1447 = vsel %vm958, %v687, %v1393
        %v1448 = vsel %vm963, %v1444, %v1406
        %v1449 = vsel %vm963, %v1445, %v1408
        %v1450 = vsel %vm963, %v1446, %v1410
        %v1451 = vsel %vm963, %v1447, %v1412
        %v1452 = vsel %vm968, %v1448, %v1425
        %v1453 = vsel %vm968, %v1449, %v1427
        %v1454 = vsel %vm968, %v1450, %v1429
        %v1455 = vsel %vm968, %v1451, %v1431
        %v1460 = vrot.slane %v688, 1
        %v1461 = vrot.slane %v689, 1
        %v1462 = vsel %vm889, %v1460, %v1461
        %v1463 = vrot.slane %v690, 1
        %v1464 = vsel %vm889, %v1461, %v1463
        %v1465 = vrot.slane %v691, 1
        %v1466 = vsel %vm889, %v1463, %v1465
        %1467 = vrot.lane.b32.xlu0 %v1462, 32
        %v1468 = vpop.permute.xlu0 %1467
        %1469 = vrot.lane.b32.xlu0 %v1464, 32
        %v1470 = vpop.permute.xlu0 %1469
        %1471 = vrot.lane.b32.xlu0 %v1466, 32
        %v1472 = vpop.permute.xlu0 %1471
        %1473 = vrot.lane.b32.xlu0 %v1465, 32
        %v1474 = vpop.permute.xlu0 %1473
        %v1479 = vrot.slane %v688, 2
        %v1480 = vrot.slane %v689, 2
        %v1481 = vsel %vm909, %v1479, %v1480
        %v1482 = vrot.slane %v690, 2
        %v1483 = vsel %vm909, %v1480, %v1482
        %v1484 = vrot.slane %v691, 2
        %v1485 = vsel %vm909, %v1482, %v1484
        %1486 = vrot.lane.b32.xlu0 %v1481, 64
        %v1487 = vpop.permute.xlu0 %1486
        %1488 = vrot.lane.b32.xlu0 %v1483, 64
        %v1489 = vpop.permute.xlu0 %1488
        %1490 = vrot.lane.b32.xlu0 %v1485, 64
        %v1491 = vpop.permute.xlu0 %1490
        %1492 = vrot.lane.b32.xlu0 %v1484, 64
        %v1493 = vpop.permute.xlu0 %1492
        %v1498 = vrot.slane %v688, 3
        %v1499 = vrot.slane %v689, 3
        %v1500 = vsel %vm929, %v1498, %v1499
        %v1501 = vrot.slane %v690, 3
        %v1502 = vsel %vm929, %v1499, %v1501
        %v1503 = vrot.slane %v691, 3
        %v1504 = vsel %vm929, %v1501, %v1503
        %1505 = vrot.lane.b32.xlu0 %v1500, 96
        %v1506 = vpop.permute.xlu0 %1505
        %1507 = vrot.lane.b32.xlu0 %v1502, 96
        %v1508 = vpop.permute.xlu0 %1507
        %1509 = vrot.lane.b32.xlu0 %v1504, 96
        %v1510 = vpop.permute.xlu0 %1509
        %1511 = vrot.lane.b32.xlu0 %v1503, 96
        %v1512 = vpop.permute.xlu0 %1511
        %v1517 = vrot.slane %v688, 4
        %v1518 = vrot.slane %v689, 4
        %v1519 = vsel %vm949, %v1517, %v1518
        %v1520 = vrot.slane %v690, 4
        %v1521 = vsel %vm949, %v1518, %v1520
        %v1522 = vrot.slane %v691, 4
        %v1523 = vsel %vm949, %v1520, %v1522
        %v1524 = vsel %vm958, %v688, %v1468
        %v1525 = vsel %vm958, %v689, %v1470
        %v1526 = vsel %vm958, %v690, %v1472
        %v1527 = vsel %vm958, %v691, %v1474
        %v1528 = vsel %vm963, %v1524, %v1487
        %v1529 = vsel %vm963, %v1525, %v1489
        %v1530 = vsel %vm963, %v1526, %v1491
        %v1531 = vsel %vm963, %v1527, %v1493
        %v1532 = vsel %vm968, %v1528, %v1506
        %v1533 = vsel %vm968, %v1529, %v1508
        %v1534 = vsel %vm968, %v1530, %v1510
        %v1535 = vsel %vm968, %v1531, %v1512
        %v1540 = vrot.slane %v1049, 4
        %v1541 = vrot.slane %v1036, 4
        %v1542 = vrot.slane %v1050, 4
        %v1543 = vsel %vm949, %v1540, %v1542
        %v1544 = vrot.slane %v1038, 4
        %v1545 = vsel %vm949, %v1541, %v1544
        %v1546 = vrot.slane %v1051, 4
        %v1547 = vsel %vm949, %v1542, %v1546
        %v1548 = vrot.slane %v1040, 4
        %v1549 = vsel %vm949, %v1544, %v1548
        %v1550 = vrot.slane %v1052, 4
        %v1551 = vsel %vm949, %v1546, %v1550
        %v1552 = vrot.slane %v1039, 4
        %v1553 = vsel %vm949, %v1548, %v1552
        %v1563 = vrot.slane %v1210, 4
        %v1564 = vrot.slane %v1197, 4
        %v1565 = vrot.slane %v1211, 4
        %v1566 = vsel %vm949, %v1563, %v1565
        %v1567 = vrot.slane %v1199, 4
        %v1568 = vsel %vm949, %v1564, %v1567
        %v1569 = vrot.slane %v1212, 4
        %v1570 = vsel %vm949, %v1565, %v1569
        %v1571 = vrot.slane %v1201, 4
        %v1572 = vsel %vm949, %v1567, %v1571
        %v1573 = vrot.slane %v1213, 4
        %v1574 = vsel %vm949, %v1569, %v1573
        %v1575 = vrot.slane %v1200, 4
        %v1576 = vsel %vm949, %v1571, %v1575
        %v1586 = vrot.slane %v1371, 4
        %v1587 = vrot.slane %v1358, 4
        %v1588 = vrot.slane %v1372, 4
        %v1589 = vsel %vm949, %v1586, %v1588
        %v1590 = vrot.slane %v1360, 4
        %v1591 = vsel %vm949, %v1587, %v1590
        %v1592 = vrot.slane %v1373, 4
        %v1593 = vsel %vm949, %v1588, %v1592
        %v1594 = vrot.slane %v1362, 4
        %v1595 = vsel %vm949, %v1590, %v1594
        %v1596 = vrot.slane %v1374, 4
        %v1597 = vsel %vm949, %v1592, %v1596
        %v1598 = vrot.slane %v1361, 4
        %v1599 = vsel %vm949, %v1594, %v1598
        %v1609 = vrot.slane %v1532, 4
        %v1610 = vrot.slane %v1519, 4
        %v1611 = vrot.slane %v1533, 4
        %v1612 = vsel %vm949, %v1609, %v1611
        %v1613 = vrot.slane %v1521, 4
        %v1614 = vsel %vm949, %v1610, %v1613
        %v1615 = vrot.slane %v1534, 4
        %v1616 = vsel %vm949, %v1611, %v1615
        %v1617 = vrot.slane %v1523, 4
        %v1618 = vsel %vm949, %v1613, %v1617
        %v1619 = vrot.slane %v1535, 4
        %v1620 = vsel %vm949, %v1615, %v1619
        %v1621 = vrot.slane %v1522, 4
        %v1622 = vsel %vm949, %v1617, %v1621
        %v1628 = vsel %vm949, %v972, %v1540
        %v1629 = vsel %vm949, %v955, %v1541
        %v1630 = vsel %vm949, %v1133, %v1563
        %v1631 = vsel %vm949, %v1119, %v1564
        %v1632 = vsel %vm949, %v1294, %v1586
        %v1633 = vsel %vm949, %v1280, %v1587
        %v1634 = vsel %vm949, %v1455, %v1609
        %v1635 = vsel %vm949, %v1441, %v1610
        %v1636 = vld [vmem:[%s1] sm:$0xff]
        %v1637 = vld [vmem:[%s1 + $0x8] sm:$0xff]
        %v1638 = vld [vmem:[%s1 + $0x10] sm:$0xff]
        %v1639 = vld [vmem:[%s1 + $0x18] sm:$0xff]
        %v1640 = vld [vmem:[%s1 + $0x20] sm:$0xff]
        %v1641 = vld [vmem:[%s1 + $0x28] sm:$0xff]
        %v1642 = vld [vmem:[%s1 + $0x30] sm:$0xff]
        %v1643 = vld [vmem:[%s1 + $0x38] sm:$0xff]
        %v1644 = vld [vmem:[%s1 + $0x40] sm:$0xff]
        %v1645 = vld [vmem:[%s1 + $0x48] sm:$0xff]
        %v1646 = vld [vmem:[%s1 + $0x50] sm:$0xff]
        %v1647 = vld [vmem:[%s1 + $0x58] sm:$0xff]
        %v1648 = vld [vmem:[%s1 + $0x60] sm:$0xff]
        %v1649 = vld [vmem:[%s1 + $0x68] sm:$0xff]
        %v1650 = vld [vmem:[%s1 + $0x70] sm:$0xff]
        %v1651 = vld [vmem:[%s1 + $0x78] sm:$0xff]
        %v1652 = vld [vmem:[%s1 + $0x80] sm:$0xff]
        %v1653 = vld [vmem:[%s1 + $0x88] sm:$0xff]
        %v1654 = vld [vmem:[%s1 + $0x90] sm:$0xff]
        %v1655 = vld [vmem:[%s1 + $0x98] sm:$0xff]
        %v1656 = vld [vmem:[%s1 + $0xa0] sm:$0xff]
        %v1657 = vld [vmem:[%s1 + $0xa8] sm:$0xff]
        %v1658 = vld [vmem:[%s1 + $0xb0] sm:$0xff]
        %v1659 = vld [vmem:[%s1 + $0xb8] sm:$0xff]
        %v1660 = vld [vmem:[%s1 + $0xc0] sm:$0xff]
        %v1661 = vld [vmem:[%s1 + $0xc8] sm:$0xff]
        %v1662 = vld [vmem:[%s1 + $0xd0] sm:$0xff]
        %v1663 = vld [vmem:[%s1 + $0xd8] sm:$0xff]
        %v1664 = vld [vmem:[%s1 + $0xe0] sm:$0xff]
        %v1665 = vld [vmem:[%s1 + $0xe8] sm:$0xff]
        %v1666 = vld [vmem:[%s1 + $0xf0] sm:$0xff]
        %v1667 = vld [vmem:[%s1 + $0xf8] sm:$0xff]
        %v1668 = vld [vmem:[%s1 + $0x100] sm:$0xff]
        %v1669 = vld [vmem:[%s1 + $0x108] sm:$0xff]
        %v1670 = vld [vmem:[%s1 + $0x110] sm:$0xff]
        %v1671 = vld [vmem:[%s1 + $0x118] sm:$0xff]
        %v1672 = vld [vmem:[%s1 + $0x120] sm:$0xff]
        %v1673 = vld [vmem:[%s1 + $0x128] sm:$0xff]
        %v1674 = vld [vmem:[%s1 + $0x130] sm:$0xff]
        %v1675 = vld [vmem:[%s1 + $0x138] sm:$0xff]
        %v1676 = vld [vmem:[%s2] sm:$0x3]
        %v1678 = vlaneseq
        %v1679 = vshrl.u32 %v1678, 7
        %v1680 = vsub.s32 0, %v1679
        %v1681 = vrot.slane %v1676, %v1680
        %v1682 = vlaneseq
        %v1683 = vshrl.u32 %v1682, 7
        %v1684 = vsub.s32 1, %v1683
        %v1685 = vrot.slane %v1676, %v1684
        %v1688 = vsel %vm958, %v952, 0
        %v1690 = vsel %vm958, %v954, 0
        %v1692 = vsel %vm958, %v956, 0
        %v1695 = vsel %vm958, %v1629, 0
        %v1697 = vsel %vm958, %v1545, 0
        %v1699 = vsel %vm958, %v1549, 0
        %v1701 = vsel %vm958, %v1553, 0
        %v1703 = vsel %vm958, %v1116, 0
        %v1705 = vsel %vm958, %v1118, 0
        %v1707 = vsel %vm958, %v1120, 0
        %v1710 = vsel %vm958, %v1631, 0
        %v1712 = vsel %vm958, %v1568, 0
        %v1714 = vsel %vm958, %v1572, 0
        %v1716 = vsel %vm958, %v1576, 0
        %v1718 = vsel %vm958, %v1277, 0
        %v1720 = vsel %vm958, %v1279, 0
        %v1722 = vsel %vm958, %v1281, 0
        %v1725 = vsel %vm958, %v1633, 0
        %v1727 = vsel %vm958, %v1591, 0
        %v1729 = vsel %vm958, %v1595, 0
        %v1731 = vsel %vm958, %v1599, 0
        %v1733 = vsel %vm958, %v1438, 0
        %v1735 = vsel %vm958, %v1440, 0
        %v1737 = vsel %vm958, %v1442, 0
        %v1740 = vsel %vm958, %v1635, 0
        %v1742 = vsel %vm958, %v1614, 0
        %v1744 = vsel %vm958, %v1618, 0
        %v1746 = vsel %vm958, %v1622, 0
        %1748 = vmatprep.subr.mxu0 %v1667
        %1749 = vmatpush1.msra.mxu0 %v1666
        %1750 = vmatprep.subr.mxu0 %v1665
        %1751 = vmatpush1.msra.mxu0 %v1664
        %1752 = vmatprep.subr.mxu0 %v1663
        %1753 = vmatpush1.msra.mxu0 %v1662
        %1754 = vmatprep.subr.mxu0 %v1661
        %1755 = vmatpush1.msra.mxu0 %v1660
        %1756 = vmatprep.subr.mxu0 %v1659
        %1757 = vmatpush1.msra.mxu0 %v1658
        %1758 = vmatprep.subr.mxu0 %v1657
        %1759 = vmatpush1.msra.mxu0 %v1656
        %1760 = vmatprep.subr.mxu0 %v1655
        %1761 = vmatpush1.msra.mxu0 %v1654
        %1762 = vmatprep.subr.mxu0 %v1653
        %1763 = vmatpush1.msra.mxu0 %v1652
        %1764 = vmatprep.subr.mxu0 %v1651
        %1765 = vmatpush1.msra.mxu0 %v1650
        %1766 = vmatprep.subr.mxu0 %v1649
        %1767 = vmatpush1.msra.mxu0 %v1648
        %1768 = vmatprep.subr.mxu0 %v1647
        %1769 = vmatpush1.msra.mxu0 %v1646
        %1770 = vmatprep.subr.mxu0 %v1645
        %1771 = vmatpush1.msra.mxu0 %v1644
        %1772 = vmatprep.subr.mxu0 %v1643
        %1773 = vmatpush1.msra.mxu0 %v1642
        %1774 = vmatprep.subr.mxu0 %v1641
        %1775 = vmatpush1.msra.mxu0 %v1640
        %1776 = vmatprep.subr.mxu0 %v1639
        %1777 = vmatpush1.msra.mxu0 %v1638
        %1778 = vmatprep.subr.mxu0 %v1637
        %1779 = vmatpush1.msra.mxu0 %v1636
        %1780 = vmatprep.subr.mxu0 0.0
        %1781 = vmatpush2.msra.mxu0 0.0
        %1782 = vmatprep.subr.mxu0 0.0
        %1783 = vmatpush2.msra.mxu0 0.0
        %1784 = vmatprep.subr.mxu0 0.0
        %1785 = vmatpush2.msra.mxu0 0.0
        %1786 = vmatprep.subr.mxu0 0.0
        %1787 = vmatpush2.msra.mxu0 0.0
        %1788 = vmatprep.subr.mxu0 0.0
        %1789 = vmatpush2.msra.mxu0 0.0
        %1790 = vmatprep.subr.mxu0 0.0
        %1791 = vmatpush2.msra.mxu0 0.0
        %1792 = vmatprep.subr.mxu0 0.0
        %1793 = vmatpush2.msra.mxu0 0.0
        %1794 = vmatprep.subr.mxu0 0.0
        %1795 = vmatpush2.msra.mxu0 0.0
        %1796 = vmatprep.subr.mxu0 0.0
        %1797 = vmatpush2.msra.mxu0 0.0
        %1798 = vmatprep.subr.mxu0 0.0
        %1799 = vmatpush2.msra.mxu0 0.0
        %1800 = vmatprep.subr.mxu0 0.0
        %1801 = vmatpush2.msra.mxu0 0.0
        %1802 = vmatprep.subr.mxu0 0.0
        %1803 = vmatpush2.msra.mxu0 0.0
        %1804 = vmatprep.subr.mxu0 %v1675
        %1805 = vmatpush2.msra.mxu0 %v1674
        %1806 = vmatprep.subr.mxu0 %v1673
        %1807 = vmatpush2.msra.mxu0 %v1672
        %1808 = vmatprep.subr.mxu0 %v1671
        %1809 = vmatpush2.msra.mxu0 %v1670
        %1810 = vmatprep.subr.mxu0 %v1669
        %1811 = vmatpush2.msra.mxu0 %v1668
        %1812 = vmatprep.mubr.f32.mxu0 %v1688
        %1813 = vmatmul.mubr.f32.gmra.mxu0 %v969
        %v1814 = vpop.f32.mrf.mxu0
        %v1815 = vadd.f32 %v1681, %v1814
        %v1816 = vpop.f32.mrf.mxu0
        %v1817 = vadd.f32 %v1685, %v1816
        %1818 = vmatprep.mubr.f32.mxu0 %v1690
        %1819 = vmatmul.mubr.f32.gmra.mxu0 %v970
        %v1820 = vpop.f32.mrf.mxu0
        %v1821 = vadd.f32 %v1681, %v1820
        %v1822 = vpop.f32.mrf.mxu0
        %v1823 = vadd.f32 %v1685, %v1822
        %1824 = vmatprep.mubr.f32.mxu0 %v1692
        %1825 = vmatmul.mubr.f32.gmra.mxu0 %v971
        %v1826 = vpop.f32.mrf.mxu0
        %v1827 = vadd.f32 %v1681, %v1826
        %v1828 = vpop.f32.mrf.mxu0
        %v1829 = vadd.f32 %v1685, %v1828
        %1830 = vmatprep.mubr.f32.mxu0 %v1695
        %1831 = vmatmul.mubr.f32.gmra.mxu0 %v1628
        %v1832 = vpop.f32.mrf.mxu0
        %v1833 = vadd.f32 %v1681, %v1832
        %v1834 = vpop.f32.mrf.mxu0
        %v1835 = vadd.f32 %v1685, %v1834
        %1836 = vmatprep.mubr.f32.mxu0 %v1697
        %1837 = vmatmul.mubr.f32.gmra.mxu0 %v1543
        %v1838 = vpop.f32.mrf.mxu0
        %v1839 = vadd.f32 %v1681, %v1838
        %v1840 = vpop.f32.mrf.mxu0
        %v1841 = vadd.f32 %v1685, %v1840
        %1842 = vmatprep.mubr.f32.mxu0 %v1699
        %1843 = vmatmul.mubr.f32.gmra.mxu0 %v1547
        %v1844 = vpop.f32.mrf.mxu0
        %v1845 = vadd.f32 %v1681, %v1844
        %v1846 = vpop.f32.mrf.mxu0
        %v1847 = vadd.f32 %v1685, %v1846
        %1848 = vmatprep.mubr.f32.mxu0 %v1701
        %1849 = vmatmul.mubr.f32.gmra.mxu0 %v1551
        %v1850 = vpop.f32.mrf.mxu0
        %v1851 = vadd.f32 %v1681, %v1850
        %v1852 = vpop.f32.mrf.mxu0
        %v1853 = vadd.f32 %v1685, %v1852
        %1854 = vmatprep.mubr.f32.mxu0 %v1703
        %1855 = vmatmul.mubr.f32.gmra.mxu0 %v1130
        %v1856 = vpop.f32.mrf.mxu0
        %v1857 = vadd.f32 %v1681, %v1856
        %v1858 = vpop.f32.mrf.mxu0
        %v1859 = vadd.f32 %v1685, %v1858
        %1860 = vmatprep.mubr.f32.mxu0 %v1705
        %1861 = vmatmul.mubr.f32.gmra.mxu0 %v1131
        %v1862 = vpop.f32.mrf.mxu0
        %v1863 = vadd.f32 %v1681, %v1862
        %v1864 = vpop.f32.mrf.mxu0
        %v1865 = vadd.f32 %v1685, %v1864
        %1866 = vmatprep.mubr.f32.mxu0 %v1707
        %1867 = vmatmul.mubr.f32.gmra.mxu0 %v1132
        %v1868 = vpop.f32.mrf.mxu0
        %v1869 = vadd.f32 %v1681, %v1868
        %v1870 = vpop.f32.mrf.mxu0
        %v1871 = vadd.f32 %v1685, %v1870
        %1872 = vmatprep.mubr.f32.mxu0 %v1710
        %1873 = vmatmul.mubr.f32.gmra.mxu0 %v1630
        %v1874 = vpop.f32.mrf.mxu0
        %v1875 = vadd.f32 %v1681, %v1874
        %v1876 = vpop.f32.mrf.mxu0
        %v1877 = vadd.f32 %v1685, %v1876
        %1878 = vmatprep.mubr.f32.mxu0 %v1712
        %1879 = vmatmul.mubr.f32.gmra.mxu0 %v1566
        %v1880 = vpop.f32.mrf.mxu0
        %v1881 = vadd.f32 %v1681, %v1880
        %v1882 = vpop.f32.mrf.mxu0
        %v1883 = vadd.f32 %v1685, %v1882
        %1884 = vmatprep.mubr.f32.mxu0 %v1714
        %1885 = vmatmul.mubr.f32.gmra.mxu0 %v1570
        %v1886 = vpop.f32.mrf.mxu0
        %v1887 = vadd.f32 %v1681, %v1886
        %v1888 = vpop.f32.mrf.mxu0
        %v1889 = vadd.f32 %v1685, %v1888
        %1890 = vmatprep.mubr.f32.mxu0 %v1716
        %1891 = vmatmul.mubr.f32.gmra.mxu0 %v1574
        %v1892 = vpop.f32.mrf.mxu0
        %v1893 = vadd.f32 %v1681, %v1892
        %v1894 = vpop.f32.mrf.mxu0
        %v1895 = vadd.f32 %v1685, %v1894
        %1896 = vmatprep.mubr.f32.mxu0 %v1718
        %1897 = vmatmul.mubr.f32.gmra.mxu0 %v1291
        %v1898 = vpop.f32.mrf.mxu0
        %v1899 = vadd.f32 %v1681, %v1898
        %v1900 = vpop.f32.mrf.mxu0
        %v1901 = vadd.f32 %v1685, %v1900
        %1902 = vmatprep.mubr.f32.mxu0 %v1720
        %1903 = vmatmul.mubr.f32.gmra.mxu0 %v1292
        %v1904 = vpop.f32.mrf.mxu0
        %v1905 = vadd.f32 %v1681, %v1904
        %v1906 = vpop.f32.mrf.mxu0
        %v1907 = vadd.f32 %v1685, %v1906
        %1908 = vmatprep.mubr.f32.mxu0 %v1722
        %1909 = vmatmul.mubr.f32.gmra.mxu0 %v1293
        %v1910 = vpop.f32.mrf.mxu0
        %v1911 = vadd.f32 %v1681, %v1910
        %v1912 = vpop.f32.mrf.mxu0
        %v1913 = vadd.f32 %v1685, %v1912
        %1914 = vmatprep.mubr.f32.mxu0 %v1725
        %1915 = vmatmul.mubr.f32.gmra.mxu0 %v1632
        %v1916 = vpop.f32.mrf.mxu0
        %v1917 = vadd.f32 %v1681, %v1916
        %v1918 = vpop.f32.mrf.mxu0
        %v1919 = vadd.f32 %v1685, %v1918
        %1920 = vmatprep.mubr.f32.mxu0 %v1727
        %1921 = vmatmul.mubr.f32.gmra.mxu0 %v1589
        %v1922 = vpop.f32.mrf.mxu0
        %v1923 = vadd.f32 %v1681, %v1922
        %v1924 = vpop.f32.mrf.mxu0
        %v1925 = vadd.f32 %v1685, %v1924
        %1926 = vmatprep.mubr.f32.mxu0 %v1729
        %1927 = vmatmul.mubr.f32.gmra.mxu0 %v1593
        %v1928 = vpop.f32.mrf.mxu0
        %v1929 = vadd.f32 %v1681, %v1928
        %v1930 = vpop.f32.mrf.mxu0
        %v1931 = vadd.f32 %v1685, %v1930
        %1932 = vmatprep.mubr.f32.mxu0 %v1731
        %1933 = vmatmul.mubr.f32.gmra.mxu0 %v1597
        %v1934 = vpop.f32.mrf.mxu0
        %v1935 = vadd.f32 %v1681, %v1934
        %v1936 = vpop.f32.mrf.mxu0
        %v1937 = vadd.f32 %v1685, %v1936
        %1938 = vmatprep.mubr.f32.mxu0 %v1733
        %1939 = vmatmul.mubr.f32.gmra.mxu0 %v1452
        %v1940 = vpop.f32.mrf.mxu0
        %v1941 = vadd.f32 %v1681, %v1940
        %v1942 = vpop.f32.mrf.mxu0
        %v1943 = vadd.f32 %v1685, %v1942
        %1944 = vmatprep.mubr.f32.mxu0 %v1735
        %1945 = vmatmul.mubr.f32.gmra.mxu0 %v1453
        %v1946 = vpop.f32.mrf.mxu0
        %v1947 = vadd.f32 %v1681, %v1946
        %v1948 = vpop.f32.mrf.mxu0
        %v1949 = vadd.f32 %v1685, %v1948
        %1950 = vmatprep.mubr.f32.mxu0 %v1737
        %1951 = vmatmul.mubr.f32.gmra.mxu0 %v1454
        %v1952 = vpop.f32.mrf.mxu0
        %v1953 = vadd.f32 %v1681, %v1952
        %v1954 = vpop.f32.mrf.mxu0
        %v1955 = vadd.f32 %v1685, %v1954
        %1956 = vmatprep.mubr.f32.mxu0 %v1740
        %1957 = vmatmul.mubr.f32.gmra.mxu0 %v1634
        %v1958 = vpop.f32.mrf.mxu0
        %v1959 = vadd.f32 %v1681, %v1958
        %v1960 = vpop.f32.mrf.mxu0
        %v1961 = vadd.f32 %v1685, %v1960
        %1962 = vmatprep.mubr.f32.mxu0 %v1742
        %1963 = vmatmul.mubr.f32.gmra.mxu0 %v1612
        %v1964 = vpop.f32.mrf.mxu0
        %v1965 = vadd.f32 %v1681, %v1964
        %v1966 = vpop.f32.mrf.mxu0
        %v1967 = vadd.f32 %v1685, %v1966
        %1968 = vmatprep.mubr.f32.mxu0 %v1744
        %1969 = vmatmul.mubr.f32.gmra.mxu0 %v1616
        %v1970 = vpop.f32.mrf.mxu0
        %v1971 = vadd.f32 %v1681, %v1970
        %v1972 = vpop.f32.mrf.mxu0
        %v1973 = vadd.f32 %v1685, %v1972
        %1974 = vmatprep.mubr.f32.mxu0 %v1746
        %1975 = vmatmul.mubr.f32.gmra.mxu0 %v1620
        %v1976 = vpop.f32.mrf.mxu0
        %v1977 = vadd.f32 %v1681, %v1976
        %v1978 = vpop.f32.mrf.mxu0
        %v1979 = vadd.f32 %v1685, %v1978
        %1980 = vdwg.mxu0
        %v1981 = vmax.f32 %v1815, 0.0
        %v1982 = vmax.f32 %v1817, 0.0
        %v1983 = vmax.f32 %v1821, 0.0
        %v1984 = vmax.f32 %v1823, 0.0
        %v1985 = vmax.f32 %v1827, 0.0
        %v1986 = vmax.f32 %v1829, 0.0
        %v1987 = vmax.f32 %v1833, 0.0
        %v1988 = vmax.f32 %v1835, 0.0
        %v1989 = vmax.f32 %v1839, 0.0
        %v1990 = vmax.f32 %v1841, 0.0
        %v1991 = vmax.f32 %v1845, 0.0
        %v1992 = vmax.f32 %v1847, 0.0
        %v1993 = vmax.f32 %v1851, 0.0
        %v1994 = vmax.f32 %v1853, 0.0
        %v1995 = vmax.f32 %v1857, 0.0
        %v1996 = vmax.f32 %v1859, 0.0
        %v1997 = vmax.f32 %v1863, 0.0
        %v1998 = vmax.f32 %v1865, 0.0
        %v1999 = vmax.f32 %v1869, 0.0
        %v2000 = vmax.f32 %v1871, 0.0
        %v2001 = vmax.f32 %v1875, 0.0
        %v2002 = vmax.f32 %v1877, 0.0
        %v2003 = vmax.f32 %v1881, 0.0
        %v2004 = vmax.f32 %v1883, 0.0
        %v2005 = vmax.f32 %v1887, 0.0
        %v2006 = vmax.f32 %v1889, 0.0
        %v2007 = vmax.f32 %v1893, 0.0
        %v2008 = vmax.f32 %v1895, 0.0
        %v2009 = vmax.f32 %v1899, 0.0
        %v2010 = vmax.f32 %v1901, 0.0
        %v2011 = vmax.f32 %v1905, 0.0
        %v2012 = vmax.f32 %v1907, 0.0
        %v2013 = vmax.f32 %v1911, 0.0
        %v2014 = vmax.f32 %v1913, 0.0
        %v2015 = vmax.f32 %v1917, 0.0
        %v2016 = vmax.f32 %v1919, 0.0
        %v2017 = vmax.f32 %v1923, 0.0
        %v2018 = vmax.f32 %v1925, 0.0
        %v2019 = vmax.f32 %v1929, 0.0
        %v2020 = vmax.f32 %v1931, 0.0
        %v2021 = vmax.f32 %v1935, 0.0
        %v2022 = vmax.f32 %v1937, 0.0
        %v2023 = vmax.f32 %v1941, 0.0
        %v2024 = vmax.f32 %v1943, 0.0
        %v2025 = vmax.f32 %v1947, 0.0
        %v2026 = vmax.f32 %v1949, 0.0
        %v2027 = vmax.f32 %v1953, 0.0
        %v2028 = vmax.f32 %v1955, 0.0
        %v2029 = vmax.f32 %v1959, 0.0
        %v2030 = vmax.f32 %v1961, 0.0
        %v2031 = vmax.f32 %v1965, 0.0
        %v2032 = vmax.f32 %v1967, 0.0
        %v2033 = vmax.f32 %v1971, 0.0
        %v2034 = vmax.f32 %v1973, 0.0
        %v2035 = vmax.f32 %v1977, 0.0
        %v2036 = vmax.f32 %v1979, 0.0
        %v2037 = vld [vmem:[%s4] sm:$0xff]
        %v2038 = vld [vmem:[%s4 + $0x8] sm:$0xff]
        %v2039 = vld [vmem:[%s4 + $0x10] sm:$0xff]
        %v2040 = vld [vmem:[%s4 + $0x18] sm:$0xff]
        %v2041 = vld [vmem:[%s4 + $0x20] sm:$0xff]
        %v2042 = vld [vmem:[%s4 + $0x28] sm:$0xff]
        %v2043 = vld [vmem:[%s4 + $0x30] sm:$0xff]
        %v2044 = vld [vmem:[%s4 + $0x38] sm:$0xff]
        %v2045 = vld [vmem:[%s4 + $0x40] sm:$0xff]
        %v2046 = vld [vmem:[%s4 + $0x48] sm:$0xff]
        %v2047 = vld [vmem:[%s4 + $0x50] sm:$0xff]
        %v2048 = vld [vmem:[%s4 + $0x58] sm:$0xff]
        %v2049 = vld [vmem:[%s4 + $0x60] sm:$0xff]
        %v2050 = vld [vmem:[%s4 + $0x68] sm:$0xff]
        %v2051 = vld [vmem:[%s4 + $0x70] sm:$0xff]
        %v2052 = vld [vmem:[%s4 + $0x78] sm:$0xff]
        %v2053 = vld [vmem:[%s4 + $0x80] sm:$0xff]
        %v2054 = vld [vmem:[%s4 + $0x88] sm:$0xff]
        %v2055 = vld [vmem:[%s4 + $0x90] sm:$0xff]
        %v2056 = vld [vmem:[%s4 + $0x98] sm:$0xff]
        %v2057 = vld [vmem:[%s4 + $0xa0] sm:$0xff]
        %v2058 = vld [vmem:[%s4 + $0xa8] sm:$0xff]
        %v2059 = vld [vmem:[%s4 + $0xb0] sm:$0xff]
        %v2060 = vld [vmem:[%s4 + $0xb8] sm:$0xff]
        %v2061 = vld [vmem:[%s4 + $0xc0] sm:$0xff]
        %v2062 = vld [vmem:[%s4 + $0xc8] sm:$0xff]
        %v2063 = vld [vmem:[%s4 + $0xd0] sm:$0xff]
        %v2064 = vld [vmem:[%s4 + $0xd8] sm:$0xff]
        %v2065 = vld [vmem:[%s3] sm:$0xff]
        %v2066 = vld [vmem:[%s3 + $0x8] sm:$0xff]
        %v2067 = vld [vmem:[%s3 + $0x10] sm:$0xff]
        %v2068 = vld [vmem:[%s3 + $0x18] sm:$0xff]
        %v2069 = vld [vmem:[%s3 + $0x20] sm:$0xff]
        %v2070 = vld [vmem:[%s3 + $0x28] sm:$0xff]
        %v2071 = vld [vmem:[%s3 + $0x30] sm:$0xff]
        %v2072 = vld [vmem:[%s3 + $0x38] sm:$0xff]
        %v2073 = vld [vmem:[%s3 + $0x40] sm:$0xff]
        %v2074 = vld [vmem:[%s3 + $0x48] sm:$0xff]
        %v2075 = vld [vmem:[%s3 + $0x50] sm:$0xff]
        %v2076 = vld [vmem:[%s3 + $0x58] sm:$0xff]
        %v2077 = vld [vmem:[%s3 + $0x60] sm:$0xff]
        %v2078 = vld [vmem:[%s3 + $0x68] sm:$0xff]
        %v2079 = vld [vmem:[%s3 + $0x70] sm:$0xff]
        %v2080 = vld [vmem:[%s3 + $0x78] sm:$0xff]
        %v2081 = vld [vmem:[%s3 + $0x80] sm:$0xff]
        %v2082 = vld [vmem:[%s3 + $0x88] sm:$0xff]
        %v2083 = vld [vmem:[%s3 + $0x90] sm:$0xff]
        %v2084 = vld [vmem:[%s3 + $0x98] sm:$0xff]
        %v2085 = vld [vmem:[%s3 + $0xa0] sm:$0xff]
        %vm2086 = vcmask 326656
        %v2088 = vsel %vm2086, %v1982, 0
        %v2091 = vsel %vm2086, %v1984, 0
        %v2094 = vsel %vm2086, %v1986, 0
        %v2097 = vsel %vm2086, %v1988, 0
        %v2100 = vsel %vm2086, %v1990, 0
        %v2103 = vsel %vm2086, %v1992, 0
        %v2106 = vsel %vm2086, %v1994, 0
        %v2109 = vsel %vm2086, %v1996, 0
        %v2112 = vsel %vm2086, %v1998, 0
        %v2115 = vsel %vm2086, %v2000, 0
        %v2118 = vsel %vm2086, %v2002, 0
        %v2121 = vsel %vm2086, %v2004, 0
        %v2124 = vsel %vm2086, %v2006, 0
        %v2127 = vsel %vm2086, %v2008, 0
        %v2130 = vsel %vm2086, %v2010, 0
        %v2133 = vsel %vm2086, %v2012, 0
        %v2136 = vsel %vm2086, %v2014, 0
        %v2139 = vsel %vm2086, %v2016, 0
        %v2142 = vsel %vm2086, %v2018, 0
        %v2145 = vsel %vm2086, %v2020, 0
        %v2148 = vsel %vm2086, %v2022, 0
        %v2151 = vsel %vm2086, %v2024, 0
        %v2154 = vsel %vm2086, %v2026, 0
        %v2157 = vsel %vm2086, %v2028, 0
        %v2160 = vsel %vm2086, %v2030, 0
        %v2163 = vsel %vm2086, %v2032, 0
        %v2166 = vsel %vm2086, %v2034, 0
        %v2169 = vsel %vm2086, %v2036, 0
        %2171 = vmatprep.subr.mxu0 0.0
        %2172 = vmatpush1.msra.mxu0 %v2080
        %2173 = vmatprep.subr.mxu0 0.0
        %2174 = vmatpush1.msra.mxu0 %v2079
        %2175 = vmatprep.subr.mxu0 0.0
        %2176 = vmatpush1.msra.mxu0 %v2078
        %2177 = vmatprep.subr.mxu0 0.0
        %2178 = vmatpush1.msra.mxu0 %v2077
        %2179 = vmatprep.subr.mxu0 0.0
        %2180 = vmatpush1.msra.mxu0 %v2076
        %2181 = vmatprep.subr.mxu0 0.0
        %2182 = vmatpush1.msra.mxu0 %v2075
        %2183 = vmatprep.subr.mxu0 0.0
        %2184 = vmatpush1.msra.mxu0 %v2074
        %2185 = vmatprep.subr.mxu0 0.0
        %2186 = vmatpush1.msra.mxu0 %v2073
        %2187 = vmatprep.subr.mxu0 0.0
        %2188 = vmatpush1.msra.mxu0 %v2072
        %2189 = vmatprep.subr.mxu0 0.0
        %2190 = vmatpush1.msra.mxu0 %v2071
        %2191 = vmatprep.subr.mxu0 0.0
        %2192 = vmatpush1.msra.mxu0 %v2070
        %2193 = vmatprep.subr.mxu0 0.0
        %2194 = vmatpush1.msra.mxu0 %v2069
        %2195 = vmatprep.subr.mxu0 0.0
        %2196 = vmatpush1.msra.mxu0 %v2068
        %2197 = vmatprep.subr.mxu0 0.0
        %2198 = vmatpush1.msra.mxu0 %v2067
        %2199 = vmatprep.subr.mxu0 0.0
        %2200 = vmatpush1.msra.mxu0 %v2066
        %2201 = vmatprep.subr.mxu0 0.0
        %2202 = vmatpush1.msra.mxu0 %v2065
        %2203 = vmatprep.subr.mxu0 0.0
        %2204 = vmatpush2.msra.mxu0 0.0
        %2205 = vmatprep.subr.mxu0 0.0
        %2206 = vmatpush2.msra.mxu0 0.0
        %2207 = vmatprep.subr.mxu0 0.0
        %2208 = vmatpush2.msra.mxu0 0.0
        %2209 = vmatprep.subr.mxu0 0.0
        %2210 = vmatpush2.msra.mxu0 0.0
        %2211 = vmatprep.subr.mxu0 0.0
        %2212 = vmatpush2.msra.mxu0 0.0
        %2213 = vmatprep.subr.mxu0 0.0
        %2214 = vmatpush2.msra.mxu0 0.0
        %2215 = vmatprep.subr.mxu0 0.0
        %2216 = vmatpush2.msra.mxu0 0.0
        %2217 = vmatprep.subr.mxu0 0.0
        %2218 = vmatpush2.msra.mxu0 0.0
        %2219 = vmatprep.subr.mxu0 0.0
        %2220 = vmatpush2.msra.mxu0 0.0
        %2221 = vmatprep.subr.mxu0 0.0
        %2222 = vmatpush2.msra.mxu0 0.0
        %2223 = vmatprep.subr.mxu0 0.0
        %2224 = vmatpush2.msra.mxu0 0.0
        %2225 = vmatprep.subr.mxu0 0.0
        %2226 = vmatpush2.msra.mxu0 %v2085
        %2227 = vmatprep.subr.mxu0 0.0
        %2228 = vmatpush2.msra.mxu0 %v2084
        %2229 = vmatprep.subr.mxu0 0.0
        %2230 = vmatpush2.msra.mxu0 %v2083
        %2231 = vmatprep.subr.mxu0 0.0
        %2232 = vmatpush2.msra.mxu0 %v2082
        %2233 = vmatprep.subr.mxu0 0.0
        %2234 = vmatpush2.msra.mxu0 %v2081
        %2235 = vmatprep.mubr.f32.mxu0 %v2088
        %2236 = vmatmul.mubr.f32.gmra.mxu0 %v1981
        %v2237 = vpop.f32.mrf.mxu0
        %v2238 = vadd.f32 0.0, %v2237
        %v2239 = vpop.f32.mrf.mxu0
        %2240 = vmatprep.mubr.f32.mxu0 %v2091
        %2241 = vmatmul.mubr.f32.gmra.mxu0 %v1983
        %v2242 = vpop.f32.mrf.mxu0
        %v2243 = vadd.f32 0.0, %v2242
        %v2244 = vpop.f32.mrf.mxu0
        %2245 = vmatprep.mubr.f32.mxu0 %v2094
        %2246 = vmatmul.mubr.f32.gmra.mxu0 %v1985
        %v2247 = vpop.f32.mrf.mxu0
        %v2248 = vadd.f32 0.0, %v2247
        %v2249 = vpop.f32.mrf.mxu0
        %2250 = vmatprep.mubr.f32.mxu0 %v2097
        %2251 = vmatmul.mubr.f32.gmra.mxu0 %v1987
        %v2252 = vpop.f32.mrf.mxu0
        %v2253 = vadd.f32 0.0, %v2252
        %v2254 = vpop.f32.mrf.mxu0
        %2255 = vmatprep.mubr.f32.mxu0 %v2100
        %2256 = vmatmul.mubr.f32.gmra.mxu0 %v1989
        %v2257 = vpop.f32.mrf.mxu0
        %v2258 = vadd.f32 0.0, %v2257
        %v2259 = vpop.f32.mrf.mxu0
        %2260 = vmatprep.mubr.f32.mxu0 %v2103
        %2261 = vmatmul.mubr.f32.gmra.mxu0 %v1991
        %v2262 = vpop.f32.mrf.mxu0
        %v2263 = vadd.f32 0.0, %v2262
        %v2264 = vpop.f32.mrf.mxu0
        %2265 = vmatprep.mubr.f32.mxu0 %v2106
        %2266 = vmatmul.mubr.f32.gmra.mxu0 %v1993
        %v2267 = vpop.f32.mrf.mxu0
        %v2268 = vadd.f32 0.0, %v2267
        %v2269 = vpop.f32.mrf.mxu0
        %2270 = vmatprep.mubr.f32.mxu0 %v2109
        %2271 = vmatmul.mubr.f32.gmra.mxu0 %v1995
        %v2272 = vpop.f32.mrf.mxu0
        %v2273 = vadd.f32 0.0, %v2272
        %v2274 = vpop.f32.mrf.mxu0
        %2275 = vmatprep.mubr.f32.mxu0 %v2112
        %2276 = vmatmul.mubr.f32.gmra.mxu0 %v1997
        %v2277 = vpop.f32.mrf.mxu0
        %v2278 = vadd.f32 0.0, %v2277
        %v2279 = vpop.f32.mrf.mxu0
        %2280 = vmatprep.mubr.f32.mxu0 %v2115
        %2281 = vmatmul.mubr.f32.gmra.mxu0 %v1999
        %v2282 = vpop.f32.mrf.mxu0
        %v2283 = vadd.f32 0.0, %v2282
        %v2284 = vpop.f32.mrf.mxu0
        %2285 = vmatprep.mubr.f32.mxu0 %v2118
        %2286 = vmatmul.mubr.f32.gmra.mxu0 %v2001
        %v2287 = vpop.f32.mrf.mxu0
        %v2288 = vadd.f32 0.0, %v2287
        %v2289 = vpop.f32.mrf.mxu0
        %2290 = vmatprep.mubr.f32.mxu0 %v2121
        %2291 = vmatmul.mubr.f32.gmra.mxu0 %v2003
        %v2292 = vpop.f32.mrf.mxu0
        %v2293 = vadd.f32 0.0, %v2292
        %v2294 = vpop.f32.mrf.mxu0
        %2295 = vmatprep.mubr.f32.mxu0 %v2124
        %2296 = vmatmul.mubr.f32.gmra.mxu0 %v2005
        %v2297 = vpop.f32.mrf.mxu0
        %v2298 = vadd.f32 0.0, %v2297
        %v2299 = vpop.f32.mrf.mxu0
        %2300 = vmatprep.mubr.f32.mxu0 %v2127
        %2301 = vmatmul.mubr.f32.gmra.mxu0 %v2007
        %v2302 = vpop.f32.mrf.mxu0
        %v2303 = vadd.f32 0.0, %v2302
        %v2304 = vpop.f32.mrf.mxu0
        %2305 = vmatprep.mubr.f32.mxu0 %v2130
        %2306 = vmatmul.mubr.f32.gmra.mxu0 %v2009
        %v2307 = vpop.f32.mrf.mxu0
        %v2308 = vadd.f32 0.0, %v2307
        %v2309 = vpop.f32.mrf.mxu0
        %2310 = vmatprep.mubr.f32.mxu0 %v2133
        %2311 = vmatmul.mubr.f32.gmra.mxu0 %v2011
        %v2312 = vpop.f32.mrf.mxu0
        %v2313 = vadd.f32 0.0, %v2312
        %v2314 = vpop.f32.mrf.mxu0
        %2315 = vmatprep.mubr.f32.mxu0 %v2136
        %2316 = vmatmul.mubr.f32.gmra.mxu0 %v2013
        %v2317 = vpop.f32.mrf.mxu0
        %v2318 = vadd.f32 0.0, %v2317
        %v2319 = vpop.f32.mrf.mxu0
        %2320 = vmatprep.mubr.f32.mxu0 %v2139
        %2321 = vmatmul.mubr.f32.gmra.mxu0 %v2015
        %v2322 = vpop.f32.mrf.mxu0
        %v2323 = vadd.f32 0.0, %v2322
        %v2324 = vpop.f32.mrf.mxu0
        %2325 = vmatprep.mubr.f32.mxu0 %v2142
        %2326 = vmatmul.mubr.f32.gmra.mxu0 %v2017
        %v2327 = vpop.f32.mrf.mxu0
        %v2328 = vadd.f32 0.0, %v2327
        %v2329 = vpop.f32.mrf.mxu0
        %2330 = vmatprep.mubr.f32.mxu0 %v2145
        %2331 = vmatmul.mubr.f32.gmra.mxu0 %v2019
        %v2332 = vpop.f32.mrf.mxu0
        %v2333 = vadd.f32 0.0, %v2332
        %v2334 = vpop.f32.mrf.mxu0
        %2335 = vmatprep.mubr.f32.mxu0 %v2148
        %2336 = vmatmul.mubr.f32.gmra.mxu0 %v2021
        %v2337 = vpop.f32.mrf.mxu0
        %v2338 = vadd.f32 0.0, %v2337
        %v2339 = vpop.f32.mrf.mxu0
        %2340 = vmatprep.mubr.f32.mxu0 %v2151
        %2341 = vmatmul.mubr.f32.gmra.mxu0 %v2023
        %v2342 = vpop.f32.mrf.mxu0
        %v2343 = vadd.f32 0.0, %v2342
        %v2344 = vpop.f32.mrf.mxu0
        %2345 = vmatprep.mubr.f32.mxu0 %v2154
        %2346 = vmatmul.mubr.f32.gmra.mxu0 %v2025
        %v2347 = vpop.f32.mrf.mxu0
        %v2348 = vadd.f32 0.0, %v2347
        %v2349 = vpop.f32.mrf.mxu0
        %2350 = vmatprep.mubr.f32.mxu0 %v2157
        %2351 = vmatmul.mubr.f32.gmra.mxu0 %v2027
        %v2352 = vpop.f32.mrf.mxu0
        %v2353 = vadd.f32 0.0, %v2352
        %v2354 = vpop.f32.mrf.mxu0
        %2355 = vmatprep.mubr.f32.mxu0 %v2160
        %2356 = vmatmul.mubr.f32.gmra.mxu0 %v2029
        %v2357 = vpop.f32.mrf.mxu0
        %v2358 = vadd.f32 0.0, %v2357
        %v2359 = vpop.f32.mrf.mxu0
        %2360 = vmatprep.mubr.f32.mxu0 %v2163
        %2361 = vmatmul.mubr.f32.gmra.mxu0 %v2031
        %v2362 = vpop.f32.mrf.mxu0
        %v2363 = vadd.f32 0.0, %v2362
        %v2364 = vpop.f32.mrf.mxu0
        %2365 = vmatprep.mubr.f32.mxu0 %v2166
        %2366 = vmatmul.mubr.f32.gmra.mxu0 %v2033
        %v2367 = vpop.f32.mrf.mxu0
        %v2368 = vadd.f32 0.0, %v2367
        %v2369 = vpop.f32.mrf.mxu0
        %2370 = vmatprep.mubr.f32.mxu0 %v2169
        %2371 = vmatmul.mubr.f32.gmra.mxu0 %v2035
        %v2372 = vpop.f32.mrf.mxu0
        %v2373 = vadd.f32 0.0, %v2372
        %v2374 = vpop.f32.mrf.mxu0
        %2375 = vdwg.mxu0
        %v2377 = vsel %vm968, %v2038, 0
        %v2380 = vsel %vm968, %v2040, 0
        %v2383 = vsel %vm968, %v2042, 0
        %v2386 = vsel %vm968, %v2044, 0
        %v2389 = vsel %vm968, %v2046, 0
        %v2392 = vsel %vm968, %v2048, 0
        %v2395 = vsel %vm968, %v2050, 0
        %v2398 = vsel %vm968, %v2052, 0
        %v2401 = vsel %vm968, %v2054, 0
        %v2404 = vsel %vm968, %v2056, 0
        %v2407 = vsel %vm968, %v2058, 0
        %v2410 = vsel %vm968, %v2060, 0
        %v2413 = vsel %vm968, %v2062, 0
        %v2416 = vsel %vm968, %v2064, 0
        %2418 = vmatprep.subr.mxu0 0.0
        %2419 = vmatpush1.msra.mxu0 %v2313
        %2420 = vmatprep.subr.mxu0 0.0
        %2421 = vmatpush1.msra.mxu0 %v2308
        %2422 = vmatprep.subr.mxu0 0.0
        %2423 = vmatpush1.msra.mxu0 %v2303
        %2424 = vmatprep.subr.mxu0 0.0
        %2425 = vmatpush1.msra.mxu0 %v2298
        %2426 = vmatprep.subr.mxu0 0.0
        %2427 = vmatpush1.msra.mxu0 %v2293
        %2428 = vmatprep.subr.mxu0 0.0
        %2429 = vmatpush1.msra.mxu0 %v2288
        %2430 = vmatprep.subr.mxu0 0.0
        %2431 = vmatpush1.msra.mxu0 %v2283
        %2432 = vmatprep.subr.mxu0 0.0
        %2433 = vmatpush1.msra.mxu0 %v2278
        %2434 = vmatprep.subr.mxu0 0.0
        %2435 = vmatpush1.msra.mxu0 %v2273
        %2436 = vmatprep.subr.mxu0 0.0
        %2437 = vmatpush1.msra.mxu0 %v2268
        %2438 = vmatprep.subr.mxu0 0.0
        %2439 = vmatpush1.msra.mxu0 %v2263
        %2440 = vmatprep.subr.mxu0 0.0
        %2441 = vmatpush1.msra.mxu0 %v2258
        %2442 = vmatprep.subr.mxu0 0.0
        %2443 = vmatpush1.msra.mxu0 %v2253
        %2444 = vmatprep.subr.mxu0 0.0
        %2445 = vmatpush1.msra.mxu0 %v2248
        %2446 = vmatprep.subr.mxu0 0.0
        %2447 = vmatpush1.msra.mxu0 %v2243
        %2448 = vmatprep.subr.mxu0 0.0
        %2449 = vmatpush1.msra.mxu0 %v2238
        %2450 = vmatprep.subr.mxu0 0.0
        %2451 = vmatpush2.msra.mxu0 0.0
        %2452 = vmatprep.subr.mxu0 0.0
        %2453 = vmatpush2.msra.mxu0 0.0
        %2454 = vmatprep.subr.mxu0 0.0
        %2455 = vmatpush2.msra.mxu0 0.0
        %2456 = vmatprep.subr.mxu0 0.0
        %2457 = vmatpush2.msra.mxu0 0.0
        %2458 = vmatprep.subr.mxu0 0.0
        %2459 = vmatpush2.msra.mxu0 %v2373
        %2460 = vmatprep.subr.mxu0 0.0
        %2461 = vmatpush2.msra.mxu0 %v2368
        %2462 = vmatprep.subr.mxu0 0.0
        %2463 = vmatpush2.msra.mxu0 %v2363
        %2464 = vmatprep.subr.mxu0 0.0
        %2465 = vmatpush2.msra.mxu0 %v2358
        %2466 = vmatprep.subr.mxu0 0.0
        %2467 = vmatpush2.msra.mxu0 %v2353
        %2468 = vmatprep.subr.mxu0 0.0
        %2469 = vmatpush2.msra.mxu0 %v2348
        %2470 = vmatprep.subr.mxu0 0.0
        %2471 = vmatpush2.msra.mxu0 %v2343
        %2472 = vmatprep.subr.mxu0 0.0
        %2473 = vmatpush2.msra.mxu0 %v2338
        %2474 = vmatprep.subr.mxu0 0.0
        %2475 = vmatpush2.msra.mxu0 %v2333
        %2476 = vmatprep.subr.mxu0 0.0
        %2477 = vmatpush2.msra.mxu0 %v2328
        %2478 = vmatprep.subr.mxu0 0.0
        %2479 = vmatpush2.msra.mxu0 %v2323
        %2480 = vmatprep.subr.mxu0 0.0
        %2481 = vmatpush2.msra.mxu0 %v2318
        %2482 = vmatprep.mubr.f32.mxu0 %v2377
        %2483 = vmatmul.mubr.f32.gmra.mxu0 %v2037
        %v2484 = vpop.f32.mrf.mxu0
        %v2485 = vadd.f32 0.0, %v2484
        %v2486 = vpop.f32.mrf.mxu0
        %2487 = vmatprep.mubr.f32.mxu0 %v2380
        %2488 = vmatmul.mubr.f32.gmra.mxu0 %v2039
        %v2489 = vpop.f32.mrf.mxu0
        %v2490 = vadd.f32 0.0, %v2489
        %v2491 = vpop.f32.mrf.mxu0
        %2492 = vmatprep.mubr.f32.mxu0 %v2383
        %2493 = vmatmul.mubr.f32.gmra.mxu0 %v2041
        %v2494 = vpop.f32.mrf.mxu0
        %v2495 = vadd.f32 0.0, %v2494
        %v2496 = vpop.f32.mrf.mxu0
        %2497 = vmatprep.mubr.f32.mxu0 %v2386
        %2498 = vmatmul.mubr.f32.gmra.mxu0 %v2043
        %v2499 = vpop.f32.mrf.mxu0
        %v2500 = vadd.f32 0.0, %v2499
        %v2501 = vpop.f32.mrf.mxu0
        %2502 = vmatprep.mubr.f32.mxu0 %v2389
        %2503 = vmatmul.mubr.f32.gmra.mxu0 %v2045
        %v2504 = vpop.f32.mrf.mxu0
        %v2505 = vadd.f32 0.0, %v2504
        %v2506 = vpop.f32.mrf.mxu0
        %2507 = vmatprep.mubr.f32.mxu0 %v2392
        %2508 = vmatmul.mubr.f32.gmra.mxu0 %v2047
        %v2509 = vpop.f32.mrf.mxu0
        %v2510 = vadd.f32 0.0, %v2509
        %v2511 = vpop.f32.mrf.mxu0
        %2512 = vmatprep.mubr.f32.mxu0 %v2395
        %2513 = vmatmul.mubr.f32.gmra.mxu0 %v2049
        %v2514 = vpop.f32.mrf.mxu0
        %v2515 = vadd.f32 0.0, %v2514
        %v2516 = vpop.f32.mrf.mxu0
        %2517 = vmatprep.mubr.f32.mxu0 %v2398
        %2518 = vmatmul.mubr.f32.gmra.mxu0 %v2051
        %v2519 = vpop.f32.mrf.mxu0
        %v2520 = vadd.f32 0.0, %v2519
        %v2521 = vpop.f32.mrf.mxu0
        %2522 = vmatprep.mubr.f32.mxu0 %v2401
        %2523 = vmatmul.mubr.f32.gmra.mxu0 %v2053
        %v2524 = vpop.f32.mrf.mxu0
        %v2525 = vadd.f32 0.0, %v2524
        %v2526 = vpop.f32.mrf.mxu0
        %2527 = vmatprep.mubr.f32.mxu0 %v2404
        %2528 = vmatmul.mubr.f32.gmra.mxu0 %v2055
        %v2529 = vpop.f32.mrf.mxu0
        %v2530 = vadd.f32 0.0, %v2529
        %v2531 = vpop.f32.mrf.mxu0
        %2532 = vmatprep.mubr.f32.mxu0 %v2407
        %2533 = vmatmul.mubr.f32.gmra.mxu0 %v2057
        %v2534 = vpop.f32.mrf.mxu0
        %v2535 = vadd.f32 0.0, %v2534
        %v2536 = vpop.f32.mrf.mxu0
        %2537 = vmatprep.mubr.f32.mxu0 %v2410
        %2538 = vmatmul.mubr.f32.gmra.mxu0 %v2059
        %v2539 = vpop.f32.mrf.mxu0
        %v2540 = vadd.f32 0.0, %v2539
        %v2541 = vpop.f32.mrf.mxu0
        %2542 = vmatprep.mubr.f32.mxu0 %v2413
        %2543 = vmatmul.mubr.f32.gmra.mxu0 %v2061
        %v2544 = vpop.f32.mrf.mxu0
        %v2545 = vadd.f32 0.0, %v2544
        %v2546 = vpop.f32.mrf.mxu0
        %2547 = vmatprep.mubr.f32.mxu0 %v2416
        %2548 = vmatmul.mubr.f32.gmra.mxu0 %v2063
        %v2549 = vpop.f32.mrf.mxu0
        %v2550 = vadd.f32 0.0, %v2549
        %v2551 = vpop.f32.mrf.mxu0
        %2552 = vdwg.mxu0
        %vm2553 = vcmp.eq.f32.partialorder %v2485, 0.0
        %vm2554 = vcmp.eq.f32.partialorder %v2490, 0.0
        %vm2555 = vcmp.eq.f32.partialorder %v2495, 0.0
        %vm2556 = vcmp.eq.f32.partialorder %v2500, 0.0
        %vm2557 = vcmp.eq.f32.partialorder %v2505, 0.0
        %vm2558 = vcmp.eq.f32.partialorder %v2510, 0.0
        %vm2559 = vcmp.eq.f32.partialorder %v2515, 0.0
        %vm2560 = vcmp.eq.f32.partialorder %v2520, 0.0
        %vm2561 = vcmp.eq.f32.partialorder %v2525, 0.0
        %vm2562 = vcmp.eq.f32.partialorder %v2530, 0.0
        %vm2563 = vcmp.eq.f32.partialorder %v2535, 0.0
        %vm2564 = vcmp.eq.f32.partialorder %v2540, 0.0
        %vm2565 = vcmp.eq.f32.partialorder %v2545, 0.0
        %vm2566 = vcmp.eq.f32.partialorder %v2550, 0.0
        %vm2567 = vmpackc.low %vm2554, %vm2553
        %vm2568 = vmpackc.low %vm2556, %vm2555
        %vm2569 = vmpackc.even %vm2568, %vm2567
        %vm2570 = vmpackc.low %vm2558, %vm2557
        %vm2571 = vmpackc.low %vm2560, %vm2559
        %vm2572 = vmpackc.even %vm2571, %vm2570
        %vm2573 = vmpackc.low %vm2562, %vm2561
        %vm2574 = vmpackc.low %vm2564, %vm2563
        %vm2575 = vmpackc.even %vm2574, %vm2573
        %vm2576 = vmpackc.low %vm2566, %vm2565
        %vm2577 = vmpackc.even %vm2576, %vm2576
        %v2578 = vsel %vm2569, 16843009, 0
        %v2579 = vsel %vm2572, 16843009, 0
        %v2580 = vsel %vm2575, 16843009, 0
        %v2581 = vsel %vm2577, 16843009, 0
        %v2582 = vunpack.c.0.s8 %v2578
        %v2583 = vunpack.c.1.s8 %v2578
        %v2584 = vunpack.c.2.s8 %v2578
        %v2585 = vunpack.c.3.s8 %v2578
        %v2586 = vunpack.c.0.s8 %v2579
        %v2587 = vunpack.c.1.s8 %v2579
        %v2588 = vunpack.c.2.s8 %v2579
        %v2589 = vunpack.c.3.s8 %v2579
        %v2590 = vunpack.c.0.s8 %v2580
        %v2591 = vunpack.c.1.s8 %v2580
        %v2592 = vunpack.c.2.s8 %v2580
        %v2593 = vunpack.c.3.s8 %v2580
        %v2594 = vunpack.c.0.s8 %v2581
        %v2595 = vunpack.c.1.s8 %v2581
        %v2596 = vpack.c.b16 %v2582, %v2582
        %v2597 = vpack.c.b8 %v2596, %v2596
        %v2598 = vpack.c.b16 %v2583, %v2583
        %v2599 = vpack.c.b8 %v2598, %v2598
        %v2600 = vpack.c.b16 %v2584, %v2584
        %v2601 = vpack.c.b8 %v2600, %v2600
        %v2602 = vpack.c.b16 %v2585, %v2585
        %v2603 = vpack.c.b8 %v2602, %v2602
        %v2604 = vpack.c.b16 %v2586, %v2586
        %v2605 = vpack.c.b8 %v2604, %v2604
        %v2606 = vpack.c.b16 %v2587, %v2587
        %v2607 = vpack.c.b8 %v2606, %v2606
        %v2608 = vpack.c.b16 %v2588, %v2588
        %v2609 = vpack.c.b8 %v2608, %v2608
        %v2610 = vpack.c.b16 %v2589, %v2589
        %v2611 = vpack.c.b8 %v2610, %v2610
        %v2612 = vpack.c.b16 %v2590, %v2590
        %v2613 = vpack.c.b8 %v2612, %v2612
        %v2614 = vpack.c.b16 %v2591, %v2591
        %v2615 = vpack.c.b8 %v2614, %v2614
        %v2616 = vpack.c.b16 %v2592, %v2592
        %v2617 = vpack.c.b8 %v2616, %v2616
        %v2618 = vpack.c.b16 %v2593, %v2593
        %v2619 = vpack.c.b8 %v2618, %v2618
        %v2620 = vpack.c.b16 %v2594, %v2594
        %v2621 = vpack.c.b8 %v2620, %v2620
        %v2622 = vpack.c.b16 %v2595, %v2595
        %v2623 = vpack.c.b8 %v2622, %v2622
        %vm2624 = vcmask 680960
        %2625 = vst.msk [vmem:[%s646] sm:$0x3] %vm2624, %v2597
        %2626 = vst.msk [vmem:[%s646 + $0x2] sm:$0x3] %vm2624, %v2599
        %2627 = vst.msk [vmem:[%s646 + $0x4] sm:$0x3] %vm2624, %v2601
        %2628 = vst.msk [vmem:[%s646 + $0x6] sm:$0x3] %vm2624, %v2603
        %2629 = vst.msk [vmem:[%s646 + $0x8] sm:$0x3] %vm2624, %v2605
        %2630 = vst.msk [vmem:[%s646 + $0xa] sm:$0x3] %vm2624, %v2607
        %2631 = vst.msk [vmem:[%s646 + $0xc] sm:$0x3] %vm2624, %v2609
        %2632 = vst.msk [vmem:[%s646 + $0xe] sm:$0x3] %vm2624, %v2611
        %2633 = vst.msk [vmem:[%s646 + $0x10] sm:$0x3] %vm2624, %v2613
        %2634 = vst.msk [vmem:[%s646 + $0x12] sm:$0x3] %vm2624, %v2615
        %2635 = vst.msk [vmem:[%s646 + $0x14] sm:$0x3] %vm2624, %v2617
        %2636 = vst.msk [vmem:[%s646 + $0x16] sm:$0x3] %vm2624, %v2619
        %2637 = vst.msk [vmem:[%s646 + $0x18] sm:$0x3] %vm2624, %v2621
        %2638 = vst.msk [vmem:[%s646 + $0x1a] sm:$0x3] %vm2624, %v2623
        %v2641 = vrot.slane %v2485, 1
        %v2642 = vrot.slane %v2490, 1
        %v2643 = vsel %vm889, %v2641, %v2642
        %2644 = vrot.lane.b32.xlu0 %v2643, 84
        %v2645 = vpop.permute.xlu0 %2644
        %2646 = vrot.lane.b32.xlu0 %v2642, 84
        %v2647 = vpop.permute.xlu0 %2646
        %v2650 = vrot.slane %v2485, 2
        %v2651 = vrot.slane %v2490, 2
        %v2652 = vsel %vm909, %v2650, %v2651
        %2653 = vrot.lane.b32.xlu0 %v2652, 40
        %v2654 = vpop.permute.xlu0 %2653
        %2655 = vrot.lane.b32.xlu0 %v2651, 40
        %v2656 = vpop.permute.xlu0 %2655
        %v2659 = vrot.slane %v2485, 3
        %v2660 = vrot.slane %v2490, 3
        %v2661 = vsel %vm929, %v2659, %v2660
        %2662 = vrot.lane.b32.xlu0 %v2661, 124
        %v2663 = vpop.permute.xlu0 %2662
        %2664 = vrot.lane.b32.xlu0 %v2660, 124
        %v2665 = vpop.permute.xlu0 %2664
        %v2668 = vrot.slane %v2485, 4
        %v2669 = vrot.slane %v2490, 4
        %v2670 = vsel %vm949, %v2668, %v2669
        %2671 = vrot.lane.b32.xlu0 %v2670, 80
        %v2672 = vpop.permute.xlu0 %2671
        %2673 = vrot.lane.b32.xlu0 %v2669, 80
        %v2674 = vpop.permute.xlu0 %2673
        %vm2677 = vcmask 687104
        %v2678 = vsel %vm2677, %v2485, %v2645
        %v2679 = vsel %vm2677, %v2490, %v2647
        %v2680 = vsel %vm2086, %v2645, %v2654
        %v2681 = vsel %vm2086, %v2647, %v2656
        %vm2682 = vcmask 1014784
        %v2683 = vsel %vm2682, %v2680, %v2663
        %v2684 = vsel %vm2682, %v2681, %v2665
        %vm2685 = vcmask 654336
        %v2686 = vsel %vm2685, %v2663, %v2672
        %v2687 = vsel %vm2685, %v2665, %v2674
        %v2690 = vrot.slane %v2495, 1
        %v2691 = vsel %vm889, %v2642, %v2690
        %v2692 = vrot.slane %v2500, 1
        %v2693 = vsel %vm889, %v2690, %v2692
        %2694 = vrot.lane.b32.xlu0 %v2691, 84
        %v2695 = vpop.permute.xlu0 %2694
        %2696 = vrot.lane.b32.xlu0 %v2693, 84
        %v2697 = vpop.permute.xlu0 %2696
        %v2700 = vrot.slane %v2495, 2
        %v2701 = vrot.slane %v2500, 2
        %v2702 = vsel %vm909, %v2700, %v2701
        %2703 = vrot.lane.b32.xlu0 %v2700, 40
        %v2704 = vpop.permute.xlu0 %2703
        %2705 = vrot.lane.b32.xlu0 %v2702, 40
        %v2706 = vpop.permute.xlu0 %2705
        %v2709 = vrot.slane %v2495, 3
        %v2710 = vrot.slane %v2500, 3
        %v2711 = vsel %vm929, %v2709, %v2710
        %2712 = vrot.lane.b32.xlu0 %v2709, 124
        %v2713 = vpop.permute.xlu0 %2712
        %2714 = vrot.lane.b32.xlu0 %v2711, 124
        %v2715 = vpop.permute.xlu0 %2714
        %v2718 = vrot.slane %v2495, 4
        %v2719 = vrot.slane %v2500, 4
        %v2720 = vsel %vm949, %v2718, %v2719
        %2721 = vrot.lane.b32.xlu0 %v2718, 80
        %v2722 = vpop.permute.xlu0 %2721
        %2723 = vrot.lane.b32.xlu0 %v2720, 80
        %v2724 = vpop.permute.xlu0 %2723
        %v2727 = vsel %vm2677, %v2490, %v2695
        %v2728 = vsel %vm2677, %v2495, %v2697
        %v2729 = vsel %vm2086, %v2695, %v2704
        %v2730 = vsel %vm2086, %v2697, %v2706
        %v2731 = vsel %vm2682, %v2729, %v2713
        %v2732 = vsel %vm2682, %v2730, %v2715
        %v2733 = vsel %vm2685, %v2713, %v2722
        %v2734 = vsel %vm2685, %v2715, %v2724
        %v2736 = vrot.slane %v2505, 1
        %v2737 = vsel %vm889, %v2692, %v2736
        %2738 = vrot.lane.b32.xlu0 %v2737, 84
        %v2739 = vpop.permute.xlu0 %2738
        %2740 = vrot.lane.b32.xlu0 %v2736, 84
        %v2741 = vpop.permute.xlu0 %2740
        %v2744 = vrot.slane %v2505, 2
        %v2745 = vsel %vm909, %v2701, %v2744
        %2746 = vrot.lane.b32.xlu0 %v2745, 40
        %v2747 = vpop.permute.xlu0 %2746
        %2748 = vrot.lane.b32.xlu0 %v2744, 40
        %v2749 = vpop.permute.xlu0 %2748
        %v2753 = vrot.slane %v2505, 3
        %v2754 = vsel %vm929, %v2710, %v2753
        %v2755 = vrot.slane %v2510, 3
        %v2756 = vsel %vm929, %v2753, %v2755
        %2757 = vrot.lane.b32.xlu0 %v2754, 124
        %v2758 = vpop.permute.xlu0 %2757
        %2759 = vrot.lane.b32.xlu0 %v2756, 124
        %v2760 = vpop.permute.xlu0 %2759
        %v2763 = vrot.slane %v2505, 4
        %v2764 = vrot.slane %v2510, 4
        %v2765 = vsel %vm949, %v2763, %v2764
        %2766 = vrot.lane.b32.xlu0 %v2763, 80
        %v2767 = vpop.permute.xlu0 %2766
        %2768 = vrot.lane.b32.xlu0 %v2765, 80
        %v2769 = vpop.permute.xlu0 %2768
        %v2772 = vsel %vm2677, %v2500, %v2739
        %v2773 = vsel %vm2677, %v2505, %v2741
        %v2774 = vsel %vm2086, %v2739, %v2747
        %v2775 = vsel %vm2086, %v2741, %v2749
        %v2776 = vsel %vm2682, %v2774, %v2758
        %v2777 = vsel %vm2682, %v2775, %v2760
        %v2778 = vsel %vm2685, %v2758, %v2767
        %v2779 = vsel %vm2685, %v2760, %v2769
        %v2781 = vrot.slane %v2510, 1
        %v2782 = vrot.slane %v2515, 1
        %v2783 = vsel %vm889, %v2781, %v2782
        %2784 = vrot.lane.b32.xlu0 %v2783, 84
        %v2785 = vpop.permute.xlu0 %2784
        %2786 = vrot.lane.b32.xlu0 %v2782, 84
        %v2787 = vpop.permute.xlu0 %2786
        %v2790 = vrot.slane %v2510, 2
        %v2791 = vrot.slane %v2515, 2
        %v2792 = vsel %vm909, %v2790, %v2791
        %2793 = vrot.lane.b32.xlu0 %v2792, 40
        %v2794 = vpop.permute.xlu0 %2793
        %2795 = vrot.lane.b32.xlu0 %v2791, 40
        %v2796 = vpop.permute.xlu0 %2795
        %v2799 = vrot.slane %v2515, 3
        %v2800 = vsel %vm929, %v2755, %v2799
        %2801 = vrot.lane.b32.xlu0 %v2800, 124
        %v2802 = vpop.permute.xlu0 %2801
        %2803 = vrot.lane.b32.xlu0 %v2799, 124
        %v2804 = vpop.permute.xlu0 %2803
        %v2807 = vrot.slane %v2515, 4
        %v2808 = vsel %vm949, %v2764, %v2807
        %2809 = vrot.lane.b32.xlu0 %v2808, 80
        %v2810 = vpop.permute.xlu0 %2809
        %2811 = vrot.lane.b32.xlu0 %v2807, 80
        %v2812 = vpop.permute.xlu0 %2811
        %v2815 = vsel %vm2677, %v2510, %v2785
        %v2816 = vsel %vm2677, %v2515, %v2787
        %v2817 = vsel %vm2086, %v2785, %v2794
        %v2818 = vsel %vm2086, %v2787, %v2796
        %v2819 = vsel %vm2682, %v2817, %v2802
        %v2820 = vsel %vm2682, %v2818, %v2804
        %v2821 = vsel %vm2685, %v2802, %v2810
        %v2822 = vsel %vm2685, %v2804, %v2812
        %v2825 = vrot.slane %v2520, 1
        %v2826 = vrot.slane %v2525, 1
        %v2827 = vsel %vm889, %v2825, %v2826
        %2828 = vrot.lane.b32.xlu0 %v2827, 84
        %v2829 = vpop.permute.xlu0 %2828
        %2830 = vrot.lane.b32.xlu0 %v2826, 84
        %v2831 = vpop.permute.xlu0 %2830
        %v2834 = vrot.slane %v2520, 2
        %v2835 = vrot.slane %v2525, 2
        %v2836 = vsel %vm909, %v2834, %v2835
        %2837 = vrot.lane.b32.xlu0 %v2836, 40
        %v2838 = vpop.permute.xlu0 %2837
        %2839 = vrot.lane.b32.xlu0 %v2835, 40
        %v2840 = vpop.permute.xlu0 %2839
        %v2843 = vrot.slane %v2520, 3
        %v2844 = vrot.slane %v2525, 3
        %v2845 = vsel %vm929, %v2843, %v2844
        %2846 = vrot.lane.b32.xlu0 %v2845, 124
        %v2847 = vpop.permute.xlu0 %2846
        %2848 = vrot.lane.b32.xlu0 %v2844, 124
        %v2849 = vpop.permute.xlu0 %2848
        %v2852 = vrot.slane %v2520, 4
        %v2853 = vrot.slane %v2525, 4
        %v2854 = vsel %vm949, %v2852, %v2853
        %2855 = vrot.lane.b32.xlu0 %v2854, 80
        %v2856 = vpop.permute.xlu0 %2855
        %2857 = vrot.lane.b32.xlu0 %v2853, 80
        %v2858 = vpop.permute.xlu0 %2857
        %v2861 = vsel %vm2677, %v2520, %v2829
        %v2862 = vsel %vm2677, %v2525, %v2831
        %v2863 = vsel %vm2086, %v2829, %v2838
        %v2864 = vsel %vm2086, %v2831, %v2840
        %v2865 = vsel %vm2682, %v2863, %v2847
        %v2866 = vsel %vm2682, %v2864, %v2849
        %v2867 = vsel %vm2685, %v2847, %v2856
        %v2868 = vsel %vm2685, %v2849, %v2858
        %v2871 = vrot.slane %v2530, 1
        %v2872 = vsel %vm889, %v2826, %v2871
        %v2873 = vrot.slane %v2535, 1
        %v2874 = vsel %vm889, %v2871, %v2873
        %2875 = vrot.lane.b32.xlu0 %v2872, 84
        %v2876 = vpop.permute.xlu0 %2875
        %2877 = vrot.lane.b32.xlu0 %v2874, 84
        %v2878 = vpop.permute.xlu0 %2877
        %v2881 = vrot.slane %v2530, 2
        %v2882 = vrot.slane %v2535, 2
        %v2883 = vsel %vm909, %v2881, %v2882
        %2884 = vrot.lane.b32.xlu0 %v2881, 40
        %v2885 = vpop.permute.xlu0 %2884
        %2886 = vrot.lane.b32.xlu0 %v2883, 40
        %v2887 = vpop.permute.xlu0 %2886
        %v2890 = vrot.slane %v2530, 3
        %v2891 = vrot.slane %v2535, 3
        %v2892 = vsel %vm929, %v2890, %v2891
        %2893 = vrot.lane.b32.xlu0 %v2890, 124
        %v2894 = vpop.permute.xlu0 %2893
        %2895 = vrot.lane.b32.xlu0 %v2892, 124
        %v2896 = vpop.permute.xlu0 %2895
        %v2899 = vrot.slane %v2530, 4
        %v2900 = vrot.slane %v2535, 4
        %v2901 = vsel %vm949, %v2899, %v2900
        %2902 = vrot.lane.b32.xlu0 %v2899, 80
        %v2903 = vpop.permute.xlu0 %2902
        %2904 = vrot.lane.b32.xlu0 %v2901, 80
        %v2905 = vpop.permute.xlu0 %2904
        %v2908 = vsel %vm2677, %v2525, %v2876
        %v2909 = vsel %vm2677, %v2530, %v2878
        %v2910 = vsel %vm2086, %v2876, %v2885
        %v2911 = vsel %vm2086, %v2878, %v2887
        %v2912 = vsel %vm2682, %v2910, %v2894
        %v2913 = vsel %vm2682, %v2911, %v2896
        %v2914 = vsel %vm2685, %v2894, %v2903
        %v2915 = vsel %vm2685, %v2896, %v2905
        %v2917 = vrot.slane %v2540, 1
        %v2918 = vsel %vm889, %v2873, %v2917
        %2919 = vrot.lane.b32.xlu0 %v2918, 84
        %v2920 = vpop.permute.xlu0 %2919
        %2921 = vrot.lane.b32.xlu0 %v2917, 84
        %v2922 = vpop.permute.xlu0 %2921
        %v2925 = vrot.slane %v2540, 2
        %v2926 = vsel %vm909, %v2882, %v2925
        %2927 = vrot.lane.b32.xlu0 %v2926, 40
        %v2928 = vpop.permute.xlu0 %2927
        %2929 = vrot.lane.b32.xlu0 %v2925, 40
        %v2930 = vpop.permute.xlu0 %2929
        %v2934 = vrot.slane %v2540, 3
        %v2935 = vsel %vm929, %v2891, %v2934
        %v2936 = vrot.slane %v2545, 3
        %v2937 = vsel %vm929, %v2934, %v2936
        %2938 = vrot.lane.b32.xlu0 %v2935, 124
        %v2939 = vpop.permute.xlu0 %2938
        %2940 = vrot.lane.b32.xlu0 %v2937, 124
        %v2941 = vpop.permute.xlu0 %2940
        %v2944 = vrot.slane %v2540, 4
        %v2945 = vrot.slane %v2545, 4
        %v2946 = vsel %vm949, %v2944, %v2945
        %2947 = vrot.lane.b32.xlu0 %v2944, 80
        %v2948 = vpop.permute.xlu0 %2947
        %2949 = vrot.lane.b32.xlu0 %v2946, 80
        %v2950 = vpop.permute.xlu0 %2949
        %v2953 = vsel %vm2677, %v2535, %v2920
        %v2954 = vsel %vm2677, %v2540, %v2922
        %v2955 = vsel %vm2086, %v2920, %v2928
        %v2956 = vsel %vm2086, %v2922, %v2930
        %v2957 = vsel %vm2682, %v2955, %v2939
        %v2958 = vsel %vm2682, %v2956, %v2941
        %v2959 = vsel %vm2685, %v2939, %v2948
        %v2960 = vsel %vm2685, %v2941, %v2950
        %v2962 = vrot.slane %v2545, 1
        %v2963 = vrot.slane %v2550, 1
        %v2964 = vsel %vm889, %v2962, %v2963
        %2965 = vrot.lane.b32.xlu0 %v2964, 84
        %v2966 = vpop.permute.xlu0 %2965
        %2967 = vrot.lane.b32.xlu0 %v2963, 84
        %v2968 = vpop.permute.xlu0 %2967
        %v2971 = vrot.slane %v2545, 2
        %v2972 = vrot.slane %v2550, 2
        %v2973 = vsel %vm909, %v2971, %v2972
        %2974 = vrot.lane.b32.xlu0 %v2973, 40
        %v2975 = vpop.permute.xlu0 %2974
        %2976 = vrot.lane.b32.xlu0 %v2972, 40
        %v2977 = vpop.permute.xlu0 %2976
        %v2980 = vrot.slane %v2550, 3
        %v2981 = vsel %vm929, %v2936, %v2980
        %2982 = vrot.lane.b32.xlu0 %v2981, 124
        %v2983 = vpop.permute.xlu0 %2982
        %2984 = vrot.lane.b32.xlu0 %v2980, 124
        %v2985 = vpop.permute.xlu0 %2984
        %v2988 = vrot.slane %v2550, 4
        %v2989 = vsel %vm949, %v2945, %v2988
        %2990 = vrot.lane.b32.xlu0 %v2989, 80
        %v2991 = vpop.permute.xlu0 %2990
        %2992 = vrot.lane.b32.xlu0 %v2988, 80
        %v2993 = vpop.permute.xlu0 %2992
        %v2996 = vsel %vm2677, %v2545, %v2966
        %v2997 = vsel %vm2677, %v2550, %v2968
        %v2998 = vsel %vm2086, %v2966, %v2975
        %v2999 = vsel %vm2086, %v2968, %v2977
        %v3000 = vsel %vm2682, %v2998, %v2983
        %v3001 = vsel %vm2682, %v2999, %v2985
        %v3002 = vsel %vm2685, %v2983, %v2991
        %v3003 = vsel %vm2685, %v2985, %v2993
        %v3010 = vrot.slane %v2727, 4
        %v3011 = vrot.slane %v2728, 4
        %v3012 = vsel %vm949, %v3010, %v3011
        %v3013 = vrot.slane %v2731, 4
        %v3014 = vrot.slane %v2732, 4
        %v3015 = vsel %vm949, %v3013, %v3014
        %v3016 = vrot.slane %v2733, 4
        %v3017 = vrot.slane %v2734, 4
        %v3018 = vsel %vm949, %v3016, %v3017
        %v3019 = vrot.slane %v2722, 4
        %v3020 = vrot.slane %v2724, 4
        %v3021 = vsel %vm949, %v3019, %v3020
        %v3036 = vrot.slane %v2815, 4
        %v3037 = vrot.slane %v2819, 4
        %v3038 = vrot.slane %v2821, 4
        %v3039 = vrot.slane %v2810, 4
        %v3040 = vrot.slane %v2816, 4
        %v3041 = vsel %vm949, %v3036, %v3040
        %v3042 = vrot.slane %v2820, 4
        %v3043 = vsel %vm949, %v3037, %v3042
        %v3044 = vrot.slane %v2822, 4
        %v3045 = vsel %vm949, %v3038, %v3044
        %v3046 = vrot.slane %v2812, 4
        %v3047 = vsel %vm949, %v3039, %v3046
        %v3061 = vrot.slane %v2908, 4
        %v3062 = vrot.slane %v2909, 4
        %v3063 = vsel %vm949, %v3061, %v3062
        %v3064 = vrot.slane %v2912, 4
        %v3065 = vrot.slane %v2913, 4
        %v3066 = vsel %vm949, %v3064, %v3065
        %v3067 = vrot.slane %v2914, 4
        %v3068 = vrot.slane %v2915, 4
        %v3069 = vsel %vm949, %v3067, %v3068
        %v3070 = vrot.slane %v2903, 4
        %v3071 = vrot.slane %v2905, 4
        %v3072 = vsel %vm949, %v3070, %v3071
        %v3087 = vrot.slane %v2996, 4
        %v3088 = vrot.slane %v3000, 4
        %v3089 = vrot.slane %v3002, 4
        %v3090 = vrot.slane %v2991, 4
        %v3091 = vrot.slane %v2997, 4
        %v3092 = vsel %vm949, %v3087, %v3091
        %v3093 = vrot.slane %v3001, 4
        %v3094 = vsel %vm949, %v3088, %v3093
        %v3095 = vrot.slane %v3003, 4
        %v3096 = vsel %vm949, %v3089, %v3095
        %v3097 = vrot.slane %v2993, 4
        %v3098 = vsel %vm949, %v3090, %v3097
        %vm3106 = vcmask 1041408
        %v3107 = vsel %vm3106, %v2679, %v3012
        %v3108 = vsel %vm3106, %v2684, %v3015
        %v3109 = vsel %vm3106, %v2687, %v3018
        %v3110 = vsel %vm3106, %v2674, %v3021
        %v3111 = vsel %vm949, %v3011, %v2772
        %v3112 = vsel %vm949, %v3014, %v2776
        %v3113 = vsel %vm949, %v3017, %v2778
        %v3114 = vsel %vm949, %v3020, %v2767
        %v3115 = vsel %vm909, %v2773, %v3036
        %v3116 = vsel %vm909, %v2777, %v3037
        %v3117 = vsel %vm909, %v2779, %v3038
        %v3118 = vsel %vm909, %v2769, %v3039
        %v3119 = vsel %vm3106, %v2862, %v3063
        %v3120 = vsel %vm3106, %v2866, %v3066
        %v3121 = vsel %vm3106, %v2868, %v3069
        %v3122 = vsel %vm3106, %v2858, %v3072
        %v3123 = vsel %vm949, %v3062, %v2953
        %v3124 = vsel %vm949, %v3065, %v2957
        %v3125 = vsel %vm949, %v3068, %v2959
        %v3126 = vsel %vm949, %v3071, %v2948
        %v3127 = vsel %vm909, %v2954, %v3087
        %v3128 = vsel %vm909, %v2958, %v3088
        %v3129 = vsel %vm909, %v2960, %v3089
        %v3130 = vsel %vm909, %v2950, %v3090
        %v3131 = vld [vmem:[%s5] sm:$0xff]
        %v3132 = vld [vmem:[%s5 + $0x8] sm:$0xff]
        %v3133 = vld [vmem:[%s5 + $0x10] sm:$0xff]
        %v3134 = vld [vmem:[%s5 + $0x18] sm:$0xff]
        %v3135 = vld [vmem:[%s5 + $0x20] sm:$0xff]
        %v3136 = vld [vmem:[%s5 + $0x28] sm:$0xff]
        %v3137 = vld [vmem:[%s5 + $0x30] sm:$0xff]
        %v3138 = vld [vmem:[%s5 + $0x38] sm:$0xff]
        %v3139 = vld [vmem:[%s5 + $0x40] sm:$0xff]
        %v3140 = vld [vmem:[%s5 + $0x48] sm:$0xff]
        %v3141 = vld [vmem:[%s5 + $0x50] sm:$0xff]
        %v3142 = vld [vmem:[%s5 + $0x58] sm:$0xff]
        %v3143 = vld [vmem:[%s5 + $0x60] sm:$0xff]
        %v3144 = vld [vmem:[%s5 + $0x68] sm:$0xff]
        %v3145 = vld [vmem:[%s5 + $0x70] sm:$0xff]
        %v3146 = vld [vmem:[%s5 + $0x78] sm:$0xff]
        %v3147 = vld [vmem:[%s5 + $0x80] sm:$0xff]
        %v3148 = vld [vmem:[%s5 + $0x88] sm:$0xff]
        %v3149 = vld [vmem:[%s5 + $0x90] sm:$0xff]
        %v3150 = vld [vmem:[%s5 + $0x98] sm:$0xff]
        %v3151 = vld [vmem:[%s5 + $0xa0] sm:$0xff]
        %v3152 = vld [vmem:[%s5 + $0xa8] sm:$0xff]
        %v3153 = vld [vmem:[%s5 + $0xb0] sm:$0xff]
        %v3154 = vld [vmem:[%s5 + $0xb8] sm:$0xff]
        %v3155 = vld [vmem:[%s5 + $0xc0] sm:$0xff]
        %v3156 = vld [vmem:[%s5 + $0xc8] sm:$0xff]
        %v3157 = vld [vmem:[%s5 + $0xd0] sm:$0xff]
        %v3158 = vld [vmem:[%s5 + $0xd8] sm:$0xff]
        %v3159 = vld [vmem:[%s5 + $0xe0] sm:$0xff]
        %v3160 = vld [vmem:[%s5 + $0xe8] sm:$0xff]
        %v3161 = vld [vmem:[%s5 + $0xf0] sm:$0xff]
        %v3162 = vld [vmem:[%s5 + $0xf8] sm:$0xff]
        %v3163 = vld [vmem:[%s5 + $0x100] sm:$0xff]
        %v3164 = vld [vmem:[%s5 + $0x108] sm:$0xff]
        %v3165 = vld [vmem:[%s5 + $0x110] sm:$0xff]
        %v3166 = vld [vmem:[%s5 + $0x118] sm:$0xff]
        %v3167 = vld [vmem:[%s5 + $0x120] sm:$0xff]
        %v3168 = vld [vmem:[%s5 + $0x128] sm:$0xff]
        %v3169 = vld [vmem:[%s5 + $0x130] sm:$0xff]
        %v3170 = vld [vmem:[%s5 + $0x138] sm:$0xff]
        %v3171 = vld [vmem:[%s5 + $0x140] sm:$0xff]
        %v3172 = vld [vmem:[%s5 + $0x148] sm:$0xff]
        %v3173 = vld [vmem:[%s5 + $0x150] sm:$0xff]
        %v3174 = vld [vmem:[%s5 + $0x158] sm:$0xff]
        %v3175 = vld [vmem:[%s5 + $0x160] sm:$0xff]
        %v3176 = vld [vmem:[%s5 + $0x168] sm:$0xff]
        %v3177 = vld [vmem:[%s5 + $0x170] sm:$0xff]
        %v3178 = vld [vmem:[%s5 + $0x178] sm:$0xff]
        %v3179 = vld [vmem:[%s5 + $0x180] sm:$0xff]
        %v3180 = vld [vmem:[%s5 + $0x188] sm:$0xff]
        %v3181 = vld [vmem:[%s5 + $0x190] sm:$0xff]
        %v3182 = vld [vmem:[%s5 + $0x198] sm:$0xff]
        %v3183 = vld [vmem:[%s5 + $0x1a0] sm:$0xff]
        %v3184 = vld [vmem:[%s5 + $0x1a8] sm:$0xff]
        %v3185 = vld [vmem:[%s5 + $0x1b0] sm:$0xff]
        %v3186 = vld [vmem:[%s5 + $0x1b8] sm:$0xff]
        %v3187 = vld [vmem:[%s5 + $0x1c0] sm:$0xff]
        %v3188 = vld [vmem:[%s5 + $0x1c8] sm:$0xff]
        %v3189 = vld [vmem:[%s5 + $0x1d0] sm:$0xff]
        %v3190 = vld [vmem:[%s5 + $0x1d8] sm:$0xff]
        %v3191 = vld [vmem:[%s5 + $0x1e0] sm:$0xff]
        %v3192 = vld [vmem:[%s5 + $0x1e8] sm:$0xff]
        %v3193 = vld [vmem:[%s5 + $0x1f0] sm:$0xff]
        %v3194 = vld [vmem:[%s5 + $0x1f8] sm:$0xff]
        %v3195 = vld [vmem:[%s5 + $0x200] sm:$0xff]
        %v3196 = vld [vmem:[%s5 + $0x208] sm:$0xff]
        %v3197 = vld [vmem:[%s5 + $0x210] sm:$0xff]
        %v3198 = vld [vmem:[%s5 + $0x218] sm:$0xff]
        %v3199 = vld [vmem:[%s5 + $0x220] sm:$0xff]
        %v3200 = vld [vmem:[%s5 + $0x228] sm:$0xff]
        %v3201 = vld [vmem:[%s5 + $0x230] sm:$0xff]
        %v3202 = vld [vmem:[%s5 + $0x238] sm:$0xff]
        %v3203 = vld [vmem:[%s5 + $0x240] sm:$0xff]
        %v3204 = vld [vmem:[%s5 + $0x248] sm:$0xff]
        %v3205 = vld [vmem:[%s5 + $0x250] sm:$0xff]
        %v3206 = vld [vmem:[%s5 + $0x258] sm:$0xff]
        %v3207 = vld [vmem:[%s5 + $0x260] sm:$0xff]
        %v3208 = vld [vmem:[%s5 + $0x268] sm:$0xff]
        %v3209 = vld [vmem:[%s5 + $0x270] sm:$0xff]
        %v3210 = vld [vmem:[%s5 + $0x278] sm:$0xff]
        %v3211 = vld [vmem:[%s5 + $0x280] sm:$0xff]
        %v3212 = vld [vmem:[%s5 + $0x288] sm:$0xff]
        %v3213 = vld [vmem:[%s5 + $0x290] sm:$0xff]
        %v3214 = vld [vmem:[%s5 + $0x298] sm:$0xff]
        %v3215 = vld [vmem:[%s5 + $0x2a0] sm:$0xff]
        %v3216 = vld [vmem:[%s5 + $0x2a8] sm:$0xff]
        %v3217 = vld [vmem:[%s5 + $0x2b0] sm:$0xff]
        %v3218 = vld [vmem:[%s5 + $0x2b8] sm:$0xff]
        %v3219 = vld [vmem:[%s5 + $0x2c0] sm:$0xff]
        %v3220 = vld [vmem:[%s5 + $0x2c8] sm:$0xff]
        %v3221 = vld [vmem:[%s5 + $0x2d0] sm:$0xff]
        %v3222 = vld [vmem:[%s5 + $0x2d8] sm:$0xff]
        %v3223 = vld [vmem:[%s5 + $0x2e0] sm:$0xff]
        %v3224 = vld [vmem:[%s5 + $0x2e8] sm:$0xff]
        %v3225 = vld [vmem:[%s5 + $0x2f0] sm:$0xff]
        %v3226 = vld [vmem:[%s5 + $0x2f8] sm:$0xff]
        %v3227 = vld [vmem:[%s5 + $0x300] sm:$0xff]
        %v3228 = vld [vmem:[%s5 + $0x308] sm:$0xff]
        %v3229 = vld [vmem:[%s5 + $0x310] sm:$0xff]
        %v3230 = vld [vmem:[%s5 + $0x318] sm:$0xff]
        %v3231 = vld [vmem:[%s5 + $0x320] sm:$0xff]
        %v3232 = vld [vmem:[%s5 + $0x328] sm:$0xff]
        %v3233 = vld [vmem:[%s5 + $0x330] sm:$0xff]
        %v3234 = vld [vmem:[%s5 + $0x338] sm:$0xff]
        %v3235 = vld [vmem:[%s5 + $0x340] sm:$0xf]
        %v3236 = vld [vmem:[%s5 + $0x348] sm:$0xf]
        %v3237 = vld [vmem:[%s6] sm:$0x3]
        %v3239 = vlaneseq
        %v3240 = vshrl.u32 %v3239, 7
        %v3241 = vsub.s32 0, %v3240
        %v3242 = vrot.slane %v3237, %v3241
        %v3243 = vlaneseq
        %v3244 = vshrl.u32 %v3243, 7
        %v3245 = vsub.s32 1, %v3244
        %v3246 = vrot.slane %v3237, %v3245
        %vm3249 = vcmask 293888
        %v3250 = vsel %vm3249, %v2672, 0
        %v3253 = vsel %vm3249, %v3110, 0
        %v3256 = vsel %vm3249, %v3114, 0
        %v3259 = vsel %vm3249, %v3118, 0
        %v3261 = vsel %vm3249, %v3047, 0
        %v3263 = vsel %vm3249, %v2856, 0
        %v3266 = vsel %vm3249, %v3122, 0
        %v3269 = vsel %vm3249, %v3126, 0
        %v3272 = vsel %vm3249, %v3130, 0
        %v3274 = vsel %vm3249, %v3098, 0
        %v3277 = vsel %vm949, %v3235, 0
        %v3280 = vsel %vm949, %v3236, 0
        %3282 = vmatprep.subr.mxu0 %v3162
        %3283 = vmatpush1.msra.mxu0 %v3161
        %3284 = vmatprep.subr.mxu0 %v3160
        %3285 = vmatpush1.msra.mxu0 %v3159
        %3286 = vmatprep.subr.mxu0 %v3158
        %3287 = vmatpush1.msra.mxu0 %v3157
        %3288 = vmatprep.subr.mxu0 %v3156
        %3289 = vmatpush1.msra.mxu0 %v3155
        %3290 = vmatprep.subr.mxu0 %v3154
        %3291 = vmatpush1.msra.mxu0 %v3153
        %3292 = vmatprep.subr.mxu0 %v3152
        %3293 = vmatpush1.msra.mxu0 %v3151
        %3294 = vmatprep.subr.mxu0 %v3150
        %3295 = vmatpush1.msra.mxu0 %v3149
        %3296 = vmatprep.subr.mxu0 %v3148
        %3297 = vmatpush1.msra.mxu0 %v3147
        %3298 = vmatprep.subr.mxu0 %v3146
        %3299 = vmatpush1.msra.mxu0 %v3145
        %3300 = vmatprep.subr.mxu0 %v3144
        %3301 = vmatpush1.msra.mxu0 %v3143
        %3302 = vmatprep.subr.mxu0 %v3142
        %3303 = vmatpush1.msra.mxu0 %v3141
        %3304 = vmatprep.subr.mxu0 %v3140
        %3305 = vmatpush1.msra.mxu0 %v3139
        %3306 = vmatprep.subr.mxu0 %v3138
        %3307 = vmatpush1.msra.mxu0 %v3137
        %3308 = vmatprep.subr.mxu0 %v3136
        %3309 = vmatpush1.msra.mxu0 %v3135
        %3310 = vmatprep.subr.mxu0 %v3134
        %3311 = vmatpush1.msra.mxu0 %v3133
        %3312 = vmatprep.subr.mxu0 %v3132
        %3313 = vmatpush1.msra.mxu0 %v3131
        %3314 = vmatprep.subr.mxu0 %v3194
        %3315 = vmatpush2.msra.mxu0 %v3193
        %3316 = vmatprep.subr.mxu0 %v3192
        %3317 = vmatpush2.msra.mxu0 %v3191
        %3318 = vmatprep.subr.mxu0 %v3190
        %3319 = vmatpush2.msra.mxu0 %v3189
        %3320 = vmatprep.subr.mxu0 %v3188
        %3321 = vmatpush2.msra.mxu0 %v3187
        %3322 = vmatprep.subr.mxu0 %v3186
        %3323 = vmatpush2.msra.mxu0 %v3185
        %3324 = vmatprep.subr.mxu0 %v3184
        %3325 = vmatpush2.msra.mxu0 %v3183
        %3326 = vmatprep.subr.mxu0 %v3182
        %3327 = vmatpush2.msra.mxu0 %v3181
        %3328 = vmatprep.subr.mxu0 %v3180
        %3329 = vmatpush2.msra.mxu0 %v3179
        %3330 = vmatprep.subr.mxu0 %v3178
        %3331 = vmatpush2.msra.mxu0 %v3177
        %3332 = vmatprep.subr.mxu0 %v3176
        %3333 = vmatpush2.msra.mxu0 %v3175
        %3334 = vmatprep.subr.mxu0 %v3174
        %3335 = vmatpush2.msra.mxu0 %v3173
        %3336 = vmatprep.subr.mxu0 %v3172
        %3337 = vmatpush2.msra.mxu0 %v3171
        %3338 = vmatprep.subr.mxu0 %v3170
        %3339 = vmatpush2.msra.mxu0 %v3169
        %3340 = vmatprep.subr.mxu0 %v3168
        %3341 = vmatpush2.msra.mxu0 %v3167
        %3342 = vmatprep.subr.mxu0 %v3166
        %3343 = vmatpush2.msra.mxu0 %v3165
        %3344 = vmatprep.subr.mxu0 %v3164
        %3345 = vmatpush2.msra.mxu0 %v3163
        %3346 = vmatprep.mubr.f32.mxu0 %v2683
        %3347 = vmatmul.mubr.f32.gmra.mxu0 %v2678
        %v3348 = vpop.f32.mrf.mxu0
        %v3349 = vadd.f32 %v3242, %v3348
        %v3350 = vpop.f32.mrf.mxu0
        %v3351 = vadd.f32 %v3246, %v3350
        %3352 = vmatprep.mubr.f32.mxu0 %v3108
        %3353 = vmatmul.mubr.f32.gmra.mxu0 %v3107
        %v3354 = vpop.f32.mrf.mxu0
        %v3355 = vadd.f32 %v3242, %v3354
        %v3356 = vpop.f32.mrf.mxu0
        %v3357 = vadd.f32 %v3246, %v3356
        %3358 = vmatprep.mubr.f32.mxu0 %v3112
        %3359 = vmatmul.mubr.f32.gmra.mxu0 %v3111
        %v3360 = vpop.f32.mrf.mxu0
        %v3361 = vadd.f32 %v3242, %v3360
        %v3362 = vpop.f32.mrf.mxu0
        %v3363 = vadd.f32 %v3246, %v3362
        %3364 = vmatprep.mubr.f32.mxu0 %v3116
        %3365 = vmatmul.mubr.f32.gmra.mxu0 %v3115
        %v3366 = vpop.f32.mrf.mxu0
        %v3367 = vadd.f32 %v3242, %v3366
        %v3368 = vpop.f32.mrf.mxu0
        %v3369 = vadd.f32 %v3246, %v3368
        %3370 = vmatprep.mubr.f32.mxu0 %v3043
        %3371 = vmatmul.mubr.f32.gmra.mxu0 %v3041
        %v3372 = vpop.f32.mrf.mxu0
        %v3373 = vadd.f32 %v3242, %v3372
        %v3374 = vpop.f32.mrf.mxu0
        %v3375 = vadd.f32 %v3246, %v3374
        %3376 = vmatprep.mubr.f32.mxu0 %v2865
        %3377 = vmatmul.mubr.f32.gmra.mxu0 %v2861
        %v3378 = vpop.f32.mrf.mxu0
        %v3379 = vadd.f32 %v3242, %v3378
        %v3380 = vpop.f32.mrf.mxu0
        %v3381 = vadd.f32 %v3246, %v3380
        %3382 = vmatprep.mubr.f32.mxu0 %v3120
        %3383 = vmatmul.mubr.f32.gmra.mxu0 %v3119
        %v3384 = vpop.f32.mrf.mxu0
        %v3385 = vadd.f32 %v3242, %v3384
        %v3386 = vpop.f32.mrf.mxu0
        %v3387 = vadd.f32 %v3246, %v3386
        %3388 = vmatprep.mubr.f32.mxu0 %v3124
        %3389 = vmatmul.mubr.f32.gmra.mxu0 %v3123
        %v3390 = vpop.f32.mrf.mxu0
        %v3391 = vadd.f32 %v3242, %v3390
        %v3392 = vpop.f32.mrf.mxu0
        %v3393 = vadd.f32 %v3246, %v3392
        %3394 = vmatprep.mubr.f32.mxu0 %v3128
        %3395 = vmatmul.mubr.f32.gmra.mxu0 %v3127
        %v3396 = vpop.f32.mrf.mxu0
        %v3397 = vadd.f32 %v3242, %v3396
        %v3398 = vpop.f32.mrf.mxu0
        %v3399 = vadd.f32 %v3246, %v3398
        %3400 = vmatprep.mubr.f32.mxu0 %v3094
        %3401 = vmatmul.mubr.f32.gmra.mxu0 %v3092
        %v3402 = vpop.f32.mrf.mxu0
        %v3403 = vadd.f32 %v3242, %v3402
        %v3404 = vpop.f32.mrf.mxu0
        %v3405 = vadd.f32 %v3246, %v3404
        %3406 = vdwg.mxu0
        %3407 = vmatprep.subr.mxu0 %v3226
        %3408 = vmatpush1.msra.mxu0 %v3225
        %3409 = vmatprep.subr.mxu0 %v3224
        %3410 = vmatpush1.msra.mxu0 %v3223
        %3411 = vmatprep.subr.mxu0 %v3222
        %3412 = vmatpush1.msra.mxu0 %v3221
        %3413 = vmatprep.subr.mxu0 %v3220
        %3414 = vmatpush1.msra.mxu0 %v3219
        %3415 = vmatprep.subr.mxu0 %v3218
        %3416 = vmatpush1.msra.mxu0 %v3217
        %3417 = vmatprep.subr.mxu0 %v3216
        %3418 = vmatpush1.msra.mxu0 %v3215
        %3419 = vmatprep.subr.mxu0 %v3214
        %3420 = vmatpush1.msra.mxu0 %v3213
        %3421 = vmatprep.subr.mxu0 %v3212
        %3422 = vmatpush1.msra.mxu0 %v3211
        %3423 = vmatprep.subr.mxu0 %v3210
        %3424 = vmatpush1.msra.mxu0 %v3209
        %3425 = vmatprep.subr.mxu0 %v3208
        %3426 = vmatpush1.msra.mxu0 %v3207
        %3427 = vmatprep.subr.mxu0 %v3206
        %3428 = vmatpush1.msra.mxu0 %v3205
        %3429 = vmatprep.subr.mxu0 %v3204
        %3430 = vmatpush1.msra.mxu0 %v3203
        %3431 = vmatprep.subr.mxu0 %v3202
        %3432 = vmatpush1.msra.mxu0 %v3201
        %3433 = vmatprep.subr.mxu0 %v3200
        %3434 = vmatpush1.msra.mxu0 %v3199
        %3435 = vmatprep.subr.mxu0 %v3198
        %3436 = vmatpush1.msra.mxu0 %v3197
        %3437 = vmatprep.subr.mxu0 %v3196
        %3438 = vmatpush1.msra.mxu0 %v3195
        %3439 = vmatprep.subr.mxu0 0.0
        %3440 = vmatpush2.msra.mxu0 0.0
        %3441 = vmatprep.subr.mxu0 0.0
        %3442 = vmatpush2.msra.mxu0 0.0
        %3443 = vmatprep.subr.mxu0 0.0
        %3444 = vmatpush2.msra.mxu0 0.0
        %3445 = vmatprep.subr.mxu0 0.0
        %3446 = vmatpush2.msra.mxu0 0.0
        %3447 = vmatprep.subr.mxu0 0.0
        %3448 = vmatpush2.msra.mxu0 0.0
        %3449 = vmatprep.subr.mxu0 0.0
        %3450 = vmatpush2.msra.mxu0 0.0
        %3451 = vmatprep.subr.mxu0 0.0
        %3452 = vmatpush2.msra.mxu0 0.0
        %3453 = vmatprep.subr.mxu0 0.0
        %3454 = vmatpush2.msra.mxu0 0.0
        %3455 = vmatprep.subr.mxu0 0.0
        %3456 = vmatpush2.msra.mxu0 0.0
        %3457 = vmatprep.subr.mxu0 0.0
        %3458 = vmatpush2.msra.mxu0 0.0
        %3459 = vmatprep.subr.mxu0 0.0
        %3460 = vmatpush2.msra.mxu0 0.0
        %3461 = vmatprep.subr.mxu0 %v3280
        %3462 = vmatpush2.msra.mxu0 %v3277
        %3463 = vmatprep.subr.mxu0 %v3234
        %3464 = vmatpush2.msra.mxu0 %v3233
        %3465 = vmatprep.subr.mxu0 %v3232
        %3466 = vmatpush2.msra.mxu0 %v3231
        %3467 = vmatprep.subr.mxu0 %v3230
        %3468 = vmatpush2.msra.mxu0 %v3229
        %3469 = vmatprep.subr.mxu0 %v3228
        %3470 = vmatpush2.msra.mxu0 %v3227
        %3471 = vmatprep.mubr.f32.mxu0 %v3250
        %3472 = vmatmul.mubr.f32.gmra.mxu0 %v2686
        %v3473 = vpop.f32.mrf.mxu0
        %v3474 = vadd.f32 %v3349, %v3473
        %v3475 = vpop.f32.mrf.mxu0
        %v3476 = vadd.f32 %v3351, %v3475
        %3477 = vmatprep.mubr.f32.mxu0 %v3253
        %3478 = vmatmul.mubr.f32.gmra.mxu0 %v3109
        %v3479 = vpop.f32.mrf.mxu0
        %v3480 = vadd.f32 %v3355, %v3479
        %v3481 = vpop.f32.mrf.mxu0
        %v3482 = vadd.f32 %v3357, %v3481
        %3483 = vmatprep.mubr.f32.mxu0 %v3256
        %3484 = vmatmul.mubr.f32.gmra.mxu0 %v3113
        %v3485 = vpop.f32.mrf.mxu0
        %v3486 = vadd.f32 %v3361, %v3485
        %v3487 = vpop.f32.mrf.mxu0
        %v3488 = vadd.f32 %v3363, %v3487
        %3489 = vmatprep.mubr.f32.mxu0 %v3259
        %3490 = vmatmul.mubr.f32.gmra.mxu0 %v3117
        %v3491 = vpop.f32.mrf.mxu0
        %v3492 = vadd.f32 %v3367, %v3491
        %v3493 = vpop.f32.mrf.mxu0
        %v3494 = vadd.f32 %v3369, %v3493
        %3495 = vmatprep.mubr.f32.mxu0 %v3261
        %3496 = vmatmul.mubr.f32.gmra.mxu0 %v3045
        %v3497 = vpop.f32.mrf.mxu0
        %v3498 = vadd.f32 %v3373, %v3497
        %v3499 = vpop.f32.mrf.mxu0
        %v3500 = vadd.f32 %v3375, %v3499
        %3501 = vmatprep.mubr.f32.mxu0 %v3263
        %3502 = vmatmul.mubr.f32.gmra.mxu0 %v2867
        %v3503 = vpop.f32.mrf.mxu0
        %v3504 = vadd.f32 %v3379, %v3503
        %v3505 = vpop.f32.mrf.mxu0
        %v3506 = vadd.f32 %v3381, %v3505
        %3507 = vmatprep.mubr.f32.mxu0 %v3266
        %3508 = vmatmul.mubr.f32.gmra.mxu0 %v3121
        %v3509 = vpop.f32.mrf.mxu0
        %v3510 = vadd.f32 %v3385, %v3509
        %v3511 = vpop.f32.mrf.mxu0
        %v3512 = vadd.f32 %v3387, %v3511
        %3513 = vmatprep.mubr.f32.mxu0 %v3269
        %3514 = vmatmul.mubr.f32.gmra.mxu0 %v3125
        %v3515 = vpop.f32.mrf.mxu0
        %v3516 = vadd.f32 %v3391, %v3515
        %v3517 = vpop.f32.mrf.mxu0
        %v3518 = vadd.f32 %v3393, %v3517
        %3519 = vmatprep.mubr.f32.mxu0 %v3272
        %3520 = vmatmul.mubr.f32.gmra.mxu0 %v3129
        %v3521 = vpop.f32.mrf.mxu0
        %v3522 = vadd.f32 %v3397, %v3521
        %v3523 = vpop.f32.mrf.mxu0
        %v3524 = vadd.f32 %v3399, %v3523
        %3525 = vmatprep.mubr.f32.mxu0 %v3274
        %3526 = vmatmul.mubr.f32.gmra.mxu0 %v3096
        %v3527 = vpop.f32.mrf.mxu0
        %v3528 = vadd.f32 %v3403, %v3527
        %v3529 = vpop.f32.mrf.mxu0
        %v3530 = vadd.f32 %v3405, %v3529
        %3531 = vdwg.mxu0
        %v3532 = vmax.f32 %v3474, 0.0
        %v3533 = vmax.f32 %v3476, 0.0
        %v3534 = vmax.f32 %v3480, 0.0
        %v3535 = vmax.f32 %v3482, 0.0
        %v3536 = vmax.f32 %v3486, 0.0
        %v3537 = vmax.f32 %v3488, 0.0
        %v3538 = vmax.f32 %v3492, 0.0
        %v3539 = vmax.f32 %v3494, 0.0
        %v3540 = vmax.f32 %v3498, 0.0
        %v3541 = vmax.f32 %v3500, 0.0
        %v3542 = vmax.f32 %v3504, 0.0
        %v3543 = vmax.f32 %v3506, 0.0
        %v3544 = vmax.f32 %v3510, 0.0
        %v3545 = vmax.f32 %v3512, 0.0
        %v3546 = vmax.f32 %v3516, 0.0
        %v3547 = vmax.f32 %v3518, 0.0
        %v3548 = vmax.f32 %v3522, 0.0
        %v3549 = vmax.f32 %v3524, 0.0
        %v3550 = vmax.f32 %v3528, 0.0
        %v3551 = vmax.f32 %v3530, 0.0
        %v3552 = vld [vmem:[%s8] sm:$0xff]
        %v3553 = vld [vmem:[%s8 + $0x8] sm:$0xff]
        %v3554 = vld [vmem:[%s8 + $0x10] sm:$0xff]
        %v3555 = vld [vmem:[%s8 + $0x18] sm:$0xff]
        %v3556 = vld [vmem:[%s8 + $0x20] sm:$0xff]
        %v3557 = vld [vmem:[%s7] sm:$0xff]
        %v3558 = vld [vmem:[%s7 + $0x8] sm:$0xff]
        %v3559 = vld [vmem:[%s7 + $0x10] sm:$0xff]
        %v3560 = vld [vmem:[%s7 + $0x18] sm:$0xff]
        %v3561 = vld [vmem:[%s7 + $0x20] sm:$0xff]
        %v3562 = vld [vmem:[%s7 + $0x28] sm:$0xff]
        %v3563 = vld [vmem:[%s7 + $0x30] sm:$0xff]
        %v3564 = vld [vmem:[%s7 + $0x38] sm:$0xff]
        %v3565 = vld [vmem:[%s7 + $0x40] sm:$0xff]
        %v3566 = vld [vmem:[%s7 + $0x48] sm:$0xff]
        %v3567 = vld [vmem:[%s7 + $0x50] sm:$0xff]
        %v3568 = vld [vmem:[%s7 + $0x58] sm:$0xff]
        %v3569 = vld [vmem:[%s7 + $0x60] sm:$0xff]
        %v3570 = vld [vmem:[%s7 + $0x68] sm:$0xff]
        %v3571 = vld [vmem:[%s7 + $0x70] sm:$0xff]
        %v3572 = vld [vmem:[%s7 + $0x78] sm:$0xff]
        %v3573 = vld [vmem:[%s7 + $0x80] sm:$0xff]
        %v3574 = vld [vmem:[%s7 + $0x88] sm:$0xff]
        %v3575 = vld [vmem:[%s7 + $0x90] sm:$0xff]
        %v3576 = vld [vmem:[%s7 + $0x98] sm:$0xff]
        %v3578 = vsel %vm958, %v3533, 0
        %v3581 = vsel %vm958, %v3535, 0
        %v3584 = vsel %vm958, %v3537, 0
        %v3587 = vsel %vm958, %v3539, 0
        %v3590 = vsel %vm958, %v3541, 0
        %v3593 = vsel %vm958, %v3543, 0
        %v3596 = vsel %vm958, %v3545, 0
        %v3599 = vsel %vm958, %v3547, 0
        %v3602 = vsel %vm958, %v3549, 0
        %v3605 = vsel %vm958, %v3551, 0
        %3607 = vmatprep.subr.mxu0 0.0
        %3608 = vmatpush1.msra.mxu0 %v3572
        %3609 = vmatprep.subr.mxu0 0.0
        %3610 = vmatpush1.msra.mxu0 %v3571
        %3611 = vmatprep.subr.mxu0 0.0
        %3612 = vmatpush1.msra.mxu0 %v3570
        %3613 = vmatprep.subr.mxu0 0.0
        %3614 = vmatpush1.msra.mxu0 %v3569
        %3615 = vmatprep.subr.mxu0 0.0
        %3616 = vmatpush1.msra.mxu0 %v3568
        %3617 = vmatprep.subr.mxu0 0.0
        %3618 = vmatpush1.msra.mxu0 %v3567
        %3619 = vmatprep.subr.mxu0 0.0
        %3620 = vmatpush1.msra.mxu0 %v3566
        %3621 = vmatprep.subr.mxu0 0.0
        %3622 = vmatpush1.msra.mxu0 %v3565
        %3623 = vmatprep.subr.mxu0 0.0
        %3624 = vmatpush1.msra.mxu0 %v3564
        %3625 = vmatprep.subr.mxu0 0.0
        %3626 = vmatpush1.msra.mxu0 %v3563
        %3627 = vmatprep.subr.mxu0 0.0
        %3628 = vmatpush1.msra.mxu0 %v3562
        %3629 = vmatprep.subr.mxu0 0.0
        %3630 = vmatpush1.msra.mxu0 %v3561
        %3631 = vmatprep.subr.mxu0 0.0
        %3632 = vmatpush1.msra.mxu0 %v3560
        %3633 = vmatprep.subr.mxu0 0.0
        %3634 = vmatpush1.msra.mxu0 %v3559
        %3635 = vmatprep.subr.mxu0 0.0
        %3636 = vmatpush1.msra.mxu0 %v3558
        %3637 = vmatprep.subr.mxu0 0.0
        %3638 = vmatpush1.msra.mxu0 %v3557
        %3639 = vmatprep.subr.mxu0 0.0
        %3640 = vmatpush2.msra.mxu0 0.0
        %3641 = vmatprep.subr.mxu0 0.0
        %3642 = vmatpush2.msra.mxu0 0.0
        %3643 = vmatprep.subr.mxu0 0.0
        %3644 = vmatpush2.msra.mxu0 0.0
        %3645 = vmatprep.subr.mxu0 0.0
        %3646 = vmatpush2.msra.mxu0 0.0
        %3647 = vmatprep.subr.mxu0 0.0
        %3648 = vmatpush2.msra.mxu0 0.0
        %3649 = vmatprep.subr.mxu0 0.0
        %3650 = vmatpush2.msra.mxu0 0.0
        %3651 = vmatprep.subr.mxu0 0.0
        %3652 = vmatpush2.msra.mxu0 0.0
        %3653 = vmatprep.subr.mxu0 0.0
        %3654 = vmatpush2.msra.mxu0 0.0
        %3655 = vmatprep.subr.mxu0 0.0
        %3656 = vmatpush2.msra.mxu0 0.0
        %3657 = vmatprep.subr.mxu0 0.0
        %3658 = vmatpush2.msra.mxu0 0.0
        %3659 = vmatprep.subr.mxu0 0.0
        %3660 = vmatpush2.msra.mxu0 0.0
        %3661 = vmatprep.subr.mxu0 0.0
        %3662 = vmatpush2.msra.mxu0 0.0
        %3663 = vmatprep.subr.mxu0 0.0
        %3664 = vmatpush2.msra.mxu0 %v3576
        %3665 = vmatprep.subr.mxu0 0.0
        %3666 = vmatpush2.msra.mxu0 %v3575
        %3667 = vmatprep.subr.mxu0 0.0
        %3668 = vmatpush2.msra.mxu0 %v3574
        %3669 = vmatprep.subr.mxu0 0.0
        %3670 = vmatpush2.msra.mxu0 %v3573
        %3671 = vmatprep.mubr.f32.mxu0 %v3578
        %3672 = vmatmul.mubr.f32.gmra.mxu0 %v3532
        %v3673 = vpop.f32.mrf.mxu0
        %v3674 = vadd.f32 0.0, %v3673
        %v3675 = vpop.f32.mrf.mxu0
        %3676 = vmatprep.mubr.f32.mxu0 %v3581
        %3677 = vmatmul.mubr.f32.gmra.mxu0 %v3534
        %v3678 = vpop.f32.mrf.mxu0
        %v3679 = vadd.f32 0.0, %v3678
        %v3680 = vpop.f32.mrf.mxu0
        %3681 = vmatprep.mubr.f32.mxu0 %v3584
        %3682 = vmatmul.mubr.f32.gmra.mxu0 %v3536
        %v3683 = vpop.f32.mrf.mxu0
        %v3684 = vadd.f32 0.0, %v3683
        %v3685 = vpop.f32.mrf.mxu0
        %3686 = vmatprep.mubr.f32.mxu0 %v3587
        %3687 = vmatmul.mubr.f32.gmra.mxu0 %v3538
        %v3688 = vpop.f32.mrf.mxu0
        %v3689 = vadd.f32 0.0, %v3688
        %v3690 = vpop.f32.mrf.mxu0
        %3691 = vmatprep.mubr.f32.mxu0 %v3590
        %3692 = vmatmul.mubr.f32.gmra.mxu0 %v3540
        %v3693 = vpop.f32.mrf.mxu0
        %v3694 = vadd.f32 0.0, %v3693
        %v3695 = vpop.f32.mrf.mxu0
        %3696 = vmatprep.mubr.f32.mxu0 %v3593
        %3697 = vmatmul.mubr.f32.gmra.mxu0 %v3542
        %v3698 = vpop.f32.mrf.mxu0
        %v3699 = vadd.f32 0.0, %v3698
        %v3700 = vpop.f32.mrf.mxu0
        %3701 = vmatprep.mubr.f32.mxu0 %v3596
        %3702 = vmatmul.mubr.f32.gmra.mxu0 %v3544
        %v3703 = vpop.f32.mrf.mxu0
        %v3704 = vadd.f32 0.0, %v3703
        %v3705 = vpop.f32.mrf.mxu0
        %3706 = vmatprep.mubr.f32.mxu0 %v3599
        %3707 = vmatmul.mubr.f32.gmra.mxu0 %v3546
        %v3708 = vpop.f32.mrf.mxu0
        %v3709 = vadd.f32 0.0, %v3708
        %v3710 = vpop.f32.mrf.mxu0
        %3711 = vmatprep.mubr.f32.mxu0 %v3602
        %3712 = vmatmul.mubr.f32.gmra.mxu0 %v3548
        %v3713 = vpop.f32.mrf.mxu0
        %v3714 = vadd.f32 0.0, %v3713
        %v3715 = vpop.f32.mrf.mxu0
        %3716 = vmatprep.mubr.f32.mxu0 %v3605
        %3717 = vmatmul.mubr.f32.gmra.mxu0 %v3550
        %v3718 = vpop.f32.mrf.mxu0
        %v3719 = vadd.f32 0.0, %v3718
        %v3720 = vpop.f32.mrf.mxu0
        %3721 = vdwg.mxu0
        %v3723 = vsel %vm2685, %v3552, 0
        %v3726 = vsel %vm2685, %v3553, 0
        %v3729 = vsel %vm2685, %v3554, 0
        %v3732 = vsel %vm2685, %v3555, 0
        %v3735 = vsel %vm2685, %v3556, 0
        %3737 = vmatprep.subr.mxu0 0.0
        %3738 = vmatpush1.msra.mxu0 0.0
        %3739 = vmatprep.subr.mxu0 0.0
        %3740 = vmatpush1.msra.mxu0 0.0
        %3741 = vmatprep.subr.mxu0 0.0
        %3742 = vmatpush1.msra.mxu0 0.0
        %3743 = vmatprep.subr.mxu0 0.0
        %3744 = vmatpush1.msra.mxu0 0.0
        %3745 = vmatprep.subr.mxu0 0.0
        %3746 = vmatpush1.msra.mxu0 0.0
        %3747 = vmatprep.subr.mxu0 0.0
        %3748 = vmatpush1.msra.mxu0 0.0
        %3749 = vmatprep.subr.mxu0 0.0
        %3750 = vmatpush1.msra.mxu0 %v3719
        %3751 = vmatprep.subr.mxu0 0.0
        %3752 = vmatpush1.msra.mxu0 %v3714
        %3753 = vmatprep.subr.mxu0 0.0
        %3754 = vmatpush1.msra.mxu0 %v3709
        %3755 = vmatprep.subr.mxu0 0.0
        %3756 = vmatpush1.msra.mxu0 %v3704
        %3757 = vmatprep.subr.mxu0 0.0
        %3758 = vmatpush1.msra.mxu0 %v3699
        %3759 = vmatprep.subr.mxu0 0.0
        %3760 = vmatpush1.msra.mxu0 %v3694
        %3761 = vmatprep.subr.mxu0 0.0
        %3762 = vmatpush1.msra.mxu0 %v3689
        %3763 = vmatprep.subr.mxu0 0.0
        %3764 = vmatpush1.msra.mxu0 %v3684
        %3765 = vmatprep.subr.mxu0 0.0
        %3766 = vmatpush1.msra.mxu0 %v3679
        %3767 = vmatprep.subr.mxu0 0.0
        %3768 = vmatpush1.msra.mxu0 %v3674
        %3769 = vmatprep.subr.mxu0 0.0
        %3770 = vmatpush2.msra.mxu0 0.0
        %3771 = vmatprep.subr.mxu0 0.0
        %3772 = vmatpush2.msra.mxu0 0.0
        %3773 = vmatprep.subr.mxu0 0.0
        %3774 = vmatpush2.msra.mxu0 0.0
        %3775 = vmatprep.subr.mxu0 0.0
        %3776 = vmatpush2.msra.mxu0 0.0
        %3777 = vmatprep.subr.mxu0 0.0
        %3778 = vmatpush2.msra.mxu0 0.0
        %3779 = vmatprep.subr.mxu0 0.0
        %3780 = vmatpush2.msra.mxu0 0.0
        %3781 = vmatprep.subr.mxu0 0.0
        %3782 = vmatpush2.msra.mxu0 0.0
        %3783 = vmatprep.subr.mxu0 0.0
        %3784 = vmatpush2.msra.mxu0 0.0
        %3785 = vmatprep.subr.mxu0 0.0
        %3786 = vmatpush2.msra.mxu0 0.0
        %3787 = vmatprep.subr.mxu0 0.0
        %3788 = vmatpush2.msra.mxu0 0.0
        %3789 = vmatprep.subr.mxu0 0.0
        %3790 = vmatpush2.msra.mxu0 0.0
        %3791 = vmatprep.subr.mxu0 0.0
        %3792 = vmatpush2.msra.mxu0 0.0
        %3793 = vmatprep.subr.mxu0 0.0
        %3794 = vmatpush2.msra.mxu0 0.0
        %3795 = vmatprep.subr.mxu0 0.0
        %3796 = vmatpush2.msra.mxu0 0.0
        %3797 = vmatprep.subr.mxu0 0.0
        %3798 = vmatpush2.msra.mxu0 0.0
        %3799 = vmatprep.subr.mxu0 0.0
        %3800 = vmatpush2.msra.mxu0 0.0
        %3801 = vmatprep.mubr.f32.mxu0 0.0
        %3802 = vmatmul.mubr.f32.gmra.mxu0 %v3723
        %v3803 = vpop.f32.mrf.mxu0
        %v3804 = vadd.f32 0.0, %v3803
        %v3805 = vpop.f32.mrf.mxu0
        %3806 = vmatprep.mubr.f32.mxu0 0.0
        %3807 = vmatmul.mubr.f32.gmra.mxu0 %v3726
        %v3808 = vpop.f32.mrf.mxu0
        %v3809 = vadd.f32 0.0, %v3808
        %v3810 = vpop.f32.mrf.mxu0
        %3811 = vmatprep.mubr.f32.mxu0 0.0
        %3812 = vmatmul.mubr.f32.gmra.mxu0 %v3729
        %v3813 = vpop.f32.mrf.mxu0
        %v3814 = vadd.f32 0.0, %v3813
        %v3815 = vpop.f32.mrf.mxu0
        %3816 = vmatprep.mubr.f32.mxu0 0.0
        %3817 = vmatmul.mubr.f32.gmra.mxu0 %v3732
        %v3818 = vpop.f32.mrf.mxu0
        %v3819 = vadd.f32 0.0, %v3818
        %v3820 = vpop.f32.mrf.mxu0
        %3821 = vmatprep.mubr.f32.mxu0 0.0
        %3822 = vmatmul.mubr.f32.gmra.mxu0 %v3735
        %v3823 = vpop.f32.mrf.mxu0
        %v3824 = vadd.f32 0.0, %v3823
        %v3825 = vpop.f32.mrf.mxu0
        %3826 = vdwg.mxu0
        %vm3827 = vcmp.eq.f32.partialorder %v3804, 0.0
        %vm3828 = vcmp.eq.f32.partialorder %v3809, 0.0
        %vm3829 = vcmp.eq.f32.partialorder %v3814, 0.0
        %vm3830 = vcmp.eq.f32.partialorder %v3819, 0.0
        %vm3831 = vcmp.eq.f32.partialorder %v3824, 0.0
        %vm3832 = vmpackc.low %vm3828, %vm3827
        %vm3833 = vmpackc.low %vm3830, %vm3829
        %vm3834 = vmpackc.even %vm3833, %vm3832
        %vm3835 = vmpackc.low %vm3831, %vm3831
        %vm3836 = vmpackc.even %vm3835, %vm3835
        %v3837 = vsel %vm3834, 16843009, 0
        %v3838 = vsel %vm3836, 16843009, 0
        %v3839 = vunpack.c.0.s8 %v3837
        %v3840 = vunpack.c.1.s8 %v3837
        %v3841 = vunpack.c.2.s8 %v3837
        %v3842 = vunpack.c.3.s8 %v3837
        %v3843 = vunpack.c.0.s8 %v3838
        %v3844 = vpack.c.b16 %v3839, %v3839
        %v3845 = vpack.c.b8 %v3844, %v3844
        %v3846 = vpack.c.b16 %v3840, %v3840
        %v3847 = vpack.c.b8 %v3846, %v3846
        %v3848 = vpack.c.b16 %v3841, %v3841
        %v3849 = vpack.c.b8 %v3848, %v3848
        %v3850 = vpack.c.b16 %v3842, %v3842
        %v3851 = vpack.c.b8 %v3850, %v3850
        %v3852 = vpack.c.b16 %v3843, %v3843
        %v3853 = vpack.c.b8 %v3852, %v3852
        %vm3854 = vcmask 648192
        %3855 = vst.msk [vmem:[%s652] sm:$0x3] %vm3854, %v3845
        %3856 = vst.msk [vmem:[%s652 + $0x2] sm:$0x3] %vm3854, %v3847
        %3857 = vst.msk [vmem:[%s652 + $0x4] sm:$0x3] %vm3854, %v3849
        %3858 = vst.msk [vmem:[%s652 + $0x6] sm:$0x3] %vm3854, %v3851
        %3859 = vst.msk [vmem:[%s652 + $0x8] sm:$0x3] %vm3854, %v3853
        %v3861 = vrot.slane %v3804, 1
        %3862 = vrot.lane.b32.xlu0 %v3861, 80
        %v3863 = vpop.permute.xlu0 %3862
        %v3865 = vrot.slane %v3804, 2
        %3866 = vrot.lane.b32.xlu0 %v3865, 32
        %v3867 = vpop.permute.xlu0 %3866
        %v3869 = vrot.slane %v3804, 3
        %3870 = vrot.lane.b32.xlu0 %v3869, 112
        %v3871 = vpop.permute.xlu0 %3870
        %v3873 = vrot.slane %v3804, 4
        %3874 = vrot.lane.b32.xlu0 %v3873, 64
        %v3875 = vpop.permute.xlu0 %3874
        %v3877 = vsel %vm2685, %v3804, %v3863
        %v3878 = vsel %vm958, %v3863, %v3867
        %vm3879 = vcmask 916480
        %v3880 = vsel %vm3879, %v3878, %v3871
        %v3881 = vsel %vm963, %v3871, %v3875
        %v3883 = vrot.slane %v3809, 3
        %3884 = vrot.lane.b32.xlu0 %v3883, 112
        %v3885 = vpop.permute.xlu0 %3884
        %v3887 = vrot.slane %v3809, 4
        %3888 = vrot.lane.b32.xlu0 %v3887, 64
        %v3889 = vpop.permute.xlu0 %3888
        %v3891 = vsel %vm3879, %v3878, %v3885
        %v3892 = vsel %vm963, %v3885, %v3889
        %v3893 = vrot.slane %v3809, 1
        %3894 = vrot.lane.b32.xlu0 %v3893, 80
        %v3895 = vpop.permute.xlu0 %3894
        %v3897 = vrot.slane %v3809, 2
        %3898 = vrot.lane.b32.xlu0 %v3897, 32
        %v3899 = vpop.permute.xlu0 %3898
        %v3901 = vsel %vm2685, %v3809, %v3895
        %v3902 = vsel %vm958, %v3895, %v3899
        %v3903 = vsel %vm3879, %v3902, %v3885
        %v3905 = vrot.slane %v3814, 1
        %3906 = vrot.lane.b32.xlu0 %v3905, 80
        %v3907 = vpop.permute.xlu0 %3906
        %v3909 = vrot.slane %v3814, 2
        %3910 = vrot.lane.b32.xlu0 %v3909, 32
        %v3911 = vpop.permute.xlu0 %3910
        %v3913 = vrot.slane %v3814, 3
        %3914 = vrot.lane.b32.xlu0 %v3913, 112
        %v3915 = vpop.permute.xlu0 %3914
        %v3917 = vrot.slane %v3814, 4
        %3918 = vrot.lane.b32.xlu0 %v3917, 64
        %v3919 = vpop.permute.xlu0 %3918
        %v3921 = vsel %vm2685, %v3809, %v3907
        %v3922 = vsel %vm958, %v3907, %v3911
        %v3923 = vsel %vm3879, %v3922, %v3915
        %v3924 = vsel %vm963, %v3915, %v3919
        %v3926 = vrot.slane %v3819, 4
        %3927 = vrot.lane.b32.xlu0 %v3926, 64
        %v3928 = vpop.permute.xlu0 %3927
        %v3930 = vsel %vm2685, %v3814, %v3907
        %v3931 = vsel %vm963, %v3915, %v3928
        %v3932 = vrot.slane %v3819, 1
        %3933 = vrot.lane.b32.xlu0 %v3932, 80
        %v3934 = vpop.permute.xlu0 %3933
        %v3936 = vrot.slane %v3819, 2
        %3937 = vrot.lane.b32.xlu0 %v3936, 32
        %v3938 = vpop.permute.xlu0 %3937
        %v3940 = vrot.slane %v3819, 3
        %3941 = vrot.lane.b32.xlu0 %v3940, 112
        %v3942 = vpop.permute.xlu0 %3941
        %v3944 = vsel %vm2685, %v3819, %v3934
        %v3945 = vsel %vm958, %v3934, %v3938
        %v3946 = vsel %vm3879, %v3945, %v3942
        %v3947 = vsel %vm963, %v3942, %v3928
        %v3949 = vrot.slane %v3824, 2
        %3950 = vrot.lane.b32.xlu0 %v3949, 32
        %v3951 = vpop.permute.xlu0 %3950
        %v3953 = vrot.slane %v3824, 3
        %3954 = vrot.lane.b32.xlu0 %v3953, 112
        %v3955 = vpop.permute.xlu0 %3954
        %v3957 = vrot.slane %v3824, 4
        %3958 = vrot.lane.b32.xlu0 %v3957, 64
        %v3959 = vpop.permute.xlu0 %3958
        %v3961 = vsel %vm958, %v3934, %v3951
        %v3962 = vsel %vm3879, %v3961, %v3955
        %v3963 = vsel %vm963, %v3955, %v3959
        %v3964 = vrot.slane %v3824, 1
        %3965 = vrot.lane.b32.xlu0 %v3964, 80
        %v3966 = vpop.permute.xlu0 %3965
        %v3968 = vsel %vm2685, %v3824, %v3966
        %v3969 = vsel %vm958, %v3966, %v3951
        %v3970 = vsel %vm3879, %v3969, %v3955
        %v3974 = vrot.slane %v3877, 4
        %v3975 = vrot.slane %v3891, 4
        %v3976 = vrot.slane %v3892, 4
        %v3977 = vrot.slane %v3889, 4
        %v3985 = vrot.slane %v3921, 4
        %v3986 = vrot.slane %v3923, 4
        %v3987 = vrot.slane %v3924, 4
        %v3988 = vrot.slane %v3919, 4
        %v3996 = vrot.slane %v3944, 4
        %v3997 = vrot.slane %v3946, 4
        %v3998 = vrot.slane %v3947, 4
        %v3999 = vrot.slane %v3928, 4
        %v4007 = vrot.slane %v3968, 4
        %v4008 = vrot.slane %v3970, 4
        %v4009 = vrot.slane %v3963, 4
        %v4010 = vrot.slane %v3959, 4
        %vm4015 = vcmask 1040384
        %v4016 = vsel %vm4015, %v3877, %v3974
        %v4017 = vsel %vm4015, %v3880, %v3975
        %v4018 = vsel %vm4015, %v3881, %v3976
        %v4019 = vsel %vm4015, %v3875, %v3977
        %v4020 = vsel %vm3106, %v4016, %v3901
        %v4021 = vsel %vm3106, %v4017, %v3903
        %v4022 = vsel %vm3106, %v4018, %v3892
        %v4023 = vsel %vm3106, %v4019, %v3889
        %vm4024 = vcmask 1042432
        %v4025 = vsel %vm4024, %v4020, %v3985
        %v4026 = vsel %vm4024, %v4021, %v3986
        %v4027 = vsel %vm4024, %v4022, %v3987
        %v4028 = vsel %vm4024, %v4023, %v3988
        %v4029 = vsel %vm949, %v4025, %v3930
        %v4030 = vsel %vm949, %v4026, %v3923
        %v4031 = vsel %vm949, %v4027, %v3931
        %v4032 = vsel %vm949, %v4028, %v3928
        %v4033 = vsel %vm929, %v4029, %v3996
        %v4034 = vsel %vm929, %v4030, %v3997
        %v4035 = vsel %vm929, %v4031, %v3998
        %v4036 = vsel %vm929, %v4032, %v3999
        %v4037 = vsel %vm909, %v4033, %v3944
        %v4038 = vsel %vm909, %v4034, %v3962
        %v4039 = vsel %vm909, %v4035, %v3963
        %v4040 = vsel %vm909, %v4036, %v3959
        %v4041 = vsel %vm889, %v4037, %v4007
        %v4042 = vsel %vm889, %v4038, %v4008
        %v4043 = vsel %vm889, %v4039, %v4009
        %v4044 = vsel %vm889, %v4040, %v4010
        %v4045 = vld [vmem:[%s9] sm:$0xff]
        %v4046 = vld [vmem:[%s9 + $0x8] sm:$0xff]
        %v4047 = vld [vmem:[%s9 + $0x10] sm:$0xff]
        %v4048 = vld [vmem:[%s9 + $0x18] sm:$0xff]
        %v4049 = vld [vmem:[%s9 + $0x20] sm:$0xff]
        %v4050 = vld [vmem:[%s9 + $0x28] sm:$0xff]
        %v4051 = vld [vmem:[%s9 + $0x30] sm:$0xff]
        %v4052 = vld [vmem:[%s9 + $0x38] sm:$0xff]
        %v4053 = vld [vmem:[%s9 + $0x40] sm:$0xff]
        %v4054 = vld [vmem:[%s9 + $0x48] sm:$0xff]
        %v4055 = vld [vmem:[%s9 + $0x50] sm:$0xff]
        %v4056 = vld [vmem:[%s9 + $0x58] sm:$0xff]
        %v4057 = vld [vmem:[%s9 + $0x60] sm:$0xff]
        %v4058 = vld [vmem:[%s9 + $0x68] sm:$0xff]
        %v4059 = vld [vmem:[%s9 + $0x70] sm:$0xff]
        %v4060 = vld [vmem:[%s9 + $0x78] sm:$0xff]
        %v4061 = vld [vmem:[%s9 + $0x80] sm:$0xff]
        %v4062 = vld [vmem:[%s9 + $0x88] sm:$0xff]
        %v4063 = vld [vmem:[%s9 + $0x90] sm:$0xff]
        %v4064 = vld [vmem:[%s9 + $0x98] sm:$0xff]
        %v4065 = vld [vmem:[%s9 + $0xa0] sm:$0xff]
        %v4066 = vld [vmem:[%s9 + $0xa8] sm:$0xff]
        %v4067 = vld [vmem:[%s9 + $0xb0] sm:$0xff]
        %v4068 = vld [vmem:[%s9 + $0xb8] sm:$0xff]
        %v4069 = vld [vmem:[%s9 + $0xc0] sm:$0xff]
        %v4070 = vld [vmem:[%s9 + $0xc8] sm:$0xff]
        %v4071 = vld [vmem:[%s9 + $0xd0] sm:$0xff]
        %v4072 = vld [vmem:[%s9 + $0xd8] sm:$0xff]
        %v4073 = vld [vmem:[%s9 + $0xe0] sm:$0xff]
        %v4074 = vld [vmem:[%s9 + $0xe8] sm:$0xff]
        %v4075 = vld [vmem:[%s9 + $0xf0] sm:$0xff]
        %v4076 = vld [vmem:[%s9 + $0xf8] sm:$0xff]
        %v4077 = vld [vmem:[%s9 + $0x100] sm:$0xff]
        %v4078 = vld [vmem:[%s9 + $0x108] sm:$0xff]
        %v4079 = vld [vmem:[%s9 + $0x110] sm:$0xff]
        %v4080 = vld [vmem:[%s9 + $0x118] sm:$0xff]
        %v4081 = vld [vmem:[%s9 + $0x120] sm:$0xff]
        %v4082 = vld [vmem:[%s9 + $0x128] sm:$0xff]
        %v4083 = vld [vmem:[%s9 + $0x130] sm:$0xff]
        %v4084 = vld [vmem:[%s9 + $0x138] sm:$0xff]
        %v4085 = vld [vmem:[%s9 + $0x140] sm:$0xff]
        %v4086 = vld [vmem:[%s9 + $0x148] sm:$0xff]
        %v4087 = vld [vmem:[%s9 + $0x150] sm:$0xff]
        %v4088 = vld [vmem:[%s9 + $0x158] sm:$0xff]
        %v4089 = vld [vmem:[%s9 + $0x160] sm:$0xff]
        %v4090 = vld [vmem:[%s9 + $0x168] sm:$0xff]
        %v4091 = vld [vmem:[%s9 + $0x170] sm:$0xff]
        %v4092 = vld [vmem:[%s9 + $0x178] sm:$0xff]
        %v4093 = vld [vmem:[%s9 + $0x180] sm:$0xff]
        %v4094 = vld [vmem:[%s9 + $0x188] sm:$0xff]
        %v4095 = vld [vmem:[%s10] sm:$0x1]
        %v4097 = vlaneseq
        %v4098 = vshrl.u32 %v4097, 7
        %v4099 = vsub.s32 0, %v4098
        %v4100 = vrot.slane %v4095, %v4099
        %vm4102 = vcmask 130048
        %v4104 = vsel %vm4102, %v4044, 0
        %4106 = vmatprep.subr.mxu0 0.0
        %4107 = vmatpush1.msra.mxu0 %v4060
        %4108 = vmatprep.subr.mxu0 0.0
        %4109 = vmatpush1.msra.mxu0 %v4059
        %4110 = vmatprep.subr.mxu0 0.0
        %4111 = vmatpush1.msra.mxu0 %v4058
        %4112 = vmatprep.subr.mxu0 0.0
        %4113 = vmatpush1.msra.mxu0 %v4057
        %4114 = vmatprep.subr.mxu0 0.0
        %4115 = vmatpush1.msra.mxu0 %v4056
        %4116 = vmatprep.subr.mxu0 0.0
        %4117 = vmatpush1.msra.mxu0 %v4055
        %4118 = vmatprep.subr.mxu0 0.0
        %4119 = vmatpush1.msra.mxu0 %v4054
        %4120 = vmatprep.subr.mxu0 0.0
        %4121 = vmatpush1.msra.mxu0 %v4053
        %4122 = vmatprep.subr.mxu0 0.0
        %4123 = vmatpush1.msra.mxu0 %v4052
        %4124 = vmatprep.subr.mxu0 0.0
        %4125 = vmatpush1.msra.mxu0 %v4051
        %4126 = vmatprep.subr.mxu0 0.0
        %4127 = vmatpush1.msra.mxu0 %v4050
        %4128 = vmatprep.subr.mxu0 0.0
        %4129 = vmatpush1.msra.mxu0 %v4049
        %4130 = vmatprep.subr.mxu0 0.0
        %4131 = vmatpush1.msra.mxu0 %v4048
        %4132 = vmatprep.subr.mxu0 0.0
        %4133 = vmatpush1.msra.mxu0 %v4047
        %4134 = vmatprep.subr.mxu0 0.0
        %4135 = vmatpush1.msra.mxu0 %v4046
        %4136 = vmatprep.subr.mxu0 0.0
        %4137 = vmatpush1.msra.mxu0 %v4045
        %4138 = vmatprep.subr.mxu0 0.0
        %4139 = vmatpush2.msra.mxu0 %v4076
        %4140 = vmatprep.subr.mxu0 0.0
        %4141 = vmatpush2.msra.mxu0 %v4075
        %4142 = vmatprep.subr.mxu0 0.0
        %4143 = vmatpush2.msra.mxu0 %v4074
        %4144 = vmatprep.subr.mxu0 0.0
        %4145 = vmatpush2.msra.mxu0 %v4073
        %4146 = vmatprep.subr.mxu0 0.0
        %4147 = vmatpush2.msra.mxu0 %v4072
        %4148 = vmatprep.subr.mxu0 0.0
        %4149 = vmatpush2.msra.mxu0 %v4071
        %4150 = vmatprep.subr.mxu0 0.0
        %4151 = vmatpush2.msra.mxu0 %v4070
        %4152 = vmatprep.subr.mxu0 0.0
        %4153 = vmatpush2.msra.mxu0 %v4069
        %4154 = vmatprep.subr.mxu0 0.0
        %4155 = vmatpush2.msra.mxu0 %v4068
        %4156 = vmatprep.subr.mxu0 0.0
        %4157 = vmatpush2.msra.mxu0 %v4067
        %4158 = vmatprep.subr.mxu0 0.0
        %4159 = vmatpush2.msra.mxu0 %v4066
        %4160 = vmatprep.subr.mxu0 0.0
        %4161 = vmatpush2.msra.mxu0 %v4065
        %4162 = vmatprep.subr.mxu0 0.0
        %4163 = vmatpush2.msra.mxu0 %v4064
        %4164 = vmatprep.subr.mxu0 0.0
        %4165 = vmatpush2.msra.mxu0 %v4063
        %4166 = vmatprep.subr.mxu0 0.0
        %4167 = vmatpush2.msra.mxu0 %v4062
        %4168 = vmatprep.subr.mxu0 0.0
        %4169 = vmatpush2.msra.mxu0 %v4061
        %4170 = vmatprep.mubr.f32.mxu0 %v4042
        %4171 = vmatmul.mubr.f32.gmra.mxu0 %v4041
        %v4172 = vpop.f32.mrf.mxu0
        %v4173 = vadd.f32 %v4100, %v4172
        %v4174 = vpop.f32.mrf.mxu0
        %4175 = vdwg.mxu0
        %4176 = vmatprep.subr.mxu0 0.0
        %4177 = vmatpush1.msra.mxu0 %v4092
        %4178 = vmatprep.subr.mxu0 0.0
        %4179 = vmatpush1.msra.mxu0 %v4091
        %4180 = vmatprep.subr.mxu0 0.0
        %4181 = vmatpush1.msra.mxu0 %v4090
        %4182 = vmatprep.subr.mxu0 0.0
        %4183 = vmatpush1.msra.mxu0 %v4089
        %4184 = vmatprep.subr.mxu0 0.0
        %4185 = vmatpush1.msra.mxu0 %v4088
        %4186 = vmatprep.subr.mxu0 0.0
        %4187 = vmatpush1.msra.mxu0 %v4087
        %4188 = vmatprep.subr.mxu0 0.0
        %4189 = vmatpush1.msra.mxu0 %v4086
        %4190 = vmatprep.subr.mxu0 0.0
        %4191 = vmatpush1.msra.mxu0 %v4085
        %4192 = vmatprep.subr.mxu0 0.0
        %4193 = vmatpush1.msra.mxu0 %v4084
        %4194 = vmatprep.subr.mxu0 0.0
        %4195 = vmatpush1.msra.mxu0 %v4083
        %4196 = vmatprep.subr.mxu0 0.0
        %4197 = vmatpush1.msra.mxu0 %v4082
        %4198 = vmatprep.subr.mxu0 0.0
        %4199 = vmatpush1.msra.mxu0 %v4081
        %4200 = vmatprep.subr.mxu0 0.0
        %4201 = vmatpush1.msra.mxu0 %v4080
        %4202 = vmatprep.subr.mxu0 0.0
        %4203 = vmatpush1.msra.mxu0 %v4079
        %4204 = vmatprep.subr.mxu0 0.0
        %4205 = vmatpush1.msra.mxu0 %v4078
        %4206 = vmatprep.subr.mxu0 0.0
        %4207 = vmatpush1.msra.mxu0 %v4077
        %4208 = vmatprep.subr.mxu0 0.0
        %4209 = vmatpush2.msra.mxu0 0.0
        %4210 = vmatprep.subr.mxu0 0.0
        %4211 = vmatpush2.msra.mxu0 0.0
        %4212 = vmatprep.subr.mxu0 0.0
        %4213 = vmatpush2.msra.mxu0 0.0
        %4214 = vmatprep.subr.mxu0 0.0
        %4215 = vmatpush2.msra.mxu0 0.0
        %4216 = vmatprep.subr.mxu0 0.0
        %4217 = vmatpush2.msra.mxu0 0.0
        %4218 = vmatprep.subr.mxu0 0.0
        %4219 = vmatpush2.msra.mxu0 0.0
        %4220 = vmatprep.subr.mxu0 0.0
        %4221 = vmatpush2.msra.mxu0 0.0
        %4222 = vmatprep.subr.mxu0 0.0
        %4223 = vmatpush2.msra.mxu0 0.0
        %4224 = vmatprep.subr.mxu0 0.0
        %4225 = vmatpush2.msra.mxu0 0.0
        %4226 = vmatprep.subr.mxu0 0.0
        %4227 = vmatpush2.msra.mxu0 0.0
        %4228 = vmatprep.subr.mxu0 0.0
        %4229 = vmatpush2.msra.mxu0 0.0
        %4230 = vmatprep.subr.mxu0 0.0
        %4231 = vmatpush2.msra.mxu0 0.0
        %4232 = vmatprep.subr.mxu0 0.0
        %4233 = vmatpush2.msra.mxu0 0.0
        %4234 = vmatprep.subr.mxu0 0.0
        %4235 = vmatpush2.msra.mxu0 0.0
        %4236 = vmatprep.subr.mxu0 0.0
        %4237 = vmatpush2.msra.mxu0 %v4094
        %4238 = vmatprep.subr.mxu0 0.0
        %4239 = vmatpush2.msra.mxu0 %v4093
        %4240 = vmatprep.mubr.f32.mxu0 %v4104
        %4241 = vmatmul.mubr.f32.gmra.mxu0 %v4043
        %v4242 = vpop.f32.mrf.mxu0
        %v4243 = vadd.f32 %v4173, %v4242
        %v4244 = vpop.f32.mrf.mxu0
        %4245 = vdwg.mxu0
        %v4246 = vmax.f32 %v4243, 0.0
        %vm4247 = vcmp.eq.f32.partialorder %v4246, 0.0
        %vm4248 = vmpackc.low %vm4247, %vm4247
        %vm4249 = vmpackc.even %vm4248, %vm4248
        %v4250 = vsel %vm4249, 16843009, 0
        %vm4251 = vcmask 975872
        %4252 = vst.msk [vmem:[%s657] sm:$0x3] %vm4251, %v4250
        %v4253 = vld [vmem:[%s11] sm:$0xff]
        %v4254 = vld [vmem:[%s11 + $0x8] sm:$0xff]
        %v4255 = vld [vmem:[%s11 + $0x10] sm:$0xff]
        %v4256 = vld [vmem:[%s11 + $0x18] sm:$0xff]
        %v4257 = vld [vmem:[%s11 + $0x20] sm:$0xff]
        %v4258 = vld [vmem:[%s11 + $0x28] sm:$0xff]
        %v4259 = vld [vmem:[%s11 + $0x30] sm:$0xff]
        %v4260 = vld [vmem:[%s11 + $0x38] sm:$0xff]
        %v4261 = vld [vmem:[%s11 + $0x40] sm:$0xff]
        %v4262 = vld [vmem:[%s11 + $0x48] sm:$0xff]
        %v4263 = vld [vmem:[%s11 + $0x50] sm:$0xff]
        %v4264 = vld [vmem:[%s11 + $0x58] sm:$0xff]
        %v4265 = vld [vmem:[%s11 + $0x60] sm:$0xff]
        %v4266 = vld [vmem:[%s11 + $0x68] sm:$0xff]
        %v4267 = vld [vmem:[%s11 + $0x70] sm:$0xff]
        %v4268 = vld [vmem:[%s12] sm:$0x1]
        %v4270 = vlaneseq
        %v4271 = vshrl.u32 %v4270, 7
        %v4272 = vsub.s32 0, %v4271
        %v4273 = vrot.slane %v4268, %v4272
        %vm4275 = vcmask 982016
        %v4277 = vsel %vm4275, %v4246, 0
        %4279 = vmatprep.subr.mxu0 0.0
        %4280 = vmatpush1.msra.mxu0 0.0
        %4281 = vmatprep.subr.mxu0 0.0
        %4282 = vmatpush1.msra.mxu0 %v4267
        %4283 = vmatprep.subr.mxu0 0.0
        %4284 = vmatpush1.msra.mxu0 %v4266
        %4285 = vmatprep.subr.mxu0 0.0
        %4286 = vmatpush1.msra.mxu0 %v4265
        %4287 = vmatprep.subr.mxu0 0.0
        %4288 = vmatpush1.msra.mxu0 %v4264
        %4289 = vmatprep.subr.mxu0 0.0
        %4290 = vmatpush1.msra.mxu0 %v4263
        %4291 = vmatprep.subr.mxu0 0.0
        %4292 = vmatpush1.msra.mxu0 %v4262
        %4293 = vmatprep.subr.mxu0 0.0
        %4294 = vmatpush1.msra.mxu0 %v4261
        %4295 = vmatprep.subr.mxu0 0.0
        %4296 = vmatpush1.msra.mxu0 %v4260
        %4297 = vmatprep.subr.mxu0 0.0
        %4298 = vmatpush1.msra.mxu0 %v4259
        %4299 = vmatprep.subr.mxu0 0.0
        %4300 = vmatpush1.msra.mxu0 %v4258
        %4301 = vmatprep.subr.mxu0 0.0
        %4302 = vmatpush1.msra.mxu0 %v4257
        %4303 = vmatprep.subr.mxu0 0.0
        %4304 = vmatpush1.msra.mxu0 %v4256
        %4305 = vmatprep.subr.mxu0 0.0
        %4306 = vmatpush1.msra.mxu0 %v4255
        %4307 = vmatprep.subr.mxu0 0.0
        %4308 = vmatpush1.msra.mxu0 %v4254
        %4309 = vmatprep.subr.mxu0 0.0
        %4310 = vmatpush1.msra.mxu0 %v4253
        %4311 = vmatprep.subr.mxu0 0.0
        %4312 = vmatpush2.msra.mxu0 0.0
        %4313 = vmatprep.subr.mxu0 0.0
        %4314 = vmatpush2.msra.mxu0 0.0
        %4315 = vmatprep.subr.mxu0 0.0
        %4316 = vmatpush2.msra.mxu0 0.0
        %4317 = vmatprep.subr.mxu0 0.0
        %4318 = vmatpush2.msra.mxu0 0.0
        %4319 = vmatprep.subr.mxu0 0.0
        %4320 = vmatpush2.msra.mxu0 0.0
        %4321 = vmatprep.subr.mxu0 0.0
        %4322 = vmatpush2.msra.mxu0 0.0
        %4323 = vmatprep.subr.mxu0 0.0
        %4324 = vmatpush2.msra.mxu0 0.0
        %4325 = vmatprep.subr.mxu0 0.0
        %4326 = vmatpush2.msra.mxu0 0.0
        %4327 = vmatprep.subr.mxu0 0.0
        %4328 = vmatpush2.msra.mxu0 0.0
        %4329 = vmatprep.subr.mxu0 0.0
        %4330 = vmatpush2.msra.mxu0 0.0
        %4331 = vmatprep.subr.mxu0 0.0
        %4332 = vmatpush2.msra.mxu0 0.0
        %4333 = vmatprep.subr.mxu0 0.0
        %4334 = vmatpush2.msra.mxu0 0.0
        %4335 = vmatprep.subr.mxu0 0.0
        %4336 = vmatpush2.msra.mxu0 0.0
        %4337 = vmatprep.subr.mxu0 0.0
        %4338 = vmatpush2.msra.mxu0 0.0
        %4339 = vmatprep.subr.mxu0 0.0
        %4340 = vmatpush2.msra.mxu0 0.0
        %4341 = vmatprep.subr.mxu0 0.0
        %4342 = vmatpush2.msra.mxu0 0.0
        %4343 = vmatprep.mubr.f32.mxu0 0.0
        %4344 = vmatmul.mubr.f32.gmra.mxu0 %v4277
        %v4345 = vpop.f32.mrf.mxu0
        %v4346 = vadd.f32 %v4273, %v4345
        %v4347 = vpop.f32.mrf.mxu0
        %4348 = vdwg.mxu0
        %v4349 = vmax.f32 %v4346, 0.0
        %v4350 = vld [vmem:[%s13] sm:$0xff]
        %v4351 = vld [vmem:[%s13 + $0x8] sm:$0xff]
        %v4352 = vld [vmem:[%s13 + $0x10] sm:$0xff]
        %v4353 = vld [vmem:[%s13 + $0x18] sm:$0xff]
        %v4354 = vld [vmem:[%s13 + $0x20] sm:$0xff]
        %v4355 = vld [vmem:[%s13 + $0x28] sm:$0xff]
        %v4356 = vld [vmem:[%s13 + $0x30] sm:$0xff]
        %v4357 = vld [vmem:[%s13 + $0x38] sm:$0xff]
        %v4358 = vld [vmem:[%s13 + $0x40] sm:$0xff]
        %v4359 = vld [vmem:[%s13 + $0x48] sm:$0xff]
        %v4360 = vld [vmem:[%s13 + $0x50] sm:$0xf]
        %v4361 = vld [vmem:[%s14] sm:$0x1]
        %v4363 = vlaneseq
        %v4364 = vshrl.u32 %v4363, 7
        %v4365 = vsub.s32 0, %v4364
        %v4366 = vrot.slane %v4361, %v4365
        %v4369 = vsel %vm2677, %v4349, 0
        %v4372 = vsel %vm949, %v4360, 0
        %4374 = vmatprep.subr.mxu0 0.0
        %4375 = vmatpush1.msra.mxu0 0.0
        %4376 = vmatprep.subr.mxu0 0.0
        %4377 = vmatpush1.msra.mxu0 0.0
        %4378 = vmatprep.subr.mxu0 0.0
        %4379 = vmatpush1.msra.mxu0 0.0
        %4380 = vmatprep.subr.mxu0 0.0
        %4381 = vmatpush1.msra.mxu0 0.0
        %4382 = vmatprep.subr.mxu0 0.0
        %4383 = vmatpush1.msra.mxu0 0.0
        %4384 = vmatprep.subr.mxu0 0.0
        %4385 = vmatpush1.msra.mxu0 %v4372
        %4386 = vmatprep.subr.mxu0 0.0
        %4387 = vmatpush1.msra.mxu0 %v4359
        %4388 = vmatprep.subr.mxu0 0.0
        %4389 = vmatpush1.msra.mxu0 %v4358
        %4390 = vmatprep.subr.mxu0 0.0
        %4391 = vmatpush1.msra.mxu0 %v4357
        %4392 = vmatprep.subr.mxu0 0.0
        %4393 = vmatpush1.msra.mxu0 %v4356
        %4394 = vmatprep.subr.mxu0 0.0
        %4395 = vmatpush1.msra.mxu0 %v4355
        %4396 = vmatprep.subr.mxu0 0.0
        %4397 = vmatpush1.msra.mxu0 %v4354
        %4398 = vmatprep.subr.mxu0 0.0
        %4399 = vmatpush1.msra.mxu0 %v4353
        %4400 = vmatprep.subr.mxu0 0.0
        %4401 = vmatpush1.msra.mxu0 %v4352
        %4402 = vmatprep.subr.mxu0 0.0
        %4403 = vmatpush1.msra.mxu0 %v4351
        %4404 = vmatprep.subr.mxu0 0.0
        %4405 = vmatpush1.msra.mxu0 %v4350
        %4406 = vmatprep.subr.mxu0 0.0
        %4407 = vmatpush2.msra.mxu0 0.0
        %4408 = vmatprep.subr.mxu0 0.0
        %4409 = vmatpush2.msra.mxu0 0.0
        %4410 = vmatprep.subr.mxu0 0.0
        %4411 = vmatpush2.msra.mxu0 0.0
        %4412 = vmatprep.subr.mxu0 0.0
        %4413 = vmatpush2.msra.mxu0 0.0
        %4414 = vmatprep.subr.mxu0 0.0
        %4415 = vmatpush2.msra.mxu0 0.0
        %4416 = vmatprep.subr.mxu0 0.0
        %4417 = vmatpush2.msra.mxu0 0.0
        %4418 = vmatprep.subr.mxu0 0.0
        %4419 = vmatpush2.msra.mxu0 0.0
        %4420 = vmatprep.subr.mxu0 0.0
        %4421 = vmatpush2.msra.mxu0 0.0
        %4422 = vmatprep.subr.mxu0 0.0
        %4423 = vmatpush2.msra.mxu0 0.0
        %4424 = vmatprep.subr.mxu0 0.0
        %4425 = vmatpush2.msra.mxu0 0.0
        %4426 = vmatprep.subr.mxu0 0.0
        %4427 = vmatpush2.msra.mxu0 0.0
        %4428 = vmatprep.subr.mxu0 0.0
        %4429 = vmatpush2.msra.mxu0 0.0
        %4430 = vmatprep.subr.mxu0 0.0
        %4431 = vmatpush2.msra.mxu0 0.0
        %4432 = vmatprep.subr.mxu0 0.0
        %4433 = vmatpush2.msra.mxu0 0.0
        %4434 = vmatprep.subr.mxu0 0.0
        %4435 = vmatpush2.msra.mxu0 0.0
        %4436 = vmatprep.subr.mxu0 0.0
        %4437 = vmatpush2.msra.mxu0 0.0
        %4438 = vmatprep.mubr.f32.mxu0 0.0
        %4439 = vmatmul.mubr.f32.gmra.mxu0 %v4369
        %v4440 = vpop.f32.mrf.mxu0
        %v4441 = vadd.f32 %v4366, %v4440
        %v4442 = vpop.f32.mrf.mxu0
        %4443 = vdwg.mxu0
        %vm4444 = vcmask 80896
        %4445 = vst.msk [vmem:[%s599] sm:$0xff] %vm4444, %v4441
        %s4446 = sand.u32 %s362, 1
        %s4447 = scalar_lea.sflag [#allocation3], %s4446
        %s4448 = sand.u32 %s362, 1
        %s4449 = smul.addr %s4448, 8
        %s4450 = scalar_lea.vmem [#allocation2], %s4449
        %s4451 = smul.u32 8, %s34
        %p4452 = scmp.lt.s32.totalorder %s4451, 15
        %s4453 = scalar_select %p4452, %s4451, 15
        %s4454 = smul.addr %s4453, 4
        %s4455 = smul.addr %s4454, 2
        %s4456 = scalar_lea.vmem %s16, %s4455
        %s4457 = smul.u32 14, %s34
        %p4458 = scmp.lt.s32.totalorder %s4457, 27
        %s4459 = scalar_select %p4458, %s4457, 27
        %s4460 = smul.addr %s4459, 2
        %s4461 = scalar_lea.vmem %s17, %s4460
        %s4462 = smul.u32 5, %s34
        %p4463 = scmp.lt.s32.totalorder %s4462, 9
        %s4464 = scalar_select %p4463, %s4462, 9
        %s4465 = smul.addr %s4464, 2
        %s4466 = scalar_lea.vmem %s18, %s4465
        %p4467 = scmp.lt.s32.totalorder %s34, 1
        %s4468 = scalar_select %p4467, %s34, 1
        %s4469 = smul.addr %s4468, 2
        %s4470 = scalar_lea.vmem %s19, %s4469
        // Predicated region
        $region81: #{_forward_impl.1} parent=79 // pred_check
          %p4471 = pneg %p372
        $region82: #{_forward_impl.1} parent=79 // pred_check_branch
          %4473 = sbr.rel (%p4471) target = $region84
        $region83: #{_forward_impl.1} parent=79 // pred_region
          %s4475 = ssub.s32 128, 128
          %4476 = vsyncadd %s4447, %s4475
          %s4477 = smul.addr %s34, 128
          %s4478 = scalar_lea.hbm %s15, %s4477
          %s4480 = sshll.u32 %s4450, 4
          %s4481 = int_to_ptr.vmem [resolvable:$true] %s4480
          %4483 = dma.vmem_to_hbm [thread:$0]  %s4481, 128, %s4478, %s4447
        $region84: #{_forward_impl.1} parent=79 // pred_fallthru
          _
        // Predicated region
        $region85: #{_forward_impl.1} parent=79 // pred_check
          %p4484 = pneg %p398
        $region86: #{_forward_impl.1} parent=79 // pred_check_branch
          %4486 = sbr.rel (%p4484) target = $region88
        $region87: #{_forward_impl.1} parent=79 // pred_region
          %s4487 = smul.u32 8, %s34
        $region88: #{_forward_impl.1} parent=79 // pred_fallthru
          _
        // Predicated region
        $region89: #{_forward_impl.1} parent=79 // pred_check
          %p4488 = pneg %p424
        $region90: #{_forward_impl.1} parent=79 // pred_check_branch
          %4490 = sbr.rel (%p4488) target = $region92
        $region91: #{_forward_impl.1} parent=79 // pred_region
          %s4491 = smul.u32 14, %s34
        $region92: #{_forward_impl.1} parent=79 // pred_fallthru
          _
        // Predicated region
        $region93: #{_forward_impl.1} parent=79 // pred_check
          %p4492 = pneg %p450
        $region94: #{_forward_impl.1} parent=79 // pred_check_branch
          %4494 = sbr.rel (%p4492) target = $region96
        $region95: #{_forward_impl.1} parent=79 // pred_region
          %s4495 = smul.u32 5, %s34
        $region96: #{_forward_impl.1} parent=79 // pred_fallthru
          _
        // Predicated region
        $region97: #{_forward_impl.1} parent=79 // pred_check
          %p4496 = pneg %p476
        $region98: #{_forward_impl.1} parent=79 // pred_check_branch
          %4498 = sbr.rel (%p4496) target = $region100
        $region99: #{_forward_impl.1} parent=79 // pred_region
          _
        $region100: #{_forward_impl.1} parent=79 // pred_fallthru
          _
      $region80: #{_forward_impl.1} parent=5 // pred_fallthru
        _
      %p4499 = scmp.le.s32.totalorder 2, %s29
      // Predicated region
      $region101: #{_forward_impl.1} parent=5 // pred_check
        %p4500 = pneg %p4499
      $region102: #{_forward_impl.1} parent=5 // pred_check_branch
        %4502 = sbr.rel (%p4500) target = $region104
      $region103: #{_forward_impl.1} parent=5 // pred_region
        %s4503 = ssub.s32 %s29, 2
        // Predicated region
        $region105: #{_forward_impl.1} parent=103 // pred_check
          %p4504 = pneg %p378
        $region106: #{_forward_impl.1} parent=103 // pred_check_branch
          %4506 = sbr.rel (%p4504) target = $region108
        $region107: #{_forward_impl.1} parent=103 // pred_region
          %s4507 = sand.u32 %s363, 1
          %s4508 = scalar_lea.sflag [#allocation3], %s4507
          %s4509 = sand.u32 %s363, 1
          %s4510 = smul.addr %s4509, 8
          %s4511 = scalar_lea.vmem [#allocation2], %s4510
          %4512 = dma.done %s4508, 128
        $region108: #{_forward_impl.1} parent=103 // pred_fallthru
          _
        // Predicated region
        $region109: #{_forward_impl.1} parent=103 // pred_check
          %p4513 = pneg %p404
        $region110: #{_forward_impl.1} parent=103 // pred_check_branch
          %4515 = sbr.rel (%p4513) target = $region112
        $region111: #{_forward_impl.1} parent=103 // pred_region
          %s4516 = smul.u32 8, %s35
          %p4517 = scmp.lt.s32.totalorder %s4516, 15
          %s4518 = scalar_select %p4517, %s4516, 15
          %s4519 = smul.addr %s4518, 4
          %s4520 = smul.addr %s4519, 2
          %s4521 = scalar_lea.vmem %s16, %s4520
        $region112: #{_forward_impl.1} parent=103 // pred_fallthru
          _
        // Predicated region
        $region113: #{_forward_impl.1} parent=103 // pred_check
          %p4522 = pneg %p430
        $region114: #{_forward_impl.1} parent=103 // pred_check_branch
          %4524 = sbr.rel (%p4522) target = $region116
        $region115: #{_forward_impl.1} parent=103 // pred_region
          %s4525 = smul.u32 14, %s35
          %p4526 = scmp.lt.s32.totalorder %s4525, 27
          %s4527 = scalar_select %p4526, %s4525, 27
          %s4528 = smul.addr %s4527, 2
          %s4529 = scalar_lea.vmem %s17, %s4528
        $region116: #{_forward_impl.1} parent=103 // pred_fallthru
          _
        // Predicated region
        $region117: #{_forward_impl.1} parent=103 // pred_check
          %p4530 = pneg %p456
        $region118: #{_forward_impl.1} parent=103 // pred_check_branch
          %4532 = sbr.rel (%p4530) target = $region120
        $region119: #{_forward_impl.1} parent=103 // pred_region
          %s4533 = smul.u32 5, %s35
          %p4534 = scmp.lt.s32.totalorder %s4533, 9
          %s4535 = scalar_select %p4534, %s4533, 9
          %s4536 = smul.addr %s4535, 2
          %s4537 = scalar_lea.vmem %s18, %s4536
        $region120: #{_forward_impl.1} parent=103 // pred_fallthru
          _
        // Predicated region
        $region121: #{_forward_impl.1} parent=103 // pred_check
          %p4538 = pneg %p482
        $region122: #{_forward_impl.1} parent=103 // pred_check_branch
          %4540 = sbr.rel (%p4538) target = $region124
        $region123: #{_forward_impl.1} parent=103 // pred_region
          %p4541 = scmp.lt.s32.totalorder %s35, 1
          %s4542 = scalar_select %p4541, %s35, 1
          %s4543 = smul.addr %s4542, 2
          %s4544 = scalar_lea.vmem %s19, %s4543
        $region124: #{_forward_impl.1} parent=103 // pred_fallthru
          _
      $region104: #{_forward_impl.1} parent=5 // pred_fallthru
        _
    $region6: #{_forward_impl.1} parent=1 // loop_footer
      %s33 = sadd.s32 1, %s29
    $region7: #{_forward_impl.1} parent=1 // loop_footer_branch
      %28 = sbr.rel target = $region3
    $region8: #{_forward_impl.1} parent=1 // loop_exit
      _
    %4545 = vsyncpa [#allocation3], 1
    %s4546 = scalar_lea.sflag [#allocation3], 1
    %4547 = vsyncpa %s4546, 1

</llo_original>
